<compile_context>
chip_gen: v6e
topology: v6e:2x2x1
jax: 0.10.0
libtpu: 0.0.40
codegen_flags: <defaults>
</compile_context>

<pallas_src>
import functools

import jax
import jax.numpy as jnp
from jax.experimental import pallas as pl
from jax.experimental.pallas import tpu as pltpu

_BN_EPS = 1e-5
_LANES = 128


# --------------------------------------------------------------------------- #
# Fused Pallas kernel
# --------------------------------------------------------------------------- #
def _fused_kernel(x_ref, w1_ref, w2_ref, wt1_ref, wt2_ref, fcw_ref, fcb_ref,
                  logits_ref, probs_ref, p1_ref, p2_ref, p3_ref,
                  *, batch, length, ksize, vocab):
    """Whole CNNAutoencoder forward on VMEM-resident activations."""
    B, L, K, V = batch, length, ksize, vocab
    C = x_ref.shape[-1]                 # lane-padded channel width (128)
    f32 = jnp.float32

    def conv_taps(src_ref, l_out, w_ref):
        # Conv1d as K accumulated bf16 matmuls over taps of the padded input.
        # Returns per-batch f32 pre-BN outputs.  Conv bias is intentionally
        # dropped: it cancels exactly under the fresh identity-affine BN below.
        zs = []
        for b in range(B):
            acc = jnp.zeros((l_out, C), f32)
            for k in range(K):
                xk = src_ref[b, pl.ds(k, l_out), :]            # bf16 (l_out, C)
                acc = acc + jnp.dot(xk, w_ref[k],
                                    preferred_element_type=f32)
            zs.append(acc)
        return zs

    def bn_relu(zs):
        # Fresh nn.BatchNorm1d: batch statistics over (batch, length), biased
        # variance, eps=1e-5, identity affine.  Padded channels are all-zero
        # everywhere, so they stay exactly zero through BN + ReLU.
        n = float(len(zs) * zs[0].shape[0])
        mean = sum(z.sum(axis=0, keepdims=True) for z in zs) / n
        var = sum(((z - mean) ** 2).sum(axis=0, keepdims=True) for z in zs) / n
        inv = jax.lax.rsqrt(var + _BN_EPS)
        return [jnp.maximum((z - mean) * inv, 0.0) for z in zs]

    def store_padded(dst_ref, ys, offset):
        # Write valid rows into the (zeroed) padded scratch for the next layer.
        for b in range(B):
            dst_ref[b, pl.ds(offset, ys[b].shape[0]), :] = (
                ys[b].astype(dst_ref.dtype))

    # Zero padded-activation scratch once (the pad borders must stay zero).
    p1_ref[...] = jnp.zeros_like(p1_ref)
    p2_ref[...] = jnp.zeros_like(p2_ref)
    p3_ref[...] = jnp.zeros_like(p3_ref)

    # ---------------- encode ----------------
    y = bn_relu(conv_taps(x_ref, L - 2, w1_ref))     # conv1 (pad=1) + BN + ReLU
    store_padded(p1_ref, y, 1)                       # re-pad (pad=1) for conv2
    y = bn_relu(conv_taps(p1_ref, L - 4, w2_ref))    # conv2 (pad=1) + BN + ReLU
    store_padded(p2_ref, y, K - 2)                   # re-pad for t_conv1

    # ---------------- decode ----------------
    # ConvTranspose1d(stride=1, padding=1) == Conv1d(flipped kernel, pad=K-2).
    y = bn_relu(conv_taps(p2_ref, L - 2, wt1_ref))   # t_conv1 + BN + ReLU
    store_padded(p3_ref, y, K - 2)
    y = bn_relu(conv_taps(p3_ref, L, wt2_ref))       # t_conv2 + BN + ReLU

    # ---------------- lm_head ----------------
    fcw = fcw_ref[...]                               # bf16 (C, C), vocab-padded
    fcb = fcb_ref[...]                               # f32  (1, C)
    lane = jax.lax.broadcasted_iota(jnp.int32, (1, C), 1)
    for b in range(B):
        z = jnp.dot(y[b].astype(fcw.dtype), fcw,
                    preferred_element_type=f32) + fcb
        logit = jax.nn.sigmoid(z)                    # (L, C), lane-dense store
        logits_ref[b] = logit
        # softmax over the real vocab lanes only (padded lanes masked out)
        masked = jnp.where(lane < V, logit, -1e30)
        m = jnp.max(masked, axis=-1, keepdims=True)
        e = jnp.exp(masked - m)
        denom = jnp.sum(e, axis=-1, keepdims=True)
        probs_ref[b] = e * pl.reciprocal(denom, approx=True)


# --------------------------------------------------------------------------- #
# Wrapper
# --------------------------------------------------------------------------- #
def _estimate_vmem_bytes(B, L, C, K):
    bf16, f32 = 2, 4
    act_in = B * (L + 2) * C * bf16
    scratch = (B * L * C + B * (L + 2) * C + B * (L + 4) * C) * bf16
    weights = 4 * K * C * C * bf16 + C * C * bf16 + C * f32
    outs = 2 * B * L * C * f32
    live = 2 * B * L * C * f32      # per-layer f32 accumulators held as values
    return act_in + scratch + weights + outs + live


@functools.partial(jax.jit, static_argnames=("vocab_size",))
def cnn_autoencoder_forward(tokens, params, *, vocab_size):
    """Fused Pallas forward.  `params` must come from preprocess_params()."""
    B, L = tokens.shape
    K, C, _ = params["w1"].shape

    # TODO(synk): embedding lookup is a gather; kept in plain-JAX glue.
    x = params["embedding"][tokens]                       # (B, L, C) bf16
    x = jnp.pad(x, ((0, 0), (1, 1), (0, 0)))              # conv1 padding = 1

    est = _estimate_vmem_bytes(B, L, C, K)
    if est > 24 * 1024 * 1024:
        # TODO(synk): for large B*L, tile the row dim with a grid and a two-pass
        # (sum/sumsq) cross-block BatchNorm instead of full VMEM residency.
        raise ValueError(
            f"fused kernel would need ~{est >> 20} MiB of VMEM; tile B*L first")

    kernel = functools.partial(_fused_kernel, batch=B, length=L, ksize=K,
                               vocab=vocab_size)
    vmem = pl.BlockSpec(memory_space=pltpu.MemorySpace.VMEM)
    logits_pad, probs_pad = pl.pallas_call(
        kernel,
        out_shape=(jax.ShapeDtypeStruct((B, L, C), jnp.float32),
                   jax.ShapeDtypeStruct((B, L, C), jnp.float32)),
        in_specs=[vmem] * 7,
        out_specs=(vmem, vmem),
        scratch_shapes=[
            pltpu.VMEM((B, L, C), jnp.bfloat16),          # conv2 padded input
            pltpu.VMEM((B, L + 2, C), jnp.bfloat16),      # t_conv1 padded input
            pltpu.VMEM((B, L + 4, C), jnp.bfloat16),      # t_conv2 padded input
        ],
        compiler_params=pltpu.CompilerParams(
            vmem_limit_bytes=64 * 1024 * 1024),
    )(x, params["w1"], params["w2"], params["wt1"], params["wt2"],
      params["fc_w"], params["fc_b"])

    # TODO(synk): NCL transpose + vocab un-pad slice stay in XLA glue (tiny
    # here); for large L this could be fused by writing (B, V, L) tiles
    # directly from the kernel out_spec.
    logits = jnp.swapaxes(logits_pad[:, :, :vocab_size], 1, 2)    # (B, V, L)
    probs = jnp.swapaxes(probs_pad[:, :, :vocab_size], 1, 2)      # (B, V, L)
    return logits, probs


# --------------------------------------------------------------------------- #
# One-time parameter preprocessing (hoisted out of the forward path)
# --------------------------------------------------------------------------- #
def preprocess_params(p):
    """Re-layout PyTorch-convention params into MXU-ready form: matmul-major
    conv weights, transposed-conv kernels flipped, all channel / vocab dims
    zero-padded to a multiple of 128 lanes, matmul operands cast to bf16."""
    K = p["conv1_w"].shape[2]
    dim = p["conv1_w"].shape[1]
    bot1 = p["conv1_w"].shape[0]
    bot2 = p["conv2_w"].shape[0]
    V = p["fc_w"].shape[0]
    C = max(_LANES, -(-max(dim, bot1, bot2, V) // _LANES) * _LANES)

    def conv_w(w):        # (Cout, Cin, K) -> (K, Cin, Cout), lane-padded bf16
        w = jnp.transpose(w, (2, 1, 0))
        w = jnp.pad(w, ((0, 0), (0, C - w.shape[1]), (0, C - w.shape[2])))
        return w.astype(jnp.bfloat16)

    def tconv_w(w):       # (Cin, Cout, K) -> equivalent flipped conv kernel
        w = jnp.transpose(jnp.flip(w, axis=2), (2, 0, 1))
        w = jnp.pad(w, ((0, 0), (0, C - w.shape[1]), (0, C - w.shape[2])))
        return w.astype(jnp.bfloat16)

    fcw = jnp.pad(p["fc_w"].T, ((0, C - dim), (0, C - V)))
    fcb = jnp.pad(p["fc_b"], (0, C - V)).reshape(1, C)
    emb = jnp.pad(p["embedding"], ((0, 0), (0, C - dim)))

    # NOTE: conv biases are intentionally dropped — the fresh identity-affine
    # BatchNorm1d subtracts the per-channel batch mean, so they cancel exactly.
    return {
        "embedding": emb.astype(jnp.bfloat16),
        "w1": conv_w(p["conv1_w"]),
        "w2": conv_w(p["conv2_w"]),
        "wt1": tconv_w(p["t_conv1_w"]),
        "wt2": tconv_w(p["t_conv2_w"]),
        "fc_w": fcw.astype(jnp.bfloat16),
        "fc_b": fcb.astype(jnp.float32),
    }


# --------------------------------------------------------------------------- #
# Deterministic parameter init (shapes follow CNNAutoencoder.__init__)
# --------------------------------------------------------------------------- #
def init_params(key, dim, vocab_size, botneck1=128, botneck2=64, ksize=5):
    keys = jax.random.split(key, 11)
    s = 0.05
    n = lambda k, shape: s * jax.random.normal(k, shape, jnp.float32)
    return {
        "embedding": n(keys[0], (vocab_size, dim)),
        "conv1_w": n(keys[1], (botneck1, dim, ksize)),        # (Cout, Cin, K)
        "conv1_b": n(keys[2], (botneck1,)),
        "conv2_w": n(keys[3], (botneck2, botneck1, ksize)),
        "conv2_b": n(keys[4], (botneck2,)),
        "t_conv1_w": n(keys[5], (botneck2, botneck1, ksize)), # (Cin, Cout, K)
        "t_conv1_b": n(keys[6], (botneck1,)),
        "t_conv2_w": n(keys[7], (botneck1, dim, ksize)),      # (Cin, Cout, K)
        "t_conv2_b": n(keys[8], (dim,)),
        "fc_w": n(keys[9], (vocab_size, dim)),
        "fc_b": n(keys[10], (vocab_size,)),
    }


if __name__ == "__main__":
    dim, vocab_size = 32, 48
    B, L = 2, 16

    key = jax.random.PRNGKey(0)
    k_params, k_tok = jax.random.split(key)
    params = init_params(k_params, dim, vocab_size)
    pp = preprocess_params(params)        # one-time MXU-ready weight re-layout
    tokens = jax.random.randint(k_tok, (B, L), 0, vocab_size, dtype=jnp.int32)

    logits, probs = cnn_autoencoder_forward(tokens, pp, vocab_size=vocab_size)
    jax.block_until_ready((logits, probs))

    assert logits.shape == (B, vocab_size, L)
    assert probs.shape == (B, vocab_size, L)
    assert bool(jnp.isfinite(logits).all()) and bool(jnp.isfinite(probs).all())
    assert bool(jnp.allclose(probs.sum(axis=1), 1.0, atol=1e-2))
    print("KERNEL_OK")
</pallas_src>

<mosaic_0001>
module attributes {stable_mosaic.version = 11 : i64} {
  func.func @_fused_kernel(%arg0: memref<2x18x128xbf16, #tpu.memory_space<vmem>>, %arg1: memref<5x128x128xbf16, #tpu.memory_space<vmem>>, %arg2: memref<5x128x128xbf16, #tpu.memory_space<vmem>>, %arg3: memref<5x128x128xbf16, #tpu.memory_space<vmem>>, %arg4: memref<5x128x128xbf16, #tpu.memory_space<vmem>>, %arg5: memref<128x128xbf16, #tpu.memory_space<vmem>>, %arg6: memref<1x128xf32, #tpu.memory_space<vmem>>, %arg7: memref<2x16x128xf32, #tpu.memory_space<vmem>>, %arg8: memref<2x16x128xf32, #tpu.memory_space<vmem>>, %arg9: memref<2x16x128xbf16, #tpu.memory_space<vmem>>, %arg10: memref<2x18x128xbf16, #tpu.memory_space<vmem>>, %arg11: memref<2x20x128xbf16, #tpu.memory_space<vmem>>) attributes {dimension_semantics = [], scalar_prefetch = 0 : i64, scratch_operands = 3 : i64, tpu.core_type = #tpu.core_type<tc>} {
    %cst = arith.constant 0.000000e+00 : bf16
    %0 = vector.broadcast %cst : bf16 to vector<2x16x128xbf16>
    %c0 = arith.constant 0 : index
    %c0_0 = arith.constant 0 : index
    %c0_1 = arith.constant 0 : index
    %1 = vector.load %arg9[%c0, %c0_0, %c0_1] : memref<2x16x128xbf16, #tpu.memory_space<vmem>>, vector<2x16x128xbf16>
    tpu.vector_store %arg9[%c0, %c0_0, %c0_1], %0 {strides = array<i32>} : memref<2x16x128xbf16, #tpu.memory_space<vmem>>, vector<2x16x128xbf16>,
    %cst_2 = arith.constant 0.000000e+00 : bf16
    %2 = vector.broadcast %cst_2 : bf16 to vector<2x18x128xbf16>
    %c0_3 = arith.constant 0 : index
    %c0_4 = arith.constant 0 : index
    %c0_5 = arith.constant 0 : index
    %3 = vector.load %arg10[%c0_3, %c0_4, %c0_5] : memref<2x18x128xbf16, #tpu.memory_space<vmem>>, vector<2x18x128xbf16>
    tpu.vector_store %arg10[%c0_3, %c0_4, %c0_5], %2 {strides = array<i32>} : memref<2x18x128xbf16, #tpu.memory_space<vmem>>, vector<2x18x128xbf16>,
    %cst_6 = arith.constant 0.000000e+00 : bf16
    %4 = vector.broadcast %cst_6 : bf16 to vector<2x20x128xbf16>
    %c0_7 = arith.constant 0 : index
    %c0_8 = arith.constant 0 : index
    %c0_9 = arith.constant 0 : index
    %5 = vector.load %arg11[%c0_7, %c0_8, %c0_9] : memref<2x20x128xbf16, #tpu.memory_space<vmem>>, vector<2x20x128xbf16>
    tpu.vector_store %arg11[%c0_7, %c0_8, %c0_9], %4 {strides = array<i32>} : memref<2x20x128xbf16, #tpu.memory_space<vmem>>, vector<2x20x128xbf16>,
    %cst_10 = arith.constant 0.000000e+00 : f32
    %6 = vector.broadcast %cst_10 : f32 to vector<14x128xf32>
    %c0_11 = arith.constant 0 : index
    %c0_12 = arith.constant 0 : index
    %c0_13 = arith.constant 0 : index
    %7 = vector.load %arg0[%c0_11, %c0_12, %c0_13] : memref<2x18x128xbf16, #tpu.memory_space<vmem>>, vector<1x14x128xbf16>
    %8 = vector.shape_cast %7 : vector<1x14x128xbf16> to vector<14x128xbf16>
    %c0_14 = arith.constant 0 : index
    %c0_15 = arith.constant 0 : index
    %c0_16 = arith.constant 0 : index
    %9 = vector.load %arg1[%c0_14, %c0_15, %c0_16] : memref<5x128x128xbf16, #tpu.memory_space<vmem>>, vector<1x128x128xbf16>
    %10 = vector.shape_cast %9 : vector<1x128x128xbf16> to vector<128x128xbf16>
    %cst_17 = arith.constant dense<0.000000e+00> : vector<14x128xf32>
    %11 = tpu.matmul %8, %10, %cst_17 {dimension_numbers = #tpu.dot_dimension_numbers<[1], [0], [0], [1], [0, 0, 1, 1], [], []>} : vector<14x128xbf16>, vector<128x128xbf16>, vector<14x128xf32> -> vector<14x128xf32>
    %12 = arith.addf %6, %11 : vector<14x128xf32>
    %c0_18 = arith.constant 0 : index
    %c1 = arith.constant 1 : index
    %c0_19 = arith.constant 0 : index
    %13 = vector.load %arg0[%c0_18, %c1, %c0_19] : memref<2x18x128xbf16, #tpu.memory_space<vmem>>, vector<1x14x128xbf16>
    %14 = vector.shape_cast %13 : vector<1x14x128xbf16> to vector<14x128xbf16>
    %c1_20 = arith.constant 1 : index
    %c0_21 = arith.constant 0 : index
    %c0_22 = arith.constant 0 : index
    %15 = vector.load %arg1[%c1_20, %c0_21, %c0_22] : memref<5x128x128xbf16, #tpu.memory_space<vmem>>, vector<1x128x128xbf16>
    %16 = vector.shape_cast %15 : vector<1x128x128xbf16> to vector<128x128xbf16>
    %cst_23 = arith.constant dense<0.000000e+00> : vector<14x128xf32>
    %17 = tpu.matmul %14, %16, %cst_23 {dimension_numbers = #tpu.dot_dimension_numbers<[1], [0], [0], [1], [0, 0, 1, 1], [], []>} : vector<14x128xbf16>, vector<128x128xbf16>, vector<14x128xf32> -> vector<14x128xf32>
    %18 = arith.addf %12, %17 : vector<14x128xf32>
    %c0_24 = arith.constant 0 : index
    %c2 = arith.constant 2 : index
    %c0_25 = arith.constant 0 : index
    %19 = vector.load %arg0[%c0_24, %c2, %c0_25] : memref<2x18x128xbf16, #tpu.memory_space<vmem>>, vector<1x14x128xbf16>
    %20 = vector.shape_cast %19 : vector<1x14x128xbf16> to vector<14x128xbf16>
    %c2_26 = arith.constant 2 : index
    %c0_27 = arith.constant 0 : index
    %c0_28 = arith.constant 0 : index
    %21 = vector.load %arg1[%c2_26, %c0_27, %c0_28] : memref<5x128x128xbf16, #tpu.memory_space<vmem>>, vector<1x128x128xbf16>
    %22 = vector.shape_cast %21 : vector<1x128x128xbf16> to vector<128x128xbf16>
    %cst_29 = arith.constant dense<0.000000e+00> : vector<14x128xf32>
    %23 = tpu.matmul %20, %22, %cst_29 {dimension_numbers = #tpu.dot_dimension_numbers<[1], [0], [0], [1], [0, 0, 1, 1], [], []>} : vector<14x128xbf16>, vector<128x128xbf16>, vector<14x128xf32> -> vector<14x128xf32>
    %24 = arith.addf %18, %23 : vector<14x128xf32>
    %c0_30 = arith.constant 0 : index
    %c3 = arith.constant 3 : index
    %c0_31 = arith.constant 0 : index
    %25 = vector.load %arg0[%c0_30, %c3, %c0_31] : memref<2x18x128xbf16, #tpu.memory_space<vmem>>, vector<1x14x128xbf16>
    %26 = vector.shape_cast %25 : vector<1x14x128xbf16> to vector<14x128xbf16>
    %c3_32 = arith.constant 3 : index
    %c0_33 = arith.constant 0 : index
    %c0_34 = arith.constant 0 : index
    %27 = vector.load %arg1[%c3_32, %c0_33, %c0_34] : memref<5x128x128xbf16, #tpu.memory_space<vmem>>, vector<1x128x128xbf16>
    %28 = vector.shape_cast %27 : vector<1x128x128xbf16> to vector<128x128xbf16>
    %cst_35 = arith.constant dense<0.000000e+00> : vector<14x128xf32>
    %29 = tpu.matmul %26, %28, %cst_35 {dimension_numbers = #tpu.dot_dimension_numbers<[1], [0], [0], [1], [0, 0, 1, 1], [], []>} : vector<14x128xbf16>, vector<128x128xbf16>, vector<14x128xf32> -> vector<14x128xf32>
    %30 = arith.addf %24, %29 : vector<14x128xf32>
    %c0_36 = arith.constant 0 : index
    %c4 = arith.constant 4 : index
    %c0_37 = arith.constant 0 : index
    %31 = vector.load %arg0[%c0_36, %c4, %c0_37] : memref<2x18x128xbf16, #tpu.memory_space<vmem>>, vector<1x14x128xbf16>
    %32 = vector.shape_cast %31 : vector<1x14x128xbf16> to vector<14x128xbf16>
    %c4_38 = arith.constant 4 : index
    %c0_39 = arith.constant 0 : index
    %c0_40 = arith.constant 0 : index
    %33 = vector.load %arg1[%c4_38, %c0_39, %c0_40] : memref<5x128x128xbf16, #tpu.memory_space<vmem>>, vector<1x128x128xbf16>
    %34 = vector.shape_cast %33 : vector<1x128x128xbf16> to vector<128x128xbf16>
    %cst_41 = arith.constant dense<0.000000e+00> : vector<14x128xf32>
    %35 = tpu.matmul %32, %34, %cst_41 {dimension_numbers = #tpu.dot_dimension_numbers<[1], [0], [0], [1], [0, 0, 1, 1], [], []>} : vector<14x128xbf16>, vector<128x128xbf16>, vector<14x128xf32> -> vector<14x128xf32>
    %36 = arith.addf %30, %35 : vector<14x128xf32>
    %cst_42 = arith.constant 0.000000e+00 : f32
    %37 = vector.broadcast %cst_42 : f32 to vector<14x128xf32>
    %c1_43 = arith.constant 1 : index
    %c0_44 = arith.constant 0 : index
    %c0_45 = arith.constant 0 : index
    %38 = vector.load %arg0[%c1_43, %c0_44, %c0_45] : memref<2x18x128xbf16, #tpu.memory_space<vmem>>, vector<1x14x128xbf16>
    %39 = vector.shape_cast %38 : vector<1x14x128xbf16> to vector<14x128xbf16>
    %c0_46 = arith.constant 0 : index
    %c0_47 = arith.constant 0 : index
    %c0_48 = arith.constant 0 : index
    %40 = vector.load %arg1[%c0_46, %c0_47, %c0_48] : memref<5x128x128xbf16, #tpu.memory_space<vmem>>, vector<1x128x128xbf16>
    %41 = vector.shape_cast %40 : vector<1x128x128xbf16> to vector<128x128xbf16>
    %cst_49 = arith.constant dense<0.000000e+00> : vector<14x128xf32>
    %42 = tpu.matmul %39, %41, %cst_49 {dimension_numbers = #tpu.dot_dimension_numbers<[1], [0], [0], [1], [0, 0, 1, 1], [], []>} : vector<14x128xbf16>, vector<128x128xbf16>, vector<14x128xf32> -> vector<14x128xf32>
    %43 = arith.addf %37, %42 : vector<14x128xf32>
    %c1_50 = arith.constant 1 : index
    %c1_51 = arith.constant 1 : index
    %c0_52 = arith.constant 0 : index
    %44 = vector.load %arg0[%c1_50, %c1_51, %c0_52] : memref<2x18x128xbf16, #tpu.memory_space<vmem>>, vector<1x14x128xbf16>
    %45 = vector.shape_cast %44 : vector<1x14x128xbf16> to vector<14x128xbf16>
    %c1_53 = arith.constant 1 : index
    %c0_54 = arith.constant 0 : index
    %c0_55 = arith.constant 0 : index
    %46 = vector.load %arg1[%c1_53, %c0_54, %c0_55] : memref<5x128x128xbf16, #tpu.memory_space<vmem>>, vector<1x128x128xbf16>
    %47 = vector.shape_cast %46 : vector<1x128x128xbf16> to vector<128x128xbf16>
    %cst_56 = arith.constant dense<0.000000e+00> : vector<14x128xf32>
    %48 = tpu.matmul %45, %47, %cst_56 {dimension_numbers = #tpu.dot_dimension_numbers<[1], [0], [0], [1], [0, 0, 1, 1], [], []>} : vector<14x128xbf16>, vector<128x128xbf16>, vector<14x128xf32> -> vector<14x128xf32>
    %49 = arith.addf %43, %48 : vector<14x128xf32>
    %c1_57 = arith.constant 1 : index
    %c2_58 = arith.constant 2 : index
    %c0_59 = arith.constant 0 : index
    %50 = vector.load %arg0[%c1_57, %c2_58, %c0_59] : memref<2x18x128xbf16, #tpu.memory_space<vmem>>, vector<1x14x128xbf16>
    %51 = vector.shape_cast %50 : vector<1x14x128xbf16> to vector<14x128xbf16>
    %c2_60 = arith.constant 2 : index
    %c0_61 = arith.constant 0 : index
    %c0_62 = arith.constant 0 : index
    %52 = vector.load %arg1[%c2_60, %c0_61, %c0_62] : memref<5x128x128xbf16, #tpu.memory_space<vmem>>, vector<1x128x128xbf16>
    %53 = vector.shape_cast %52 : vector<1x128x128xbf16> to vector<128x128xbf16>
    %cst_63 = arith.constant dense<0.000000e+00> : vector<14x128xf32>
    %54 = tpu.matmul %51, %53, %cst_63 {dimension_numbers = #tpu.dot_dimension_numbers<[1], [0], [0], [1], [0, 0, 1, 1], [], []>} : vector<14x128xbf16>, vector<128x128xbf16>, vector<14x128xf32> -> vector<14x128xf32>
    %55 = arith.addf %49, %54 : vector<14x128xf32>
    %c1_64 = arith.constant 1 : index
    %c3_65 = arith.constant 3 : index
    %c0_66 = arith.constant 0 : index
    %56 = vector.load %arg0[%c1_64, %c3_65, %c0_66] : memref<2x18x128xbf16, #tpu.memory_space<vmem>>, vector<1x14x128xbf16>
    %57 = vector.shape_cast %56 : vector<1x14x128xbf16> to vector<14x128xbf16>
    %c3_67 = arith.constant 3 : index
    %c0_68 = arith.constant 0 : index
    %c0_69 = arith.constant 0 : index
    %58 = vector.load %arg1[%c3_67, %c0_68, %c0_69] : memref<5x128x128xbf16, #tpu.memory_space<vmem>>, vector<1x128x128xbf16>
    %59 = vector.shape_cast %58 : vector<1x128x128xbf16> to vector<128x128xbf16>
    %cst_70 = arith.constant dense<0.000000e+00> : vector<14x128xf32>
    %60 = tpu.matmul %57, %59, %cst_70 {dimension_numbers = #tpu.dot_dimension_numbers<[1], [0], [0], [1], [0, 0, 1, 1], [], []>} : vector<14x128xbf16>, vector<128x128xbf16>, vector<14x128xf32> -> vector<14x128xf32>
    %61 = arith.addf %55, %60 : vector<14x128xf32>
    %c1_71 = arith.constant 1 : index
    %c4_72 = arith.constant 4 : index
    %c0_73 = arith.constant 0 : index
    %62 = vector.load %arg0[%c1_71, %c4_72, %c0_73] : memref<2x18x128xbf16, #tpu.memory_space<vmem>>, vector<1x14x128xbf16>
    %63 = vector.shape_cast %62 : vector<1x14x128xbf16> to vector<14x128xbf16>
    %c4_74 = arith.constant 4 : index
    %c0_75 = arith.constant 0 : index
    %c0_76 = arith.constant 0 : index
    %64 = vector.load %arg1[%c4_74, %c0_75, %c0_76] : memref<5x128x128xbf16, #tpu.memory_space<vmem>>, vector<1x128x128xbf16>
    %65 = vector.shape_cast %64 : vector<1x128x128xbf16> to vector<128x128xbf16>
    %cst_77 = arith.constant dense<0.000000e+00> : vector<14x128xf32>
    %66 = tpu.matmul %63, %65, %cst_77 {dimension_numbers = #tpu.dot_dimension_numbers<[1], [0], [0], [1], [0, 0, 1, 1], [], []>} : vector<14x128xbf16>, vector<128x128xbf16>, vector<14x128xf32> -> vector<14x128xf32>
    %67 = arith.addf %61, %66 : vector<14x128xf32>
    %cst_78 = arith.constant dense<0.000000e+00> : vector<128xf32>
    %68 = vector.multi_reduction <add>, %36, %cst_78 [0] : vector<14x128xf32> to vector<128xf32>
    %69 = vector.shape_cast %68 : vector<128xf32> to vector<1x128xf32>
    %cst_79 = arith.constant 0.000000e+00 : f32
    %70 = vector.broadcast %cst_79 : f32 to vector<1x128xf32>
    %71 = arith.addf %70, %69 : vector<1x128xf32>
    %cst_80 = arith.constant dense<0.000000e+00> : vector<128xf32>
    %72 = vector.multi_reduction <add>, %67, %cst_80 [0] : vector<14x128xf32> to vector<128xf32>
    %73 = vector.shape_cast %72 : vector<128xf32> to vector<1x128xf32>
    %74 = arith.addf %71, %73 : vector<1x128xf32>
    %cst_81 = arith.constant 2.800000e+01 : f32
    %75 = vector.broadcast %cst_81 : f32 to vector<1x128xf32>
    %76 = arith.divf %74, %75 : vector<1x128xf32>
    %77 = vector.broadcast %76 : vector<1x128xf32> to vector<14x128xf32>
    %78 = arith.subf %36, %77 : vector<14x128xf32>
    %79 = arith.mulf %78, %78 : vector<14x128xf32>
    %cst_82 = arith.constant dense<0.000000e+00> : vector<128xf32>
    %80 = vector.multi_reduction <add>, %79, %cst_82 [0] : vector<14x128xf32> to vector<128xf32>
    %81 = vector.shape_cast %80 : vector<128xf32> to vector<1x128xf32>
    %cst_83 = arith.constant 0.000000e+00 : f32
    %82 = vector.broadcast %cst_83 : f32 to vector<1x128xf32>
    %83 = arith.addf %82, %81 : vector<1x128xf32>
    %84 = vector.broadcast %76 : vector<1x128xf32> to vector<14x128xf32>
    %85 = arith.subf %67, %84 : vector<14x128xf32>
    %86 = arith.mulf %85, %85 : vector<14x128xf32>
    %cst_84 = arith.constant dense<0.000000e+00> : vector<128xf32>
    %87 = vector.multi_reduction <add>, %86, %cst_84 [0] : vector<14x128xf32> to vector<128xf32>
    %88 = vector.shape_cast %87 : vector<128xf32> to vector<1x128xf32>
    %89 = arith.addf %83, %88 : vector<1x128xf32>
    %cst_85 = arith.constant 2.800000e+01 : f32
    %90 = vector.broadcast %cst_85 : f32 to vector<1x128xf32>
    %91 = arith.divf %89, %90 : vector<1x128xf32>
    %cst_86 = arith.constant 9.99999974E-6 : f32
    %92 = vector.broadcast %cst_86 : f32 to vector<1x128xf32>
    %93 = arith.addf %91, %92 : vector<1x128xf32>
    %94 = math.rsqrt %93 : vector<1x128xf32>
    %95 = vector.broadcast %76 : vector<1x128xf32> to vector<14x128xf32>
    %96 = arith.subf %36, %95 : vector<14x128xf32>
    %97 = vector.broadcast %94 : vector<1x128xf32> to vector<14x128xf32>
    %98 = arith.mulf %96, %97 : vector<14x128xf32>
    %cst_87 = arith.constant 0.000000e+00 : f32
    %99 = vector.broadcast %cst_87 : f32 to vector<14x128xf32>
    %100 = arith.maximumf %98, %99 : vector<14x128xf32>
    %101 = vector.broadcast %76 : vector<1x128xf32> to vector<14x128xf32>
    %102 = arith.subf %67, %101 : vector<14x128xf32>
    %103 = vector.broadcast %94 : vector<1x128xf32> to vector<14x128xf32>
    %104 = arith.mulf %102, %103 : vector<14x128xf32>
    %cst_88 = arith.constant 0.000000e+00 : f32
    %105 = vector.broadcast %cst_88 : f32 to vector<14x128xf32>
    %106 = arith.maximumf %104, %105 : vector<14x128xf32>
    %107 = arith.truncf %100 : vector<14x128xf32> to vector<14x128xbf16>
    %c0_89 = arith.constant 0 : index
    %c1_90 = arith.constant 1 : index
    %c0_91 = arith.constant 0 : index
    %108 = vector.load %arg9[%c0_89, %c1_90, %c0_91] : memref<2x16x128xbf16, #tpu.memory_space<vmem>>, vector<1x14x128xbf16>
    %109 = vector.shape_cast %108 : vector<1x14x128xbf16> to vector<14x128xbf16>
    %110 = vector.shape_cast %107 : vector<14x128xbf16> to vector<1x14x128xbf16>
    tpu.vector_store %arg9[%c0_89, %c1_90, %c0_91], %110 {strides = array<i32>} : memref<2x16x128xbf16, #tpu.memory_space<vmem>>, vector<1x14x128xbf16>,
    %111 = arith.truncf %106 : vector<14x128xf32> to vector<14x128xbf16>
    %c1_92 = arith.constant 1 : index
    %c1_93 = arith.constant 1 : index
    %c0_94 = arith.constant 0 : index
    %112 = vector.load %arg9[%c1_92, %c1_93, %c0_94] : memref<2x16x128xbf16, #tpu.memory_space<vmem>>, vector<1x14x128xbf16>
    %113 = vector.shape_cast %112 : vector<1x14x128xbf16> to vector<14x128xbf16>
    %114 = vector.shape_cast %111 : vector<14x128xbf16> to vector<1x14x128xbf16>
    tpu.vector_store %arg9[%c1_92, %c1_93, %c0_94], %114 {strides = array<i32>} : memref<2x16x128xbf16, #tpu.memory_space<vmem>>, vector<1x14x128xbf16>,
    %cst_95 = arith.constant 0.000000e+00 : f32
    %115 = vector.broadcast %cst_95 : f32 to vector<12x128xf32>
    %c0_96 = arith.constant 0 : index
    %c0_97 = arith.constant 0 : index
    %c0_98 = arith.constant 0 : index
    %116 = vector.load %arg9[%c0_96, %c0_97, %c0_98] : memref<2x16x128xbf16, #tpu.memory_space<vmem>>, vector<1x12x128xbf16>
    %117 = vector.shape_cast %116 : vector<1x12x128xbf16> to vector<12x128xbf16>
    %c0_99 = arith.constant 0 : index
    %c0_100 = arith.constant 0 : index
    %c0_101 = arith.constant 0 : index
    %118 = vector.load %arg2[%c0_99, %c0_100, %c0_101] : memref<5x128x128xbf16, #tpu.memory_space<vmem>>, vector<1x128x128xbf16>
    %119 = vector.shape_cast %118 : vector<1x128x128xbf16> to vector<128x128xbf16>
    %cst_102 = arith.constant dense<0.000000e+00> : vector<12x128xf32>
    %120 = tpu.matmul %117, %119, %cst_102 {dimension_numbers = #tpu.dot_dimension_numbers<[1], [0], [0], [1], [0, 0, 1, 1], [], []>} : vector<12x128xbf16>, vector<128x128xbf16>, vector<12x128xf32> -> vector<12x128xf32>
    %121 = arith.addf %115, %120 : vector<12x128xf32>
    %c0_103 = arith.constant 0 : index
    %c1_104 = arith.constant 1 : index
    %c0_105 = arith.constant 0 : index
    %122 = vector.load %arg9[%c0_103, %c1_104, %c0_105] : memref<2x16x128xbf16, #tpu.memory_space<vmem>>, vector<1x12x128xbf16>
    %123 = vector.shape_cast %122 : vector<1x12x128xbf16> to vector<12x128xbf16>
    %c1_106 = arith.constant 1 : index
    %c0_107 = arith.constant 0 : index
    %c0_108 = arith.constant 0 : index
    %124 = vector.load %arg2[%c1_106, %c0_107, %c0_108] : memref<5x128x128xbf16, #tpu.memory_space<vmem>>, vector<1x128x128xbf16>
    %125 = vector.shape_cast %124 : vector<1x128x128xbf16> to vector<128x128xbf16>
    %cst_109 = arith.constant dense<0.000000e+00> : vector<12x128xf32>
    %126 = tpu.matmul %123, %125, %cst_109 {dimension_numbers = #tpu.dot_dimension_numbers<[1], [0], [0], [1], [0, 0, 1, 1], [], []>} : vector<12x128xbf16>, vector<128x128xbf16>, vector<12x128xf32> -> vector<12x128xf32>
    %127 = arith.addf %121, %126 : vector<12x128xf32>
    %c0_110 = arith.constant 0 : index
    %c2_111 = arith.constant 2 : index
    %c0_112 = arith.constant 0 : index
    %128 = vector.load %arg9[%c0_110, %c2_111, %c0_112] : memref<2x16x128xbf16, #tpu.memory_space<vmem>>, vector<1x12x128xbf16>
    %129 = vector.shape_cast %128 : vector<1x12x128xbf16> to vector<12x128xbf16>
    %c2_113 = arith.constant 2 : index
    %c0_114 = arith.constant 0 : index
    %c0_115 = arith.constant 0 : index
    %130 = vector.load %arg2[%c2_113, %c0_114, %c0_115] : memref<5x128x128xbf16, #tpu.memory_space<vmem>>, vector<1x128x128xbf16>
    %131 = vector.shape_cast %130 : vector<1x128x128xbf16> to vector<128x128xbf16>
    %cst_116 = arith.constant dense<0.000000e+00> : vector<12x128xf32>
    %132 = tpu.matmul %129, %131, %cst_116 {dimension_numbers = #tpu.dot_dimension_numbers<[1], [0], [0], [1], [0, 0, 1, 1], [], []>} : vector<12x128xbf16>, vector<128x128xbf16>, vector<12x128xf32> -> vector<12x128xf32>
    %133 = arith.addf %127, %132 : vector<12x128xf32>
    %c0_117 = arith.constant 0 : index
    %c3_118 = arith.constant 3 : index
    %c0_119 = arith.constant 0 : index
    %134 = vector.load %arg9[%c0_117, %c3_118, %c0_119] : memref<2x16x128xbf16, #tpu.memory_space<vmem>>, vector<1x12x128xbf16>
    %135 = vector.shape_cast %134 : vector<1x12x128xbf16> to vector<12x128xbf16>
    %c3_120 = arith.constant 3 : index
    %c0_121 = arith.constant 0 : index
    %c0_122 = arith.constant 0 : index
    %136 = vector.load %arg2[%c3_120, %c0_121, %c0_122] : memref<5x128x128xbf16, #tpu.memory_space<vmem>>, vector<1x128x128xbf16>
    %137 = vector.shape_cast %136 : vector<1x128x128xbf16> to vector<128x128xbf16>
    %cst_123 = arith.constant dense<0.000000e+00> : vector<12x128xf32>
    %138 = tpu.matmul %135, %137, %cst_123 {dimension_numbers = #tpu.dot_dimension_numbers<[1], [0], [0], [1], [0, 0, 1, 1], [], []>} : vector<12x128xbf16>, vector<128x128xbf16>, vector<12x128xf32> -> vector<12x128xf32>
    %139 = arith.addf %133, %138 : vector<12x128xf32>
    %c0_124 = arith.constant 0 : index
    %c4_125 = arith.constant 4 : index
    %c0_126 = arith.constant 0 : index
    %140 = vector.load %arg9[%c0_124, %c4_125, %c0_126] : memref<2x16x128xbf16, #tpu.memory_space<vmem>>, vector<1x12x128xbf16>
    %141 = vector.shape_cast %140 : vector<1x12x128xbf16> to vector<12x128xbf16>
    %c4_127 = arith.constant 4 : index
    %c0_128 = arith.constant 0 : index
    %c0_129 = arith.constant 0 : index
    %142 = vector.load %arg2[%c4_127, %c0_128, %c0_129] : memref<5x128x128xbf16, #tpu.memory_space<vmem>>, vector<1x128x128xbf16>
    %143 = vector.shape_cast %142 : vector<1x128x128xbf16> to vector<128x128xbf16>
    %cst_130 = arith.constant dense<0.000000e+00> : vector<12x128xf32>
    %144 = tpu.matmul %141, %143, %cst_130 {dimension_numbers = #tpu.dot_dimension_numbers<[1], [0], [0], [1], [0, 0, 1, 1], [], []>} : vector<12x128xbf16>, vector<128x128xbf16>, vector<12x128xf32> -> vector<12x128xf32>
    %145 = arith.addf %139, %144 : vector<12x128xf32>
    %cst_131 = arith.constant 0.000000e+00 : f32
    %146 = vector.broadcast %cst_131 : f32 to vector<12x128xf32>
    %c1_132 = arith.constant 1 : index
    %c0_133 = arith.constant 0 : index
    %c0_134 = arith.constant 0 : index
    %147 = vector.load %arg9[%c1_132, %c0_133, %c0_134] : memref<2x16x128xbf16, #tpu.memory_space<vmem>>, vector<1x12x128xbf16>
    %148 = vector.shape_cast %147 : vector<1x12x128xbf16> to vector<12x128xbf16>
    %c0_135 = arith.constant 0 : index
    %c0_136 = arith.constant 0 : index
    %c0_137 = arith.constant 0 : index
    %149 = vector.load %arg2[%c0_135, %c0_136, %c0_137] : memref<5x128x128xbf16, #tpu.memory_space<vmem>>, vector<1x128x128xbf16>
    %150 = vector.shape_cast %149 : vector<1x128x128xbf16> to vector<128x128xbf16>
    %cst_138 = arith.constant dense<0.000000e+00> : vector<12x128xf32>
    %151 = tpu.matmul %148, %150, %cst_138 {dimension_numbers = #tpu.dot_dimension_numbers<[1], [0], [0], [1], [0, 0, 1, 1], [], []>} : vector<12x128xbf16>, vector<128x128xbf16>, vector<12x128xf32> -> vector<12x128xf32>
    %152 = arith.addf %146, %151 : vector<12x128xf32>
    %c1_139 = arith.constant 1 : index
    %c1_140 = arith.constant 1 : index
    %c0_141 = arith.constant 0 : index
    %153 = vector.load %arg9[%c1_139, %c1_140, %c0_141] : memref<2x16x128xbf16, #tpu.memory_space<vmem>>, vector<1x12x128xbf16>
    %154 = vector.shape_cast %153 : vector<1x12x128xbf16> to vector<12x128xbf16>
    %c1_142 = arith.constant 1 : index
    %c0_143 = arith.constant 0 : index
    %c0_144 = arith.constant 0 : index
    %155 = vector.load %arg2[%c1_142, %c0_143, %c0_144] : memref<5x128x128xbf16, #tpu.memory_space<vmem>>, vector<1x128x128xbf16>
    %156 = vector.shape_cast %155 : vector<1x128x128xbf16> to vector<128x128xbf16>
    %cst_145 = arith.constant dense<0.000000e+00> : vector<12x128xf32>
    %157 = tpu.matmul %154, %156, %cst_145 {dimension_numbers = #tpu.dot_dimension_numbers<[1], [0], [0], [1], [0, 0, 1, 1], [], []>} : vector<12x128xbf16>, vector<128x128xbf16>, vector<12x128xf32> -> vector<12x128xf32>
    %158 = arith.addf %152, %157 : vector<12x128xf32>
    %c1_146 = arith.constant 1 : index
    %c2_147 = arith.constant 2 : index
    %c0_148 = arith.constant 0 : index
    %159 = vector.load %arg9[%c1_146, %c2_147, %c0_148] : memref<2x16x128xbf16, #tpu.memory_space<vmem>>, vector<1x12x128xbf16>
    %160 = vector.shape_cast %159 : vector<1x12x128xbf16> to vector<12x128xbf16>
    %c2_149 = arith.constant 2 : index
    %c0_150 = arith.constant 0 : index
    %c0_151 = arith.constant 0 : index
    %161 = vector.load %arg2[%c2_149, %c0_150, %c0_151] : memref<5x128x128xbf16, #tpu.memory_space<vmem>>, vector<1x128x128xbf16>
    %162 = vector.shape_cast %161 : vector<1x128x128xbf16> to vector<128x128xbf16>
    %cst_152 = arith.constant dense<0.000000e+00> : vector<12x128xf32>
    %163 = tpu.matmul %160, %162, %cst_152 {dimension_numbers = #tpu.dot_dimension_numbers<[1], [0], [0], [1], [0, 0, 1, 1], [], []>} : vector<12x128xbf16>, vector<128x128xbf16>, vector<12x128xf32> -> vector<12x128xf32>
    %164 = arith.addf %158, %163 : vector<12x128xf32>
    %c1_153 = arith.constant 1 : index
    %c3_154 = arith.constant 3 : index
    %c0_155 = arith.constant 0 : index
    %165 = vector.load %arg9[%c1_153, %c3_154, %c0_155] : memref<2x16x128xbf16, #tpu.memory_space<vmem>>, vector<1x12x128xbf16>
    %166 = vector.shape_cast %165 : vector<1x12x128xbf16> to vector<12x128xbf16>
    %c3_156 = arith.constant 3 : index
    %c0_157 = arith.constant 0 : index
    %c0_158 = arith.constant 0 : index
    %167 = vector.load %arg2[%c3_156, %c0_157, %c0_158] : memref<5x128x128xbf16, #tpu.memory_space<vmem>>, vector<1x128x128xbf16>
    %168 = vector.shape_cast %167 : vector<1x128x128xbf16> to vector<128x128xbf16>
    %cst_159 = arith.constant dense<0.000000e+00> : vector<12x128xf32>
    %169 = tpu.matmul %166, %168, %cst_159 {dimension_numbers = #tpu.dot_dimension_numbers<[1], [0], [0], [1], [0, 0, 1, 1], [], []>} : vector<12x128xbf16>, vector<128x128xbf16>, vector<12x128xf32> -> vector<12x128xf32>
    %170 = arith.addf %164, %169 : vector<12x128xf32>
    %c1_160 = arith.constant 1 : index
    %c4_161 = arith.constant 4 : index
    %c0_162 = arith.constant 0 : index
    %171 = vector.load %arg9[%c1_160, %c4_161, %c0_162] : memref<2x16x128xbf16, #tpu.memory_space<vmem>>, vector<1x12x128xbf16>
    %172 = vector.shape_cast %171 : vector<1x12x128xbf16> to vector<12x128xbf16>
    %c4_163 = arith.constant 4 : index
    %c0_164 = arith.constant 0 : index
    %c0_165 = arith.constant 0 : index
    %173 = vector.load %arg2[%c4_163, %c0_164, %c0_165] : memref<5x128x128xbf16, #tpu.memory_space<vmem>>, vector<1x128x128xbf16>
    %174 = vector.shape_cast %173 : vector<1x128x128xbf16> to vector<128x128xbf16>
    %cst_166 = arith.constant dense<0.000000e+00> : vector<12x128xf32>
    %175 = tpu.matmul %172, %174, %cst_166 {dimension_numbers = #tpu.dot_dimension_numbers<[1], [0], [0], [1], [0, 0, 1, 1], [], []>} : vector<12x128xbf16>, vector<128x128xbf16>, vector<12x128xf32> -> vector<12x128xf32>
    %176 = arith.addf %170, %175 : vector<12x128xf32>
    %cst_167 = arith.constant dense<0.000000e+00> : vector<128xf32>
    %177 = vector.multi_reduction <add>, %145, %cst_167 [0] : vector<12x128xf32> to vector<128xf32>
    %178 = vector.shape_cast %177 : vector<128xf32> to vector<1x128xf32>
    %cst_168 = arith.constant 0.000000e+00 : f32
    %179 = vector.broadcast %cst_168 : f32 to vector<1x128xf32>
    %180 = arith.addf %179, %178 : vector<1x128xf32>
    %cst_169 = arith.constant dense<0.000000e+00> : vector<128xf32>
    %181 = vector.multi_reduction <add>, %176, %cst_169 [0] : vector<12x128xf32> to vector<128xf32>
    %182 = vector.shape_cast %181 : vector<128xf32> to vector<1x128xf32>
    %183 = arith.addf %180, %182 : vector<1x128xf32>
    %cst_170 = arith.constant 2.400000e+01 : f32
    %184 = vector.broadcast %cst_170 : f32 to vector<1x128xf32>
    %185 = arith.divf %183, %184 : vector<1x128xf32>
    %186 = vector.broadcast %185 : vector<1x128xf32> to vector<12x128xf32>
    %187 = arith.subf %145, %186 : vector<12x128xf32>
    %188 = arith.mulf %187, %187 : vector<12x128xf32>
    %cst_171 = arith.constant dense<0.000000e+00> : vector<128xf32>
    %189 = vector.multi_reduction <add>, %188, %cst_171 [0] : vector<12x128xf32> to vector<128xf32>
    %190 = vector.shape_cast %189 : vector<128xf32> to vector<1x128xf32>
    %cst_172 = arith.constant 0.000000e+00 : f32
    %191 = vector.broadcast %cst_172 : f32 to vector<1x128xf32>
    %192 = arith.addf %191, %190 : vector<1x128xf32>
    %193 = vector.broadcast %185 : vector<1x128xf32> to vector<12x128xf32>
    %194 = arith.subf %176, %193 : vector<12x128xf32>
    %195 = arith.mulf %194, %194 : vector<12x128xf32>
    %cst_173 = arith.constant dense<0.000000e+00> : vector<128xf32>
    %196 = vector.multi_reduction <add>, %195, %cst_173 [0] : vector<12x128xf32> to vector<128xf32>
    %197 = vector.shape_cast %196 : vector<128xf32> to vector<1x128xf32>
    %198 = arith.addf %192, %197 : vector<1x128xf32>
    %cst_174 = arith.constant 2.400000e+01 : f32
    %199 = vector.broadcast %cst_174 : f32 to vector<1x128xf32>
    %200 = arith.divf %198, %199 : vector<1x128xf32>
    %cst_175 = arith.constant 9.99999974E-6 : f32
    %201 = vector.broadcast %cst_175 : f32 to vector<1x128xf32>
    %202 = arith.addf %200, %201 : vector<1x128xf32>
    %203 = math.rsqrt %202 : vector<1x128xf32>
    %204 = vector.broadcast %185 : vector<1x128xf32> to vector<12x128xf32>
    %205 = arith.subf %145, %204 : vector<12x128xf32>
    %206 = vector.broadcast %203 : vector<1x128xf32> to vector<12x128xf32>
    %207 = arith.mulf %205, %206 : vector<12x128xf32>
    %cst_176 = arith.constant 0.000000e+00 : f32
    %208 = vector.broadcast %cst_176 : f32 to vector<12x128xf32>
    %209 = arith.maximumf %207, %208 : vector<12x128xf32>
    %210 = vector.broadcast %185 : vector<1x128xf32> to vector<12x128xf32>
    %211 = arith.subf %176, %210 : vector<12x128xf32>
    %212 = vector.broadcast %203 : vector<1x128xf32> to vector<12x128xf32>
    %213 = arith.mulf %211, %212 : vector<12x128xf32>
    %cst_177 = arith.constant 0.000000e+00 : f32
    %214 = vector.broadcast %cst_177 : f32 to vector<12x128xf32>
    %215 = arith.maximumf %213, %214 : vector<12x128xf32>
    %216 = arith.truncf %209 : vector<12x128xf32> to vector<12x128xbf16>
    %c0_178 = arith.constant 0 : index
    %c3_179 = arith.constant 3 : index
    %c0_180 = arith.constant 0 : index
    %217 = vector.load %arg10[%c0_178, %c3_179, %c0_180] : memref<2x18x128xbf16, #tpu.memory_space<vmem>>, vector<1x12x128xbf16>
    %218 = vector.shape_cast %217 : vector<1x12x128xbf16> to vector<12x128xbf16>
    %219 = vector.shape_cast %216 : vector<12x128xbf16> to vector<1x12x128xbf16>
    tpu.vector_store %arg10[%c0_178, %c3_179, %c0_180], %219 {strides = array<i32>} : memref<2x18x128xbf16, #tpu.memory_space<vmem>>, vector<1x12x128xbf16>,
    %220 = arith.truncf %215 : vector<12x128xf32> to vector<12x128xbf16>
    %c1_181 = arith.constant 1 : index
    %c3_182 = arith.constant 3 : index
    %c0_183 = arith.constant 0 : index
    %221 = vector.load %arg10[%c1_181, %c3_182, %c0_183] : memref<2x18x128xbf16, #tpu.memory_space<vmem>>, vector<1x12x128xbf16>
    %222 = vector.shape_cast %221 : vector<1x12x128xbf16> to vector<12x128xbf16>
    %223 = vector.shape_cast %220 : vector<12x128xbf16> to vector<1x12x128xbf16>
    tpu.vector_store %arg10[%c1_181, %c3_182, %c0_183], %223 {strides = array<i32>} : memref<2x18x128xbf16, #tpu.memory_space<vmem>>, vector<1x12x128xbf16>,
    %cst_184 = arith.constant 0.000000e+00 : f32
    %224 = vector.broadcast %cst_184 : f32 to vector<14x128xf32>
    %c0_185 = arith.constant 0 : index
    %c0_186 = arith.constant 0 : index
    %c0_187 = arith.constant 0 : index
    %225 = vector.load %arg10[%c0_185, %c0_186, %c0_187] : memref<2x18x128xbf16, #tpu.memory_space<vmem>>, vector<1x14x128xbf16>
    %226 = vector.shape_cast %225 : vector<1x14x128xbf16> to vector<14x128xbf16>
    %c0_188 = arith.constant 0 : index
    %c0_189 = arith.constant 0 : index
    %c0_190 = arith.constant 0 : index
    %227 = vector.load %arg3[%c0_188, %c0_189, %c0_190] : memref<5x128x128xbf16, #tpu.memory_space<vmem>>, vector<1x128x128xbf16>
    %228 = vector.shape_cast %227 : vector<1x128x128xbf16> to vector<128x128xbf16>
    %cst_191 = arith.constant dense<0.000000e+00> : vector<14x128xf32>
    %229 = tpu.matmul %226, %228, %cst_191 {dimension_numbers = #tpu.dot_dimension_numbers<[1], [0], [0], [1], [0, 0, 1, 1], [], []>} : vector<14x128xbf16>, vector<128x128xbf16>, vector<14x128xf32> -> vector<14x128xf32>
    %230 = arith.addf %224, %229 : vector<14x128xf32>
    %c0_192 = arith.constant 0 : index
    %c1_193 = arith.constant 1 : index
    %c0_194 = arith.constant 0 : index
    %231 = vector.load %arg10[%c0_192, %c1_193, %c0_194] : memref<2x18x128xbf16, #tpu.memory_space<vmem>>, vector<1x14x128xbf16>
    %232 = vector.shape_cast %231 : vector<1x14x128xbf16> to vector<14x128xbf16>
    %c1_195 = arith.constant 1 : index
    %c0_196 = arith.constant 0 : index
    %c0_197 = arith.constant 0 : index
    %233 = vector.load %arg3[%c1_195, %c0_196, %c0_197] : memref<5x128x128xbf16, #tpu.memory_space<vmem>>, vector<1x128x128xbf16>
    %234 = vector.shape_cast %233 : vector<1x128x128xbf16> to vector<128x128xbf16>
    %cst_198 = arith.constant dense<0.000000e+00> : vector<14x128xf32>
    %235 = tpu.matmul %232, %234, %cst_198 {dimension_numbers = #tpu.dot_dimension_numbers<[1], [0], [0], [1], [0, 0, 1, 1], [], []>} : vector<14x128xbf16>, vector<128x128xbf16>, vector<14x128xf32> -> vector<14x128xf32>
    %236 = arith.addf %230, %235 : vector<14x128xf32>
    %c0_199 = arith.constant 0 : index
    %c2_200 = arith.constant 2 : index
    %c0_201 = arith.constant 0 : index
    %237 = vector.load %arg10[%c0_199, %c2_200, %c0_201] : memref<2x18x128xbf16, #tpu.memory_space<vmem>>, vector<1x14x128xbf16>
    %238 = vector.shape_cast %237 : vector<1x14x128xbf16> to vector<14x128xbf16>
    %c2_202 = arith.constant 2 : index
    %c0_203 = arith.constant 0 : index
    %c0_204 = arith.constant 0 : index
    %239 = vector.load %arg3[%c2_202, %c0_203, %c0_204] : memref<5x128x128xbf16, #tpu.memory_space<vmem>>, vector<1x128x128xbf16>
    %240 = vector.shape_cast %239 : vector<1x128x128xbf16> to vector<128x128xbf16>
    %cst_205 = arith.constant dense<0.000000e+00> : vector<14x128xf32>
    %241 = tpu.matmul %238, %240, %cst_205 {dimension_numbers = #tpu.dot_dimension_numbers<[1], [0], [0], [1], [0, 0, 1, 1], [], []>} : vector<14x128xbf16>, vector<128x128xbf16>, vector<14x128xf32> -> vector<14x128xf32>
    %242 = arith.addf %236, %241 : vector<14x128xf32>
    %c0_206 = arith.constant 0 : index
    %c3_207 = arith.constant 3 : index
    %c0_208 = arith.constant 0 : index
    %243 = vector.load %arg10[%c0_206, %c3_207, %c0_208] : memref<2x18x128xbf16, #tpu.memory_space<vmem>>, vector<1x14x128xbf16>
    %244 = vector.shape_cast %243 : vector<1x14x128xbf16> to vector<14x128xbf16>
    %c3_209 = arith.constant 3 : index
    %c0_210 = arith.constant 0 : index
    %c0_211 = arith.constant 0 : index
    %245 = vector.load %arg3[%c3_209, %c0_210, %c0_211] : memref<5x128x128xbf16, #tpu.memory_space<vmem>>, vector<1x128x128xbf16>
    %246 = vector.shape_cast %245 : vector<1x128x128xbf16> to vector<128x128xbf16>
    %cst_212 = arith.constant dense<0.000000e+00> : vector<14x128xf32>
    %247 = tpu.matmul %244, %246, %cst_212 {dimension_numbers = #tpu.dot_dimension_numbers<[1], [0], [0], [1], [0, 0, 1, 1], [], []>} : vector<14x128xbf16>, vector<128x128xbf16>, vector<14x128xf32> -> vector<14x128xf32>
    %248 = arith.addf %242, %247 : vector<14x128xf32>
    %c0_213 = arith.constant 0 : index
    %c4_214 = arith.constant 4 : index
    %c0_215 = arith.constant 0 : index
    %249 = vector.load %arg10[%c0_213, %c4_214, %c0_215] : memref<2x18x128xbf16, #tpu.memory_space<vmem>>, vector<1x14x128xbf16>
    %250 = vector.shape_cast %249 : vector<1x14x128xbf16> to vector<14x128xbf16>
    %c4_216 = arith.constant 4 : index
    %c0_217 = arith.constant 0 : index
    %c0_218 = arith.constant 0 : index
    %251 = vector.load %arg3[%c4_216, %c0_217, %c0_218] : memref<5x128x128xbf16, #tpu.memory_space<vmem>>, vector<1x128x128xbf16>
    %252 = vector.shape_cast %251 : vector<1x128x128xbf16> to vector<128x128xbf16>
    %cst_219 = arith.constant dense<0.000000e+00> : vector<14x128xf32>
    %253 = tpu.matmul %250, %252, %cst_219 {dimension_numbers = #tpu.dot_dimension_numbers<[1], [0], [0], [1], [0, 0, 1, 1], [], []>} : vector<14x128xbf16>, vector<128x128xbf16>, vector<14x128xf32> -> vector<14x128xf32>
    %254 = arith.addf %248, %253 : vector<14x128xf32>
    %cst_220 = arith.constant 0.000000e+00 : f32
    %255 = vector.broadcast %cst_220 : f32 to vector<14x128xf32>
    %c1_221 = arith.constant 1 : index
    %c0_222 = arith.constant 0 : index
    %c0_223 = arith.constant 0 : index
    %256 = vector.load %arg10[%c1_221, %c0_222, %c0_223] : memref<2x18x128xbf16, #tpu.memory_space<vmem>>, vector<1x14x128xbf16>
    %257 = vector.shape_cast %256 : vector<1x14x128xbf16> to vector<14x128xbf16>
    %c0_224 = arith.constant 0 : index
    %c0_225 = arith.constant 0 : index
    %c0_226 = arith.constant 0 : index
    %258 = vector.load %arg3[%c0_224, %c0_225, %c0_226] : memref<5x128x128xbf16, #tpu.memory_space<vmem>>, vector<1x128x128xbf16>
    %259 = vector.shape_cast %258 : vector<1x128x128xbf16> to vector<128x128xbf16>
    %cst_227 = arith.constant dense<0.000000e+00> : vector<14x128xf32>
    %260 = tpu.matmul %257, %259, %cst_227 {dimension_numbers = #tpu.dot_dimension_numbers<[1], [0], [0], [1], [0, 0, 1, 1], [], []>} : vector<14x128xbf16>, vector<128x128xbf16>, vector<14x128xf32> -> vector<14x128xf32>
    %261 = arith.addf %255, %260 : vector<14x128xf32>
    %c1_228 = arith.constant 1 : index
    %c1_229 = arith.constant 1 : index
    %c0_230 = arith.constant 0 : index
    %262 = vector.load %arg10[%c1_228, %c1_229, %c0_230] : memref<2x18x128xbf16, #tpu.memory_space<vmem>>, vector<1x14x128xbf16>
    %263 = vector.shape_cast %262 : vector<1x14x128xbf16> to vector<14x128xbf16>
    %c1_231 = arith.constant 1 : index
    %c0_232 = arith.constant 0 : index
    %c0_233 = arith.constant 0 : index
    %264 = vector.load %arg3[%c1_231, %c0_232, %c0_233] : memref<5x128x128xbf16, #tpu.memory_space<vmem>>, vector<1x128x128xbf16>
    %265 = vector.shape_cast %264 : vector<1x128x128xbf16> to vector<128x128xbf16>
    %cst_234 = arith.constant dense<0.000000e+00> : vector<14x128xf32>
    %266 = tpu.matmul %263, %265, %cst_234 {dimension_numbers = #tpu.dot_dimension_numbers<[1], [0], [0], [1], [0, 0, 1, 1], [], []>} : vector<14x128xbf16>, vector<128x128xbf16>, vector<14x128xf32> -> vector<14x128xf32>
    %267 = arith.addf %261, %266 : vector<14x128xf32>
    %c1_235 = arith.constant 1 : index
    %c2_236 = arith.constant 2 : index
    %c0_237 = arith.constant 0 : index
    %268 = vector.load %arg10[%c1_235, %c2_236, %c0_237] : memref<2x18x128xbf16, #tpu.memory_space<vmem>>, vector<1x14x128xbf16>
    %269 = vector.shape_cast %268 : vector<1x14x128xbf16> to vector<14x128xbf16>
    %c2_238 = arith.constant 2 : index
    %c0_239 = arith.constant 0 : index
    %c0_240 = arith.constant 0 : index
    %270 = vector.load %arg3[%c2_238, %c0_239, %c0_240] : memref<5x128x128xbf16, #tpu.memory_space<vmem>>, vector<1x128x128xbf16>
    %271 = vector.shape_cast %270 : vector<1x128x128xbf16> to vector<128x128xbf16>
    %cst_241 = arith.constant dense<0.000000e+00> : vector<14x128xf32>
    %272 = tpu.matmul %269, %271, %cst_241 {dimension_numbers = #tpu.dot_dimension_numbers<[1], [0], [0], [1], [0, 0, 1, 1], [], []>} : vector<14x128xbf16>, vector<128x128xbf16>, vector<14x128xf32> -> vector<14x128xf32>
    %273 = arith.addf %267, %272 : vector<14x128xf32>
    %c1_242 = arith.constant 1 : index
    %c3_243 = arith.constant 3 : index
    %c0_244 = arith.constant 0 : index
    %274 = vector.load %arg10[%c1_242, %c3_243, %c0_244] : memref<2x18x128xbf16, #tpu.memory_space<vmem>>, vector<1x14x128xbf16>
    %275 = vector.shape_cast %274 : vector<1x14x128xbf16> to vector<14x128xbf16>
    %c3_245 = arith.constant 3 : index
    %c0_246 = arith.constant 0 : index
    %c0_247 = arith.constant 0 : index
    %276 = vector.load %arg3[%c3_245, %c0_246, %c0_247] : memref<5x128x128xbf16, #tpu.memory_space<vmem>>, vector<1x128x128xbf16>
    %277 = vector.shape_cast %276 : vector<1x128x128xbf16> to vector<128x128xbf16>
    %cst_248 = arith.constant dense<0.000000e+00> : vector<14x128xf32>
    %278 = tpu.matmul %275, %277, %cst_248 {dimension_numbers = #tpu.dot_dimension_numbers<[1], [0], [0], [1], [0, 0, 1, 1], [], []>} : vector<14x128xbf16>, vector<128x128xbf16>, vector<14x128xf32> -> vector<14x128xf32>
    %279 = arith.addf %273, %278 : vector<14x128xf32>
    %c1_249 = arith.constant 1 : index
    %c4_250 = arith.constant 4 : index
    %c0_251 = arith.constant 0 : index
    %280 = vector.load %arg10[%c1_249, %c4_250, %c0_251] : memref<2x18x128xbf16, #tpu.memory_space<vmem>>, vector<1x14x128xbf16>
    %281 = vector.shape_cast %280 : vector<1x14x128xbf16> to vector<14x128xbf16>
    %c4_252 = arith.constant 4 : index
    %c0_253 = arith.constant 0 : index
    %c0_254 = arith.constant 0 : index
    %282 = vector.load %arg3[%c4_252, %c0_253, %c0_254] : memref<5x128x128xbf16, #tpu.memory_space<vmem>>, vector<1x128x128xbf16>
    %283 = vector.shape_cast %282 : vector<1x128x128xbf16> to vector<128x128xbf16>
    %cst_255 = arith.constant dense<0.000000e+00> : vector<14x128xf32>
    %284 = tpu.matmul %281, %283, %cst_255 {dimension_numbers = #tpu.dot_dimension_numbers<[1], [0], [0], [1], [0, 0, 1, 1], [], []>} : vector<14x128xbf16>, vector<128x128xbf16>, vector<14x128xf32> -> vector<14x128xf32>
    %285 = arith.addf %279, %284 : vector<14x128xf32>
    %cst_256 = arith.constant dense<0.000000e+00> : vector<128xf32>
    %286 = vector.multi_reduction <add>, %254, %cst_256 [0] : vector<14x128xf32> to vector<128xf32>
    %287 = vector.shape_cast %286 : vector<128xf32> to vector<1x128xf32>
    %cst_257 = arith.constant 0.000000e+00 : f32
    %288 = vector.broadcast %cst_257 : f32 to vector<1x128xf32>
    %289 = arith.addf %288, %287 : vector<1x128xf32>
    %cst_258 = arith.constant dense<0.000000e+00> : vector<128xf32>
    %290 = vector.multi_reduction <add>, %285, %cst_258 [0] : vector<14x128xf32> to vector<128xf32>
    %291 = vector.shape_cast %290 : vector<128xf32> to vector<1x128xf32>
    %292 = arith.addf %289, %291 : vector<1x128xf32>
    %cst_259 = arith.constant 2.800000e+01 : f32
    %293 = vector.broadcast %cst_259 : f32 to vector<1x128xf32>
    %294 = arith.divf %292, %293 : vector<1x128xf32>
    %295 = vector.broadcast %294 : vector<1x128xf32> to vector<14x128xf32>
    %296 = arith.subf %254, %295 : vector<14x128xf32>
    %297 = arith.mulf %296, %296 : vector<14x128xf32>
    %cst_260 = arith.constant dense<0.000000e+00> : vector<128xf32>
    %298 = vector.multi_reduction <add>, %297, %cst_260 [0] : vector<14x128xf32> to vector<128xf32>
    %299 = vector.shape_cast %298 : vector<128xf32> to vector<1x128xf32>
    %cst_261 = arith.constant 0.000000e+00 : f32
    %300 = vector.broadcast %cst_261 : f32 to vector<1x128xf32>
    %301 = arith.addf %300, %299 : vector<1x128xf32>
    %302 = vector.broadcast %294 : vector<1x128xf32> to vector<14x128xf32>
    %303 = arith.subf %285, %302 : vector<14x128xf32>
    %304 = arith.mulf %303, %303 : vector<14x128xf32>
    %cst_262 = arith.constant dense<0.000000e+00> : vector<128xf32>
    %305 = vector.multi_reduction <add>, %304, %cst_262 [0] : vector<14x128xf32> to vector<128xf32>
    %306 = vector.shape_cast %305 : vector<128xf32> to vector<1x128xf32>
    %307 = arith.addf %301, %306 : vector<1x128xf32>
    %cst_263 = arith.constant 2.800000e+01 : f32
    %308 = vector.broadcast %cst_263 : f32 to vector<1x128xf32>
    %309 = arith.divf %307, %308 : vector<1x128xf32>
    %cst_264 = arith.constant 9.99999974E-6 : f32
    %310 = vector.broadcast %cst_264 : f32 to vector<1x128xf32>
    %311 = arith.addf %309, %310 : vector<1x128xf32>
    %312 = math.rsqrt %311 : vector<1x128xf32>
    %313 = vector.broadcast %294 : vector<1x128xf32> to vector<14x128xf32>
    %314 = arith.subf %254, %313 : vector<14x128xf32>
    %315 = vector.broadcast %312 : vector<1x128xf32> to vector<14x128xf32>
    %316 = arith.mulf %314, %315 : vector<14x128xf32>
    %cst_265 = arith.constant 0.000000e+00 : f32
    %317 = vector.broadcast %cst_265 : f32 to vector<14x128xf32>
    %318 = arith.maximumf %316, %317 : vector<14x128xf32>
    %319 = vector.broadcast %294 : vector<1x128xf32> to vector<14x128xf32>
    %320 = arith.subf %285, %319 : vector<14x128xf32>
    %321 = vector.broadcast %312 : vector<1x128xf32> to vector<14x128xf32>
    %322 = arith.mulf %320, %321 : vector<14x128xf32>
    %cst_266 = arith.constant 0.000000e+00 : f32
    %323 = vector.broadcast %cst_266 : f32 to vector<14x128xf32>
    %324 = arith.maximumf %322, %323 : vector<14x128xf32>
    %325 = arith.truncf %318 : vector<14x128xf32> to vector<14x128xbf16>
    %c0_267 = arith.constant 0 : index
    %c3_268 = arith.constant 3 : index
    %c0_269 = arith.constant 0 : index
    %326 = vector.load %arg11[%c0_267, %c3_268, %c0_269] : memref<2x20x128xbf16, #tpu.memory_space<vmem>>, vector<1x14x128xbf16>
    %327 = vector.shape_cast %326 : vector<1x14x128xbf16> to vector<14x128xbf16>
    %328 = vector.shape_cast %325 : vector<14x128xbf16> to vector<1x14x128xbf16>
    tpu.vector_store %arg11[%c0_267, %c3_268, %c0_269], %328 {strides = array<i32>} : memref<2x20x128xbf16, #tpu.memory_space<vmem>>, vector<1x14x128xbf16>,
    %329 = arith.truncf %324 : vector<14x128xf32> to vector<14x128xbf16>
    %c1_270 = arith.constant 1 : index
    %c3_271 = arith.constant 3 : index
    %c0_272 = arith.constant 0 : index
    %330 = vector.load %arg11[%c1_270, %c3_271, %c0_272] : memref<2x20x128xbf16, #tpu.memory_space<vmem>>, vector<1x14x128xbf16>
    %331 = vector.shape_cast %330 : vector<1x14x128xbf16> to vector<14x128xbf16>
    %332 = vector.shape_cast %329 : vector<14x128xbf16> to vector<1x14x128xbf16>
    tpu.vector_store %arg11[%c1_270, %c3_271, %c0_272], %332 {strides = array<i32>} : memref<2x20x128xbf16, #tpu.memory_space<vmem>>, vector<1x14x128xbf16>,
    %cst_273 = arith.constant 0.000000e+00 : f32
    %333 = vector.broadcast %cst_273 : f32 to vector<16x128xf32>
    %c0_274 = arith.constant 0 : index
    %c0_275 = arith.constant 0 : index
    %c0_276 = arith.constant 0 : index
    %334 = vector.load %arg11[%c0_274, %c0_275, %c0_276] : memref<2x20x128xbf16, #tpu.memory_space<vmem>>, vector<1x16x128xbf16>
    %335 = vector.shape_cast %334 : vector<1x16x128xbf16> to vector<16x128xbf16>
    %c0_277 = arith.constant 0 : index
    %c0_278 = arith.constant 0 : index
    %c0_279 = arith.constant 0 : index
    %336 = vector.load %arg4[%c0_277, %c0_278, %c0_279] : memref<5x128x128xbf16, #tpu.memory_space<vmem>>, vector<1x128x128xbf16>
    %337 = vector.shape_cast %336 : vector<1x128x128xbf16> to vector<128x128xbf16>
    %cst_280 = arith.constant dense<0.000000e+00> : vector<16x128xf32>
    %338 = tpu.matmul %335, %337, %cst_280 {dimension_numbers = #tpu.dot_dimension_numbers<[1], [0], [0], [1], [0, 0, 1, 1], [], []>} : vector<16x128xbf16>, vector<128x128xbf16>, vector<16x128xf32> -> vector<16x128xf32>
    %339 = arith.addf %333, %338 : vector<16x128xf32>
    %c0_281 = arith.constant 0 : index
    %c1_282 = arith.constant 1 : index
    %c0_283 = arith.constant 0 : index
    %340 = vector.load %arg11[%c0_281, %c1_282, %c0_283] : memref<2x20x128xbf16, #tpu.memory_space<vmem>>, vector<1x16x128xbf16>
    %341 = vector.shape_cast %340 : vector<1x16x128xbf16> to vector<16x128xbf16>
    %c1_284 = arith.constant 1 : index
    %c0_285 = arith.constant 0 : index
    %c0_286 = arith.constant 0 : index
    %342 = vector.load %arg4[%c1_284, %c0_285, %c0_286] : memref<5x128x128xbf16, #tpu.memory_space<vmem>>, vector<1x128x128xbf16>
    %343 = vector.shape_cast %342 : vector<1x128x128xbf16> to vector<128x128xbf16>
    %cst_287 = arith.constant dense<0.000000e+00> : vector<16x128xf32>
    %344 = tpu.matmul %341, %343, %cst_287 {dimension_numbers = #tpu.dot_dimension_numbers<[1], [0], [0], [1], [0, 0, 1, 1], [], []>} : vector<16x128xbf16>, vector<128x128xbf16>, vector<16x128xf32> -> vector<16x128xf32>
    %345 = arith.addf %339, %344 : vector<16x128xf32>
    %c0_288 = arith.constant 0 : index
    %c2_289 = arith.constant 2 : index
    %c0_290 = arith.constant 0 : index
    %346 = vector.load %arg11[%c0_288, %c2_289, %c0_290] : memref<2x20x128xbf16, #tpu.memory_space<vmem>>, vector<1x16x128xbf16>
    %347 = vector.shape_cast %346 : vector<1x16x128xbf16> to vector<16x128xbf16>
    %c2_291 = arith.constant 2 : index
    %c0_292 = arith.constant 0 : index
    %c0_293 = arith.constant 0 : index
    %348 = vector.load %arg4[%c2_291, %c0_292, %c0_293] : memref<5x128x128xbf16, #tpu.memory_space<vmem>>, vector<1x128x128xbf16>
    %349 = vector.shape_cast %348 : vector<1x128x128xbf16> to vector<128x128xbf16>
    %cst_294 = arith.constant dense<0.000000e+00> : vector<16x128xf32>
    %350 = tpu.matmul %347, %349, %cst_294 {dimension_numbers = #tpu.dot_dimension_numbers<[1], [0], [0], [1], [0, 0, 1, 1], [], []>} : vector<16x128xbf16>, vector<128x128xbf16>, vector<16x128xf32> -> vector<16x128xf32>
    %351 = arith.addf %345, %350 : vector<16x128xf32>
    %c0_295 = arith.constant 0 : index
    %c3_296 = arith.constant 3 : index
    %c0_297 = arith.constant 0 : index
    %352 = vector.load %arg11[%c0_295, %c3_296, %c0_297] : memref<2x20x128xbf16, #tpu.memory_space<vmem>>, vector<1x16x128xbf16>
    %353 = vector.shape_cast %352 : vector<1x16x128xbf16> to vector<16x128xbf16>
    %c3_298 = arith.constant 3 : index
    %c0_299 = arith.constant 0 : index
    %c0_300 = arith.constant 0 : index
    %354 = vector.load %arg4[%c3_298, %c0_299, %c0_300] : memref<5x128x128xbf16, #tpu.memory_space<vmem>>, vector<1x128x128xbf16>
    %355 = vector.shape_cast %354 : vector<1x128x128xbf16> to vector<128x128xbf16>
    %cst_301 = arith.constant dense<0.000000e+00> : vector<16x128xf32>
    %356 = tpu.matmul %353, %355, %cst_301 {dimension_numbers = #tpu.dot_dimension_numbers<[1], [0], [0], [1], [0, 0, 1, 1], [], []>} : vector<16x128xbf16>, vector<128x128xbf16>, vector<16x128xf32> -> vector<16x128xf32>
    %357 = arith.addf %351, %356 : vector<16x128xf32>
    %c0_302 = arith.constant 0 : index
    %c4_303 = arith.constant 4 : index
    %c0_304 = arith.constant 0 : index
    %358 = vector.load %arg11[%c0_302, %c4_303, %c0_304] : memref<2x20x128xbf16, #tpu.memory_space<vmem>>, vector<1x16x128xbf16>
    %359 = vector.shape_cast %358 : vector<1x16x128xbf16> to vector<16x128xbf16>
    %c4_305 = arith.constant 4 : index
    %c0_306 = arith.constant 0 : index
    %c0_307 = arith.constant 0 : index
    %360 = vector.load %arg4[%c4_305, %c0_306, %c0_307] : memref<5x128x128xbf16, #tpu.memory_space<vmem>>, vector<1x128x128xbf16>
    %361 = vector.shape_cast %360 : vector<1x128x128xbf16> to vector<128x128xbf16>
    %cst_308 = arith.constant dense<0.000000e+00> : vector<16x128xf32>
    %362 = tpu.matmul %359, %361, %cst_308 {dimension_numbers = #tpu.dot_dimension_numbers<[1], [0], [0], [1], [0, 0, 1, 1], [], []>} : vector<16x128xbf16>, vector<128x128xbf16>, vector<16x128xf32> -> vector<16x128xf32>
    %363 = arith.addf %357, %362 : vector<16x128xf32>
    %cst_309 = arith.constant 0.000000e+00 : f32
    %364 = vector.broadcast %cst_309 : f32 to vector<16x128xf32>
    %c1_310 = arith.constant 1 : index
    %c0_311 = arith.constant 0 : index
    %c0_312 = arith.constant 0 : index
    %365 = vector.load %arg11[%c1_310, %c0_311, %c0_312] : memref<2x20x128xbf16, #tpu.memory_space<vmem>>, vector<1x16x128xbf16>
    %366 = vector.shape_cast %365 : vector<1x16x128xbf16> to vector<16x128xbf16>
    %c0_313 = arith.constant 0 : index
    %c0_314 = arith.constant 0 : index
    %c0_315 = arith.constant 0 : index
    %367 = vector.load %arg4[%c0_313, %c0_314, %c0_315] : memref<5x128x128xbf16, #tpu.memory_space<vmem>>, vector<1x128x128xbf16>
    %368 = vector.shape_cast %367 : vector<1x128x128xbf16> to vector<128x128xbf16>
    %cst_316 = arith.constant dense<0.000000e+00> : vector<16x128xf32>
    %369 = tpu.matmul %366, %368, %cst_316 {dimension_numbers = #tpu.dot_dimension_numbers<[1], [0], [0], [1], [0, 0, 1, 1], [], []>} : vector<16x128xbf16>, vector<128x128xbf16>, vector<16x128xf32> -> vector<16x128xf32>
    %370 = arith.addf %364, %369 : vector<16x128xf32>
    %c1_317 = arith.constant 1 : index
    %c1_318 = arith.constant 1 : index
    %c0_319 = arith.constant 0 : index
    %371 = vector.load %arg11[%c1_317, %c1_318, %c0_319] : memref<2x20x128xbf16, #tpu.memory_space<vmem>>, vector<1x16x128xbf16>
    %372 = vector.shape_cast %371 : vector<1x16x128xbf16> to vector<16x128xbf16>
    %c1_320 = arith.constant 1 : index
    %c0_321 = arith.constant 0 : index
    %c0_322 = arith.constant 0 : index
    %373 = vector.load %arg4[%c1_320, %c0_321, %c0_322] : memref<5x128x128xbf16, #tpu.memory_space<vmem>>, vector<1x128x128xbf16>
    %374 = vector.shape_cast %373 : vector<1x128x128xbf16> to vector<128x128xbf16>
    %cst_323 = arith.constant dense<0.000000e+00> : vector<16x128xf32>
    %375 = tpu.matmul %372, %374, %cst_323 {dimension_numbers = #tpu.dot_dimension_numbers<[1], [0], [0], [1], [0, 0, 1, 1], [], []>} : vector<16x128xbf16>, vector<128x128xbf16>, vector<16x128xf32> -> vector<16x128xf32>
    %376 = arith.addf %370, %375 : vector<16x128xf32>
    %c1_324 = arith.constant 1 : index
    %c2_325 = arith.constant 2 : index
    %c0_326 = arith.constant 0 : index
    %377 = vector.load %arg11[%c1_324, %c2_325, %c0_326] : memref<2x20x128xbf16, #tpu.memory_space<vmem>>, vector<1x16x128xbf16>
    %378 = vector.shape_cast %377 : vector<1x16x128xbf16> to vector<16x128xbf16>
    %c2_327 = arith.constant 2 : index
    %c0_328 = arith.constant 0 : index
    %c0_329 = arith.constant 0 : index
    %379 = vector.load %arg4[%c2_327, %c0_328, %c0_329] : memref<5x128x128xbf16, #tpu.memory_space<vmem>>, vector<1x128x128xbf16>
    %380 = vector.shape_cast %379 : vector<1x128x128xbf16> to vector<128x128xbf16>
    %cst_330 = arith.constant dense<0.000000e+00> : vector<16x128xf32>
    %381 = tpu.matmul %378, %380, %cst_330 {dimension_numbers = #tpu.dot_dimension_numbers<[1], [0], [0], [1], [0, 0, 1, 1], [], []>} : vector<16x128xbf16>, vector<128x128xbf16>, vector<16x128xf32> -> vector<16x128xf32>
    %382 = arith.addf %376, %381 : vector<16x128xf32>
    %c1_331 = arith.constant 1 : index
    %c3_332 = arith.constant 3 : index
    %c0_333 = arith.constant 0 : index
    %383 = vector.load %arg11[%c1_331, %c3_332, %c0_333] : memref<2x20x128xbf16, #tpu.memory_space<vmem>>, vector<1x16x128xbf16>
    %384 = vector.shape_cast %383 : vector<1x16x128xbf16> to vector<16x128xbf16>
    %c3_334 = arith.constant 3 : index
    %c0_335 = arith.constant 0 : index
    %c0_336 = arith.constant 0 : index
    %385 = vector.load %arg4[%c3_334, %c0_335, %c0_336] : memref<5x128x128xbf16, #tpu.memory_space<vmem>>, vector<1x128x128xbf16>
    %386 = vector.shape_cast %385 : vector<1x128x128xbf16> to vector<128x128xbf16>
    %cst_337 = arith.constant dense<0.000000e+00> : vector<16x128xf32>
    %387 = tpu.matmul %384, %386, %cst_337 {dimension_numbers = #tpu.dot_dimension_numbers<[1], [0], [0], [1], [0, 0, 1, 1], [], []>} : vector<16x128xbf16>, vector<128x128xbf16>, vector<16x128xf32> -> vector<16x128xf32>
    %388 = arith.addf %382, %387 : vector<16x128xf32>
    %c1_338 = arith.constant 1 : index
    %c4_339 = arith.constant 4 : index
    %c0_340 = arith.constant 0 : index
    %389 = vector.load %arg11[%c1_338, %c4_339, %c0_340] : memref<2x20x128xbf16, #tpu.memory_space<vmem>>, vector<1x16x128xbf16>
    %390 = vector.shape_cast %389 : vector<1x16x128xbf16> to vector<16x128xbf16>
    %c4_341 = arith.constant 4 : index
    %c0_342 = arith.constant 0 : index
    %c0_343 = arith.constant 0 : index
    %391 = vector.load %arg4[%c4_341, %c0_342, %c0_343] : memref<5x128x128xbf16, #tpu.memory_space<vmem>>, vector<1x128x128xbf16>
    %392 = vector.shape_cast %391 : vector<1x128x128xbf16> to vector<128x128xbf16>
    %cst_344 = arith.constant dense<0.000000e+00> : vector<16x128xf32>
    %393 = tpu.matmul %390, %392, %cst_344 {dimension_numbers = #tpu.dot_dimension_numbers<[1], [0], [0], [1], [0, 0, 1, 1], [], []>} : vector<16x128xbf16>, vector<128x128xbf16>, vector<16x128xf32> -> vector<16x128xf32>
    %394 = arith.addf %388, %393 : vector<16x128xf32>
    %cst_345 = arith.constant dense<0.000000e+00> : vector<128xf32>
    %395 = vector.multi_reduction <add>, %363, %cst_345 [0] : vector<16x128xf32> to vector<128xf32>
    %396 = vector.shape_cast %395 : vector<128xf32> to vector<1x128xf32>
    %cst_346 = arith.constant 0.000000e+00 : f32
    %397 = vector.broadcast %cst_346 : f32 to vector<1x128xf32>
    %398 = arith.addf %397, %396 : vector<1x128xf32>
    %cst_347 = arith.constant dense<0.000000e+00> : vector<128xf32>
    %399 = vector.multi_reduction <add>, %394, %cst_347 [0] : vector<16x128xf32> to vector<128xf32>
    %400 = vector.shape_cast %399 : vector<128xf32> to vector<1x128xf32>
    %401 = arith.addf %398, %400 : vector<1x128xf32>
    %cst_348 = arith.constant 3.200000e+01 : f32
    %402 = vector.broadcast %cst_348 : f32 to vector<1x128xf32>
    %403 = arith.divf %401, %402 : vector<1x128xf32>
    %404 = vector.broadcast %403 : vector<1x128xf32> to vector<16x128xf32>
    %405 = arith.subf %363, %404 : vector<16x128xf32>
    %406 = arith.mulf %405, %405 : vector<16x128xf32>
    %cst_349 = arith.constant dense<0.000000e+00> : vector<128xf32>
    %407 = vector.multi_reduction <add>, %406, %cst_349 [0] : vector<16x128xf32> to vector<128xf32>
    %408 = vector.shape_cast %407 : vector<128xf32> to vector<1x128xf32>
    %cst_350 = arith.constant 0.000000e+00 : f32
    %409 = vector.broadcast %cst_350 : f32 to vector<1x128xf32>
    %410 = arith.addf %409, %408 : vector<1x128xf32>
    %411 = vector.broadcast %403 : vector<1x128xf32> to vector<16x128xf32>
    %412 = arith.subf %394, %411 : vector<16x128xf32>
    %413 = arith.mulf %412, %412 : vector<16x128xf32>
    %cst_351 = arith.constant dense<0.000000e+00> : vector<128xf32>
    %414 = vector.multi_reduction <add>, %413, %cst_351 [0] : vector<16x128xf32> to vector<128xf32>
    %415 = vector.shape_cast %414 : vector<128xf32> to vector<1x128xf32>
    %416 = arith.addf %410, %415 : vector<1x128xf32>
    %cst_352 = arith.constant 3.200000e+01 : f32
    %417 = vector.broadcast %cst_352 : f32 to vector<1x128xf32>
    %418 = arith.divf %416, %417 : vector<1x128xf32>
    %cst_353 = arith.constant 9.99999974E-6 : f32
    %419 = vector.broadcast %cst_353 : f32 to vector<1x128xf32>
    %420 = arith.addf %418, %419 : vector<1x128xf32>
    %421 = math.rsqrt %420 : vector<1x128xf32>
    %422 = vector.broadcast %403 : vector<1x128xf32> to vector<16x128xf32>
    %423 = arith.subf %363, %422 : vector<16x128xf32>
    %424 = vector.broadcast %421 : vector<1x128xf32> to vector<16x128xf32>
    %425 = arith.mulf %423, %424 : vector<16x128xf32>
    %cst_354 = arith.constant 0.000000e+00 : f32
    %426 = vector.broadcast %cst_354 : f32 to vector<16x128xf32>
    %427 = arith.maximumf %425, %426 : vector<16x128xf32>
    %428 = vector.broadcast %403 : vector<1x128xf32> to vector<16x128xf32>
    %429 = arith.subf %394, %428 : vector<16x128xf32>
    %430 = vector.broadcast %421 : vector<1x128xf32> to vector<16x128xf32>
    %431 = arith.mulf %429, %430 : vector<16x128xf32>
    %cst_355 = arith.constant 0.000000e+00 : f32
    %432 = vector.broadcast %cst_355 : f32 to vector<16x128xf32>
    %433 = arith.maximumf %431, %432 : vector<16x128xf32>
    %c0_356 = arith.constant 0 : index
    %c0_357 = arith.constant 0 : index
    %434 = vector.load %arg5[%c0_356, %c0_357] : memref<128x128xbf16, #tpu.memory_space<vmem>>, vector<128x128xbf16>
    %c0_358 = arith.constant 0 : index
    %c0_359 = arith.constant 0 : index
    %435 = vector.load %arg6[%c0_358, %c0_359] : memref<1x128xf32, #tpu.memory_space<vmem>>, vector<1x128xf32>
    %436 = tpu.iota {dimensions = array<i32: 1>} : vector<1x128xi32>
    %437 = arith.truncf %427 : vector<16x128xf32> to vector<16x128xbf16>
    %cst_360 = arith.constant dense<0.000000e+00> : vector<16x128xf32>
    %438 = tpu.matmul %437, %434, %cst_360 {dimension_numbers = #tpu.dot_dimension_numbers<[1], [0], [0], [1], [0, 0, 1, 1], [], []>} : vector<16x128xbf16>, vector<128x128xbf16>, vector<16x128xf32> -> vector<16x128xf32>
    %439 = vector.broadcast %435 : vector<1x128xf32> to vector<16x128xf32>
    %440 = arith.addf %438, %439 : vector<16x128xf32>
    %441 = arith.negf %440 : vector<16x128xf32>
    %442 = math.exp %441 : vector<16x128xf32>
    %cst_361 = arith.constant 1.000000e+00 : f32
    %443 = vector.broadcast %cst_361 : f32 to vector<16x128xf32>
    %444 = arith.addf %443, %442 : vector<16x128xf32>
    %445 = arith.divf %443, %444 : vector<16x128xf32>
    %c0_362 = arith.constant 0 : index
    %c0_363 = arith.constant 0 : index
    %c0_364 = arith.constant 0 : index
    %446 = vector.load %arg7[%c0_362, %c0_363, %c0_364] : memref<2x16x128xf32, #tpu.memory_space<vmem>>, vector<1x16x128xf32>
    %447 = vector.shape_cast %446 : vector<1x16x128xf32> to vector<16x128xf32>
    %448 = vector.shape_cast %445 : vector<16x128xf32> to vector<1x16x128xf32>
    tpu.vector_store %arg7[%c0_362, %c0_363, %c0_364], %448 {strides = array<i32>} : memref<2x16x128xf32, #tpu.memory_space<vmem>>, vector<1x16x128xf32>,
    %c48_i32 = arith.constant 48 : i32
    %449 = vector.broadcast %c48_i32 : i32 to vector<1x128xi32>
    %450 = arith.cmpi slt, %436, %449 : vector<1x128xi32>
    %cst_365 = arith.constant -1.000000e+30 : f32
    %451 = vector.shape_cast %450 : vector<1x128xi1> to vector<1x128xi1>
    %452 = vector.broadcast %451 : vector<1x128xi1> to vector<16x128xi1>
    %453 = vector.broadcast %cst_365 : f32 to vector<16x128xf32>
    %454 = arith.select %452, %445, %453 : vector<16x128xi1>, vector<16x128xf32>
    %cst_366 = arith.constant dense<0xFF800000> : vector<16xf32>
    %455 = vector.multi_reduction <maximumf>, %454, %cst_366 [1] : vector<16x128xf32> to vector<16xf32>
    %456 = vector.shape_cast %455 : vector<16xf32> to vector<16x1xf32>
    %457 = vector.broadcast %456 : vector<16x1xf32> to vector<16x128xf32>
    %458 = arith.subf %454, %457 : vector<16x128xf32>
    %459 = math.exp %458 : vector<16x128xf32>
    %cst_367 = arith.constant dense<0.000000e+00> : vector<16xf32>
    %460 = vector.multi_reduction <add>, %459, %cst_367 [1] : vector<16x128xf32> to vector<16xf32>
    %461 = vector.shape_cast %460 : vector<16xf32> to vector<16x1xf32>
    %462 = tpu.reciprocal %461 {approx = true} : vector<16x1xf32> -> vector<16x1xf32>
    %463 = vector.broadcast %462 : vector<16x1xf32> to vector<16x128xf32>
    %464 = arith.mulf %459, %463 : vector<16x128xf32>
    %c0_368 = arith.constant 0 : index
    %c0_369 = arith.constant 0 : index
    %c0_370 = arith.constant 0 : index
    %465 = vector.load %arg8[%c0_368, %c0_369, %c0_370] : memref<2x16x128xf32, #tpu.memory_space<vmem>>, vector<1x16x128xf32>
    %466 = vector.shape_cast %465 : vector<1x16x128xf32> to vector<16x128xf32>
    %467 = vector.shape_cast %464 : vector<16x128xf32> to vector<1x16x128xf32>
    tpu.vector_store %arg8[%c0_368, %c0_369, %c0_370], %467 {strides = array<i32>} : memref<2x16x128xf32, #tpu.memory_space<vmem>>, vector<1x16x128xf32>,
    %468 = arith.truncf %433 : vector<16x128xf32> to vector<16x128xbf16>
    %cst_371 = arith.constant dense<0.000000e+00> : vector<16x128xf32>
    %469 = tpu.matmul %468, %434, %cst_371 {dimension_numbers = #tpu.dot_dimension_numbers<[1], [0], [0], [1], [0, 0, 1, 1], [], []>} : vector<16x128xbf16>, vector<128x128xbf16>, vector<16x128xf32> -> vector<16x128xf32>
    %470 = vector.broadcast %435 : vector<1x128xf32> to vector<16x128xf32>
    %471 = arith.addf %469, %470 : vector<16x128xf32>
    %472 = arith.negf %471 : vector<16x128xf32>
    %473 = math.exp %472 : vector<16x128xf32>
    %cst_372 = arith.constant 1.000000e+00 : f32
    %474 = vector.broadcast %cst_372 : f32 to vector<16x128xf32>
    %475 = arith.addf %474, %473 : vector<16x128xf32>
    %476 = arith.divf %474, %475 : vector<16x128xf32>
    %c1_373 = arith.constant 1 : index
    %c0_374 = arith.constant 0 : index
    %c0_375 = arith.constant 0 : index
    %477 = vector.load %arg7[%c1_373, %c0_374, %c0_375] : memref<2x16x128xf32, #tpu.memory_space<vmem>>, vector<1x16x128xf32>
    %478 = vector.shape_cast %477 : vector<1x16x128xf32> to vector<16x128xf32>
    %479 = vector.shape_cast %476 : vector<16x128xf32> to vector<1x16x128xf32>
    tpu.vector_store %arg7[%c1_373, %c0_374, %c0_375], %479 {strides = array<i32>} : memref<2x16x128xf32, #tpu.memory_space<vmem>>, vector<1x16x128xf32>,
    %c48_i32_376 = arith.constant 48 : i32
    %480 = vector.broadcast %c48_i32_376 : i32 to vector<1x128xi32>
    %481 = arith.cmpi slt, %436, %480 : vector<1x128xi32>
    %cst_377 = arith.constant -1.000000e+30 : f32
    %482 = vector.shape_cast %481 : vector<1x128xi1> to vector<1x128xi1>
    %483 = vector.broadcast %482 : vector<1x128xi1> to vector<16x128xi1>
    %484 = vector.broadcast %cst_377 : f32 to vector<16x128xf32>
    %485 = arith.select %483, %476, %484 : vector<16x128xi1>, vector<16x128xf32>
    %cst_378 = arith.constant dense<0xFF800000> : vector<16xf32>
    %486 = vector.multi_reduction <maximumf>, %485, %cst_378 [1] : vector<16x128xf32> to vector<16xf32>
    %487 = vector.shape_cast %486 : vector<16xf32> to vector<16x1xf32>
    %488 = vector.broadcast %487 : vector<16x1xf32> to vector<16x128xf32>
    %489 = arith.subf %485, %488 : vector<16x128xf32>
    %490 = math.exp %489 : vector<16x128xf32>
    %cst_379 = arith.constant dense<0.000000e+00> : vector<16xf32>
    %491 = vector.multi_reduction <add>, %490, %cst_379 [1] : vector<16x128xf32> to vector<16xf32>
    %492 = vector.shape_cast %491 : vector<16xf32> to vector<16x1xf32>
    %493 = tpu.reciprocal %492 {approx = true} : vector<16x1xf32> -> vector<16x1xf32>
    %494 = vector.broadcast %493 : vector<16x1xf32> to vector<16x128xf32>
    %495 = arith.mulf %490, %494 : vector<16x128xf32>
    %c1_380 = arith.constant 1 : index
    %c0_381 = arith.constant 0 : index
    %c0_382 = arith.constant 0 : index
    %496 = vector.load %arg8[%c1_380, %c0_381, %c0_382] : memref<2x16x128xf32, #tpu.memory_space<vmem>>, vector<1x16x128xf32>
    %497 = vector.shape_cast %496 : vector<1x16x128xf32> to vector<16x128xf32>
    %498 = vector.shape_cast %495 : vector<16x128xf32> to vector<1x16x128xf32>
    tpu.vector_store %arg8[%c1_380, %c0_381, %c0_382], %498 {strides = array<i32>} : memref<2x16x128xf32, #tpu.memory_space<vmem>>, vector<1x16x128xf32>,
    return
  }
}

</mosaic_0001>

<llo_original>
// kernel: cnn_autoencoder_forward.1
$region0: #{cnn_autoencoder_forward.1}
  #allocation0 [shape = 'u32[]', space=smem, size = 0x4, offset = 0x4, fixed_abs, tag = 'smem constant byte address 0x4 - core index']
  #allocation1 [shape = 'u32[144,128]{1,0:T(1,128)}', space=vmem, size = 0x12000, scoped, tag = 'internal scratch']
  #allocation2 [shape = 'bf16[2,16,128]{2,1,0:T(8,128)(2,1)}', space=vmem, size = 0x2000, scoped, tag = 'scratch operand']
  #allocation3 [shape = 'bf16[2,18,128]{2,1,0:T(8,128)(2,1)}', space=vmem, size = 0x3000, scoped, tag = 'scratch operand']
  #allocation4 [shape = 'bf16[2,20,128]{2,1,0:T(8,128)(2,1)}', space=vmem, size = 0x3000, scoped, tag = 'scratch operand']
  %s0 = inlined_call_operand.vmem [shape: bf16[2,18,128], index: 0, kind: input, shape index: {}]
  %s1 = inlined_call_operand.hbm [shape: bf16[5,128,128], index: 1, kind: input, shape index: {}]
  %s2 = inlined_call_operand.hbm [shape: bf16[5,128,128], index: 2, kind: input, shape index: {}]
  %s3 = inlined_call_operand.hbm [shape: bf16[5,128,128], index: 3, kind: input, shape index: {}]
  %s4 = inlined_call_operand.hbm [shape: bf16[5,128,128], index: 4, kind: input, shape index: {}]
  %s5 = inlined_call_operand.vmem [shape: bf16[128,128], index: 5, kind: input, shape index: {}]
  %s6 = inlined_call_operand.vmem [shape: f32[1,128], index: 6, kind: input, shape index: {}]
  %s7 = inlined_call_operand.vmem [shape: f32[2,16,128], index: 7, kind: output, shape index: {0}]
  %s8 = inlined_call_operand.vmem [shape: f32[2,16,128], index: 8, kind: output, shape index: {1}]
  %9 = xla_tuple %s7, %s8
  %s10 = sld [smem:[#allocation0]]
  $region62: #{cnn_autoencoder_forward.1} parent=0
    _
  %s12 = ssub.s32 1, %s10
  %s13 = scalar_select 0, %s12, %s10
  $region1: #{cnn_autoencoder_forward.1} parent=0
    #allocation5 [shape = 'u8[163840]{0}', space=vmem, size = 0x28000, scoped, tag = 'input window, operand 1, single buffered']
    #allocation6 [shape = 's32[1]{0}', space=sflag, size = 0x4, scoped, tag = 'scoped memory for cnn_autoencoder_forward.1']
    #allocation7 [shape = 'u8[163840]{0}', space=vmem, size = 0x28000, scoped, tag = 'input window, operand 2, single buffered']
    #allocation8 [shape = 's32[1]{0}', space=sflag, size = 0x4, scoped, tag = 'scoped memory for cnn_autoencoder_forward.1']
    #allocation9 [shape = 'u8[163840]{0}', space=vmem, size = 0x28000, scoped, tag = 'input window, operand 3, single buffered']
    #allocation10 [shape = 'u8[163840]{0}', space=vmem, size = 0x28000, scoped, tag = 'input window, operand 4, single buffered']
    #allocation11 [shape = 's32[1]{0}', space=sflag, size = 0x4, scoped, tag = 'scoped memory for cnn_autoencoder_forward.1']
    %14 = vsyncpa [#allocation6], 0
    %15 = vsyncpa [#allocation8], 0
    %16 = vsyncpa [#allocation11], 0
    // Predicated region
    $region2: #{cnn_autoencoder_forward.1} parent=1 // pred_check
      _
    $region3: #{cnn_autoencoder_forward.1} parent=1 // pred_check_branch
      %18 = sbr.rel (0) target = $region5
    $region4: #{cnn_autoencoder_forward.1} parent=1 // pred_region
      _
    $region5: #{cnn_autoencoder_forward.1} parent=1 // pred_fallthru
      _
    // Predicated region
    $region6: #{cnn_autoencoder_forward.1} parent=1 // pred_check
      _
    $region7: #{cnn_autoencoder_forward.1} parent=1 // pred_check_branch
      %20 = sbr.rel (0) target = $region9
    $region8: #{cnn_autoencoder_forward.1} parent=1 // pred_region
      %s22 = ssub.s32 5120, 5120
      %23 = vsyncadd [#allocation6], %s22
      %s24 = sshll.u32 [#allocation5], 4
      %s25 = int_to_ptr.vmem [resolvable:$true] %s24
      %30 = dma.hbm_to_vmem [thread:$0]  %s1, 5120, %s25, [#allocation6], 64, 64, 4
    $region9: #{cnn_autoencoder_forward.1} parent=1 // pred_fallthru
      _
    // Predicated region
    $region10: #{cnn_autoencoder_forward.1} parent=1 // pred_check
      _
    $region11: #{cnn_autoencoder_forward.1} parent=1 // pred_check_branch
      %32 = sbr.rel (0) target = $region13
    $region12: #{cnn_autoencoder_forward.1} parent=1 // pred_region
      %s34 = ssub.s32 5120, 5120
      %35 = vsyncadd [#allocation8], %s34
      %s36 = sshll.u32 [#allocation7], 4
      %s37 = int_to_ptr.vmem [resolvable:$true] %s36
      %42 = dma.hbm_to_vmem [thread:$0]  %s2, 5120, %s37, [#allocation8], 64, 64, 4
    $region13: #{cnn_autoencoder_forward.1} parent=1 // pred_fallthru
      _
    // Predicated region
    $region14: #{cnn_autoencoder_forward.1} parent=1 // pred_check
      _
    $region15: #{cnn_autoencoder_forward.1} parent=1 // pred_check_branch
      %44 = sbr.rel (0) target = $region17
    $region16: #{cnn_autoencoder_forward.1} parent=1 // pred_region
      %s46 = ssub.s32 5120, 5120
      %47 = vsyncadd [#allocation8], %s46
      %s48 = sshll.u32 [#allocation9], 4
      %s49 = int_to_ptr.vmem [resolvable:$true] %s48
      %54 = dma.hbm_to_vmem [thread:$0]  %s3, 5120, %s49, [#allocation8], 64, 64, 4
    $region17: #{cnn_autoencoder_forward.1} parent=1 // pred_fallthru
      _
    // Predicated region
    $region18: #{cnn_autoencoder_forward.1} parent=1 // pred_check
      _
    $region19: #{cnn_autoencoder_forward.1} parent=1 // pred_check_branch
      %56 = sbr.rel (0) target = $region21
    $region20: #{cnn_autoencoder_forward.1} parent=1 // pred_region
      %s58 = ssub.s32 5120, 5120
      %59 = vsyncadd [#allocation11], %s58
      %s60 = sshll.u32 [#allocation10], 4
      %s61 = int_to_ptr.vmem [resolvable:$true] %s60
      %66 = dma.hbm_to_vmem [thread:$0]  %s4, 5120, %s61, [#allocation11], 64, 64, 4
    $region21: #{cnn_autoencoder_forward.1} parent=1 // pred_fallthru
      _
    // Predicated region
    $region22: #{cnn_autoencoder_forward.1} parent=1 // pred_check
      _
    $region23: #{cnn_autoencoder_forward.1} parent=1 // pred_check_branch
      %68 = sbr.rel (0) target = $region25
    $region24: #{cnn_autoencoder_forward.1} parent=1 // pred_region
      _
    $region25: #{cnn_autoencoder_forward.1} parent=1 // pred_fallthru
      _
    // Predicated region
    $region26: #{cnn_autoencoder_forward.1} parent=1 // pred_check
      _
    $region27: #{cnn_autoencoder_forward.1} parent=1 // pred_check_branch
      %70 = sbr.rel (0) target = $region29
    $region28: #{cnn_autoencoder_forward.1} parent=1 // pred_region
      _
    $region29: #{cnn_autoencoder_forward.1} parent=1 // pred_fallthru
      _
    // Predicated region
    $region30: #{cnn_autoencoder_forward.1} parent=1 // pred_check
      _
    $region31: #{cnn_autoencoder_forward.1} parent=1 // pred_check_branch
      %72 = sbr.rel (0) target = $region33
    $region32: #{cnn_autoencoder_forward.1} parent=1 // pred_region
      %73 = dma.done [#allocation6], 5120
    $region33: #{cnn_autoencoder_forward.1} parent=1 // pred_fallthru
      _
    // Predicated region
    $region34: #{cnn_autoencoder_forward.1} parent=1 // pred_check
      _
    $region35: #{cnn_autoencoder_forward.1} parent=1 // pred_check_branch
      %75 = sbr.rel (0) target = $region37
    $region36: #{cnn_autoencoder_forward.1} parent=1 // pred_region
      %76 = dma.done [#allocation8], 5120
    $region37: #{cnn_autoencoder_forward.1} parent=1 // pred_fallthru
      _
    // Predicated region
    $region38: #{cnn_autoencoder_forward.1} parent=1 // pred_check
      _
    $region39: #{cnn_autoencoder_forward.1} parent=1 // pred_check_branch
      %78 = sbr.rel (0) target = $region41
    $region40: #{cnn_autoencoder_forward.1} parent=1 // pred_region
      %79 = dma.done [#allocation8], 5120
    $region41: #{cnn_autoencoder_forward.1} parent=1 // pred_fallthru
      _
    // Predicated region
    $region42: #{cnn_autoencoder_forward.1} parent=1 // pred_check
      _
    $region43: #{cnn_autoencoder_forward.1} parent=1 // pred_check_branch
      %81 = sbr.rel (0) target = $region45
    $region44: #{cnn_autoencoder_forward.1} parent=1 // pred_region
      %82 = dma.done [#allocation11], 5120
    $region45: #{cnn_autoencoder_forward.1} parent=1 // pred_fallthru
      _
    %84 = vst [vmem:[#allocation2] sm:$0xf] 0
    %85 = vst [vmem:[#allocation2 + $0x4] sm:$0xf] 0
    %86 = vst [vmem:[#allocation2 + $0x8] sm:$0xf] 0
    %87 = vst [vmem:[#allocation2 + $0xc] sm:$0xf] 0
    %88 = vst [vmem:[#allocation3] sm:$0xf] 0
    %89 = vst [vmem:[#allocation3 + $0x4] sm:$0xf] 0
    %90 = vst [vmem:[#allocation3 + $0x8] sm:$0x1] 0
    %91 = vst [vmem:[#allocation3 + $0xc] sm:$0xf] 0
    %92 = vst [vmem:[#allocation3 + $0x10] sm:$0xf] 0
    %93 = vst [vmem:[#allocation3 + $0x14] sm:$0x1] 0
    %94 = vst [vmem:[#allocation4] sm:$0xf] 0
    %95 = vst [vmem:[#allocation4 + $0x4] sm:$0xf] 0
    %96 = vst [vmem:[#allocation4 + $0x8] sm:$0x3] 0
    %97 = vst [vmem:[#allocation4 + $0xc] sm:$0xf] 0
    %98 = vst [vmem:[#allocation4 + $0x10] sm:$0xf] 0
    %99 = vst [vmem:[#allocation4 + $0x14] sm:$0x3] 0
    %v100 = vld [vmem:[%s0] sm:$0xf]
    %v101 = vld [vmem:[%s0 + $0x4] sm:$0x7]
    %v102 = vld [vmem:[#allocation5] sm:$0xf]
    %v103 = vld [vmem:[#allocation5 + $0x4] sm:$0xf]
    %v104 = vld [vmem:[#allocation5 + $0x8] sm:$0xf]
    %v105 = vld [vmem:[#allocation5 + $0xc] sm:$0xf]
    %v106 = vld [vmem:[#allocation5 + $0x10] sm:$0xf]
    %v107 = vld [vmem:[#allocation5 + $0x14] sm:$0xf]
    %v108 = vld [vmem:[#allocation5 + $0x18] sm:$0xf]
    %v109 = vld [vmem:[#allocation5 + $0x1c] sm:$0xf]
    %v110 = vld [vmem:[#allocation5 + $0x20] sm:$0xf]
    %v111 = vld [vmem:[#allocation5 + $0x24] sm:$0xf]
    %v112 = vld [vmem:[#allocation5 + $0x28] sm:$0xf]
    %v113 = vld [vmem:[#allocation5 + $0x2c] sm:$0xf]
    %v114 = vld [vmem:[#allocation5 + $0x30] sm:$0xf]
    %v115 = vld [vmem:[#allocation5 + $0x34] sm:$0xf]
    %v116 = vld [vmem:[#allocation5 + $0x38] sm:$0xf]
    %v117 = vld [vmem:[#allocation5 + $0x3c] sm:$0xf]
    %v118 = vld [vmem:[%s0 + $0x4] sm:$0xf]
    %s119 = scalar_lea.vmem [#allocation5], 64
    %v120 = vld [vmem:[%s119] sm:$0xf]
    %v121 = vld [vmem:[%s119 + $0x4] sm:$0xf]
    %v122 = vld [vmem:[%s119 + $0x8] sm:$0xf]
    %v123 = vld [vmem:[%s119 + $0xc] sm:$0xf]
    %v124 = vld [vmem:[%s119 + $0x10] sm:$0xf]
    %v125 = vld [vmem:[%s119 + $0x14] sm:$0xf]
    %v126 = vld [vmem:[%s119 + $0x18] sm:$0xf]
    %v127 = vld [vmem:[%s119 + $0x1c] sm:$0xf]
    %v128 = vld [vmem:[%s119 + $0x20] sm:$0xf]
    %v129 = vld [vmem:[%s119 + $0x24] sm:$0xf]
    %v130 = vld [vmem:[%s119 + $0x28] sm:$0xf]
    %v131 = vld [vmem:[%s119 + $0x2c] sm:$0xf]
    %v132 = vld [vmem:[%s119 + $0x30] sm:$0xf]
    %v133 = vld [vmem:[%s119 + $0x34] sm:$0xf]
    %v134 = vld [vmem:[%s119 + $0x38] sm:$0xf]
    %v135 = vld [vmem:[%s119 + $0x3c] sm:$0xf]
    %v138 = vunpack.c.l.b16 %v100
    %v139 = vunpack.c.l.b16 %v118
    %v140 = vpack.c.b16 %v139, %v138
    %v142 = vshrl.u32 %v140, 16
    %v144 = vshll.u32 %v140, 16
    %v146 = vrot.slane %v144, 1
    %v147 = vor.u32 %v142, %v146
    %v165 = vunpack.c.l.b16 %v120
    %v166 = vunpack.c.l.b16 %v121
    %v167 = vunpack.c.l.b16 %v122
    %v168 = vunpack.c.l.b16 %v123
    %v169 = vunpack.c.l.b16 %v124
    %v170 = vunpack.c.l.b16 %v125
    %v171 = vunpack.c.l.b16 %v126
    %v172 = vunpack.c.l.b16 %v127
    %v173 = vunpack.c.l.b16 %v128
    %v174 = vunpack.c.l.b16 %v129
    %v175 = vunpack.c.l.b16 %v130
    %v176 = vunpack.c.l.b16 %v131
    %v177 = vunpack.c.l.b16 %v132
    %v178 = vunpack.c.l.b16 %v133
    %v179 = vunpack.c.l.b16 %v134
    %v180 = vunpack.c.l.b16 %v135
    %v181 = vpack.c.b16 %v166, %v165
    %v182 = vpack.c.b16 %v168, %v167
    %v183 = vpack.c.b16 %v170, %v169
    %v184 = vpack.c.b16 %v172, %v171
    %v185 = vpack.c.b16 %v174, %v173
    %v186 = vpack.c.b16 %v176, %v175
    %v187 = vpack.c.b16 %v178, %v177
    %v188 = vpack.c.b16 %v180, %v179
    %197 = vmatprep.subr.bf16.mxu0 0
    %198 = vmatpush1.bf16.msra.mxu0 %v188
    %199 = vmatprep.subr.bf16.mxu0 0
    %200 = vmatpush1.bf16.msra.mxu0 %v187
    %201 = vmatprep.subr.bf16.mxu0 0
    %202 = vmatpush1.bf16.msra.mxu0 %v186
    %203 = vmatprep.subr.bf16.mxu0 0
    %204 = vmatpush1.bf16.msra.mxu0 %v185
    %205 = vmatprep.subr.bf16.mxu0 0
    %206 = vmatpush1.bf16.msra.mxu0 %v184
    %207 = vmatprep.subr.bf16.mxu0 0
    %208 = vmatpush1.bf16.msra.mxu0 %v183
    %209 = vmatprep.subr.bf16.mxu0 0
    %210 = vmatpush1.bf16.msra.mxu0 %v182
    %211 = vmatprep.subr.bf16.mxu0 0
    %212 = vmatpush1.bf16.msra.mxu0 %v181
    %213 = vmatprep.subr.bf16.mxu0 0
    %214 = vmatpush2.bf16.msra.mxu0 0
    %215 = vmatprep.subr.bf16.mxu0 0
    %216 = vmatpush2.bf16.msra.mxu0 0
    %217 = vmatprep.subr.bf16.mxu0 0
    %218 = vmatpush2.bf16.msra.mxu0 0
    %219 = vmatprep.subr.bf16.mxu0 0
    %220 = vmatpush2.bf16.msra.mxu0 0
    %221 = vmatprep.subr.bf16.mxu0 0
    %222 = vmatpush2.bf16.msra.mxu0 0
    %223 = vmatprep.subr.bf16.mxu0 0
    %224 = vmatpush2.bf16.msra.mxu0 0
    %225 = vmatprep.subr.bf16.mxu0 0
    %226 = vmatpush2.bf16.msra.mxu0 0
    %227 = vmatprep.subr.bf16.mxu0 0
    %228 = vmatpush2.bf16.msra.mxu0 0
    %229 = vmatprep.mubr.bf16.mxu0 0
    %230 = vmatmul.mubr.bf16.gmra.mxu0 %v147
    %v231 = vpop.f32.mrf.mxu0
    %v232 = vadd.f32 0.0, %v231
    %v233 = vpop.f32.mrf.mxu0
    %v234 = vpop.f32.mrf.mxu0
    %v235 = vadd.f32 0.0, %v234
    %v236 = vpop.f32.mrf.mxu0
    %237 = vdwg.mxu0
    %v239 = vunpack.c.l.b16 %v101
    %v240 = vpack.c.b16 %v239, %v138
    %v258 = vunpack.c.l.b16 %v102
    %v259 = vunpack.c.l.b16 %v103
    %v260 = vunpack.c.l.b16 %v104
    %v261 = vunpack.c.l.b16 %v105
    %v262 = vunpack.c.l.b16 %v106
    %v263 = vunpack.c.l.b16 %v107
    %v264 = vunpack.c.l.b16 %v108
    %v265 = vunpack.c.l.b16 %v109
    %v266 = vunpack.c.l.b16 %v110
    %v267 = vunpack.c.l.b16 %v111
    %v268 = vunpack.c.l.b16 %v112
    %v269 = vunpack.c.l.b16 %v113
    %v270 = vunpack.c.l.b16 %v114
    %v271 = vunpack.c.l.b16 %v115
    %v272 = vunpack.c.l.b16 %v116
    %v273 = vunpack.c.l.b16 %v117
    %v274 = vpack.c.b16 %v259, %v258
    %v275 = vpack.c.b16 %v261, %v260
    %v276 = vpack.c.b16 %v263, %v262
    %v277 = vpack.c.b16 %v265, %v264
    %v278 = vpack.c.b16 %v267, %v266
    %v279 = vpack.c.b16 %v269, %v268
    %v280 = vpack.c.b16 %v271, %v270
    %v281 = vpack.c.b16 %v273, %v272
    %290 = vmatprep.subr.bf16.mxu0 0
    %291 = vmatpush1.bf16.msra.mxu0 %v281
    %292 = vmatprep.subr.bf16.mxu0 0
    %293 = vmatpush1.bf16.msra.mxu0 %v280
    %294 = vmatprep.subr.bf16.mxu0 0
    %295 = vmatpush1.bf16.msra.mxu0 %v279
    %296 = vmatprep.subr.bf16.mxu0 0
    %297 = vmatpush1.bf16.msra.mxu0 %v278
    %298 = vmatprep.subr.bf16.mxu0 0
    %299 = vmatpush1.bf16.msra.mxu0 %v277
    %300 = vmatprep.subr.bf16.mxu0 0
    %301 = vmatpush1.bf16.msra.mxu0 %v276
    %302 = vmatprep.subr.bf16.mxu0 0
    %303 = vmatpush1.bf16.msra.mxu0 %v275
    %304 = vmatprep.subr.bf16.mxu0 0
    %305 = vmatpush1.bf16.msra.mxu0 %v274
    %306 = vmatprep.subr.bf16.mxu0 0
    %307 = vmatpush2.bf16.msra.mxu0 0
    %308 = vmatprep.subr.bf16.mxu0 0
    %309 = vmatpush2.bf16.msra.mxu0 0
    %310 = vmatprep.subr.bf16.mxu0 0
    %311 = vmatpush2.bf16.msra.mxu0 0
    %312 = vmatprep.subr.bf16.mxu0 0
    %313 = vmatpush2.bf16.msra.mxu0 0
    %314 = vmatprep.subr.bf16.mxu0 0
    %315 = vmatpush2.bf16.msra.mxu0 0
    %316 = vmatprep.subr.bf16.mxu0 0
    %317 = vmatpush2.bf16.msra.mxu0 0
    %318 = vmatprep.subr.bf16.mxu0 0
    %319 = vmatpush2.bf16.msra.mxu0 0
    %320 = vmatprep.subr.bf16.mxu0 0
    %321 = vmatpush2.bf16.msra.mxu0 0
    %322 = vmatprep.mubr.bf16.mxu0 0
    %323 = vmatmul.mubr.bf16.gmra.mxu0 %v240
    %v324 = vpop.f32.mrf.mxu0
    %v325 = vadd.f32 %v232, %v324
    %v326 = vpop.f32.mrf.mxu0
    %v327 = vpop.f32.mrf.mxu0
    %v328 = vadd.f32 %v235, %v327
    %v329 = vpop.f32.mrf.mxu0
    %330 = vdwg.mxu0
    %v331 = vld [vmem:[%s0] sm:$0xe]
    %s332 = scalar_lea.vmem [#allocation5], 128
    %v333 = vld [vmem:[%s332] sm:$0xf]
    %v334 = vld [vmem:[%s332 + $0x4] sm:$0xf]
    %v335 = vld [vmem:[%s332 + $0x8] sm:$0xf]
    %v336 = vld [vmem:[%s332 + $0xc] sm:$0xf]
    %v337 = vld [vmem:[%s332 + $0x10] sm:$0xf]
    %v338 = vld [vmem:[%s332 + $0x14] sm:$0xf]
    %v339 = vld [vmem:[%s332 + $0x18] sm:$0xf]
    %v340 = vld [vmem:[%s332 + $0x1c] sm:$0xf]
    %v341 = vld [vmem:[%s332 + $0x20] sm:$0xf]
    %v342 = vld [vmem:[%s332 + $0x24] sm:$0xf]
    %v343 = vld [vmem:[%s332 + $0x28] sm:$0xf]
    %v344 = vld [vmem:[%s332 + $0x2c] sm:$0xf]
    %v345 = vld [vmem:[%s332 + $0x30] sm:$0xf]
    %v346 = vld [vmem:[%s332 + $0x34] sm:$0xf]
    %v347 = vld [vmem:[%s332 + $0x38] sm:$0xf]
    %v348 = vld [vmem:[%s332 + $0x3c] sm:$0xf]
    %v350 = vunpack.c.l.b16 %v331
    %v351 = vpack.c.b16 %v139, %v350
    %v352 = vrot.slane %v351, 1
    %v370 = vunpack.c.l.b16 %v333
    %v371 = vunpack.c.l.b16 %v334
    %v372 = vunpack.c.l.b16 %v335
    %v373 = vunpack.c.l.b16 %v336
    %v374 = vunpack.c.l.b16 %v337
    %v375 = vunpack.c.l.b16 %v338
    %v376 = vunpack.c.l.b16 %v339
    %v377 = vunpack.c.l.b16 %v340
    %v378 = vunpack.c.l.b16 %v341
    %v379 = vunpack.c.l.b16 %v342
    %v380 = vunpack.c.l.b16 %v343
    %v381 = vunpack.c.l.b16 %v344
    %v382 = vunpack.c.l.b16 %v345
    %v383 = vunpack.c.l.b16 %v346
    %v384 = vunpack.c.l.b16 %v347
    %v385 = vunpack.c.l.b16 %v348
    %v386 = vpack.c.b16 %v371, %v370
    %v387 = vpack.c.b16 %v373, %v372
    %v388 = vpack.c.b16 %v375, %v374
    %v389 = vpack.c.b16 %v377, %v376
    %v390 = vpack.c.b16 %v379, %v378
    %v391 = vpack.c.b16 %v381, %v380
    %v392 = vpack.c.b16 %v383, %v382
    %v393 = vpack.c.b16 %v385, %v384
    %402 = vmatprep.subr.bf16.mxu0 0
    %403 = vmatpush1.bf16.msra.mxu0 %v393
    %404 = vmatprep.subr.bf16.mxu0 0
    %405 = vmatpush1.bf16.msra.mxu0 %v392
    %406 = vmatprep.subr.bf16.mxu0 0
    %407 = vmatpush1.bf16.msra.mxu0 %v391
    %408 = vmatprep.subr.bf16.mxu0 0
    %409 = vmatpush1.bf16.msra.mxu0 %v390
    %410 = vmatprep.subr.bf16.mxu0 0
    %411 = vmatpush1.bf16.msra.mxu0 %v389
    %412 = vmatprep.subr.bf16.mxu0 0
    %413 = vmatpush1.bf16.msra.mxu0 %v388
    %414 = vmatprep.subr.bf16.mxu0 0
    %415 = vmatpush1.bf16.msra.mxu0 %v387
    %416 = vmatprep.subr.bf16.mxu0 0
    %417 = vmatpush1.bf16.msra.mxu0 %v386
    %418 = vmatprep.subr.bf16.mxu0 0
    %419 = vmatpush2.bf16.msra.mxu0 0
    %420 = vmatprep.subr.bf16.mxu0 0
    %421 = vmatpush2.bf16.msra.mxu0 0
    %422 = vmatprep.subr.bf16.mxu0 0
    %423 = vmatpush2.bf16.msra.mxu0 0
    %424 = vmatprep.subr.bf16.mxu0 0
    %425 = vmatpush2.bf16.msra.mxu0 0
    %426 = vmatprep.subr.bf16.mxu0 0
    %427 = vmatpush2.bf16.msra.mxu0 0
    %428 = vmatprep.subr.bf16.mxu0 0
    %429 = vmatpush2.bf16.msra.mxu0 0
    %430 = vmatprep.subr.bf16.mxu0 0
    %431 = vmatpush2.bf16.msra.mxu0 0
    %432 = vmatprep.subr.bf16.mxu0 0
    %433 = vmatpush2.bf16.msra.mxu0 0
    %434 = vmatprep.mubr.bf16.mxu0 0
    %435 = vmatmul.mubr.bf16.gmra.mxu0 %v352
    %v436 = vpop.f32.mrf.mxu0
    %v437 = vadd.f32 0.0, %v436
    %v438 = vpop.f32.mrf.mxu0
    %v439 = vpop.f32.mrf.mxu0
    %v440 = vadd.f32 0.0, %v439
    %v441 = vpop.f32.mrf.mxu0
    %442 = vdwg.mxu0
    %v443 = vadd.f32 %v325, %v437
    %v444 = vadd.f32 %v328, %v440
    %v445 = vld [vmem:[%s0] sm:$0xe]
    %v446 = vld [vmem:[%s0 + $0x4] sm:$0xf]
    %v447 = vld [vmem:[%s0 + $0x8] sm:$0x1]
    %s448 = scalar_lea.vmem [#allocation5], 192
    %v449 = vld [vmem:[%s448] sm:$0xf]
    %v450 = vld [vmem:[%s448 + $0x4] sm:$0xf]
    %v451 = vld [vmem:[%s448 + $0x8] sm:$0xf]
    %v452 = vld [vmem:[%s448 + $0xc] sm:$0xf]
    %v453 = vld [vmem:[%s448 + $0x10] sm:$0xf]
    %v454 = vld [vmem:[%s448 + $0x14] sm:$0xf]
    %v455 = vld [vmem:[%s448 + $0x18] sm:$0xf]
    %v456 = vld [vmem:[%s448 + $0x1c] sm:$0xf]
    %v457 = vld [vmem:[%s448 + $0x20] sm:$0xf]
    %v458 = vld [vmem:[%s448 + $0x24] sm:$0xf]
    %v459 = vld [vmem:[%s448 + $0x28] sm:$0xf]
    %v460 = vld [vmem:[%s448 + $0x2c] sm:$0xf]
    %v461 = vld [vmem:[%s448 + $0x30] sm:$0xf]
    %v462 = vld [vmem:[%s448 + $0x34] sm:$0xf]
    %v463 = vld [vmem:[%s448 + $0x38] sm:$0xf]
    %v464 = vld [vmem:[%s448 + $0x3c] sm:$0xf]
    %v468 = vunpack.c.l.b16 %v445
    %v469 = vunpack.c.l.b16 %v446
    %v470 = vunpack.c.l.b16 %v447
    %v471 = vpack.c.b16 %v469, %v468
    %v472 = vpack.c.b16 %v470, %v470
    %vm473 = vsmask.f32 6400
    %v475 = vshrl.u32 %v471, 16
    %v477 = vrot.slane %v475, 1
    %v478 = vshll.u32 %v471, 16
    %v480 = vrot.slane %v478, 2
    %v481 = vor.u32 %v477, %v480
    %v483 = vshll.u32 %v472, 16
    %v485 = vrot.slane %v483, 2
    %v486 = vsel %vm473, %v481, %v485
    %v504 = vunpack.c.l.b16 %v449
    %v505 = vunpack.c.l.b16 %v450
    %v506 = vunpack.c.l.b16 %v451
    %v507 = vunpack.c.l.b16 %v452
    %v508 = vunpack.c.l.b16 %v453
    %v509 = vunpack.c.l.b16 %v454
    %v510 = vunpack.c.l.b16 %v455
    %v511 = vunpack.c.l.b16 %v456
    %v512 = vunpack.c.l.b16 %v457
    %v513 = vunpack.c.l.b16 %v458
    %v514 = vunpack.c.l.b16 %v459
    %v515 = vunpack.c.l.b16 %v460
    %v516 = vunpack.c.l.b16 %v461
    %v517 = vunpack.c.l.b16 %v462
    %v518 = vunpack.c.l.b16 %v463
    %v519 = vunpack.c.l.b16 %v464
    %v520 = vpack.c.b16 %v505, %v504
    %v521 = vpack.c.b16 %v507, %v506
    %v522 = vpack.c.b16 %v509, %v508
    %v523 = vpack.c.b16 %v511, %v510
    %v524 = vpack.c.b16 %v513, %v512
    %v525 = vpack.c.b16 %v515, %v514
    %v526 = vpack.c.b16 %v517, %v516
    %v527 = vpack.c.b16 %v519, %v518
    %536 = vmatprep.subr.bf16.mxu0 0
    %537 = vmatpush1.bf16.msra.mxu0 %v527
    %538 = vmatprep.subr.bf16.mxu0 0
    %539 = vmatpush1.bf16.msra.mxu0 %v526
    %540 = vmatprep.subr.bf16.mxu0 0
    %541 = vmatpush1.bf16.msra.mxu0 %v525
    %542 = vmatprep.subr.bf16.mxu0 0
    %543 = vmatpush1.bf16.msra.mxu0 %v524
    %544 = vmatprep.subr.bf16.mxu0 0
    %545 = vmatpush1.bf16.msra.mxu0 %v523
    %546 = vmatprep.subr.bf16.mxu0 0
    %547 = vmatpush1.bf16.msra.mxu0 %v522
    %548 = vmatprep.subr.bf16.mxu0 0
    %549 = vmatpush1.bf16.msra.mxu0 %v521
    %550 = vmatprep.subr.bf16.mxu0 0
    %551 = vmatpush1.bf16.msra.mxu0 %v520
    %552 = vmatprep.subr.bf16.mxu0 0
    %553 = vmatpush2.bf16.msra.mxu0 0
    %554 = vmatprep.subr.bf16.mxu0 0
    %555 = vmatpush2.bf16.msra.mxu0 0
    %556 = vmatprep.subr.bf16.mxu0 0
    %557 = vmatpush2.bf16.msra.mxu0 0
    %558 = vmatprep.subr.bf16.mxu0 0
    %559 = vmatpush2.bf16.msra.mxu0 0
    %560 = vmatprep.subr.bf16.mxu0 0
    %561 = vmatpush2.bf16.msra.mxu0 0
    %562 = vmatprep.subr.bf16.mxu0 0
    %563 = vmatpush2.bf16.msra.mxu0 0
    %564 = vmatprep.subr.bf16.mxu0 0
    %565 = vmatpush2.bf16.msra.mxu0 0
    %566 = vmatprep.subr.bf16.mxu0 0
    %567 = vmatpush2.bf16.msra.mxu0 0
    %568 = vmatprep.mubr.bf16.mxu0 0
    %569 = vmatmul.mubr.bf16.gmra.mxu0 %v486
    %v570 = vpop.f32.mrf.mxu0
    %v571 = vadd.f32 0.0, %v570
    %v572 = vpop.f32.mrf.mxu0
    %v573 = vpop.f32.mrf.mxu0
    %v574 = vadd.f32 0.0, %v573
    %v575 = vpop.f32.mrf.mxu0
    %576 = vdwg.mxu0
    %v577 = vadd.f32 %v443, %v571
    %v578 = vadd.f32 %v444, %v574
    %v579 = vld [vmem:[%s0] sm:$0xc]
    %s580 = scalar_lea.vmem [#allocation5], 256
    %v581 = vld [vmem:[%s580] sm:$0xf]
    %v582 = vld [vmem:[%s580 + $0x4] sm:$0xf]
    %v583 = vld [vmem:[%s580 + $0x8] sm:$0xf]
    %v584 = vld [vmem:[%s580 + $0xc] sm:$0xf]
    %v585 = vld [vmem:[%s580 + $0x10] sm:$0xf]
    %v586 = vld [vmem:[%s580 + $0x14] sm:$0xf]
    %v587 = vld [vmem:[%s580 + $0x18] sm:$0xf]
    %v588 = vld [vmem:[%s580 + $0x1c] sm:$0xf]
    %v589 = vld [vmem:[%s580 + $0x20] sm:$0xf]
    %v590 = vld [vmem:[%s580 + $0x24] sm:$0xf]
    %v591 = vld [vmem:[%s580 + $0x28] sm:$0xf]
    %v592 = vld [vmem:[%s580 + $0x2c] sm:$0xf]
    %v593 = vld [vmem:[%s580 + $0x30] sm:$0xf]
    %v594 = vld [vmem:[%s580 + $0x34] sm:$0xf]
    %v595 = vld [vmem:[%s580 + $0x38] sm:$0xf]
    %v596 = vld [vmem:[%s580 + $0x3c] sm:$0xf]
    %v598 = vunpack.c.l.b16 %v579
    %v599 = vpack.c.b16 %v469, %v598
    %vm600 = vcmask 1045504
    %v601 = vrot.slane %v599, 2
    %v602 = vrot.slane %v472, 2
    %v603 = vsel %vm600, %v601, %v602
    %v621 = vunpack.c.l.b16 %v581
    %v622 = vunpack.c.l.b16 %v582
    %v623 = vunpack.c.l.b16 %v583
    %v624 = vunpack.c.l.b16 %v584
    %v625 = vunpack.c.l.b16 %v585
    %v626 = vunpack.c.l.b16 %v586
    %v627 = vunpack.c.l.b16 %v587
    %v628 = vunpack.c.l.b16 %v588
    %v629 = vunpack.c.l.b16 %v589
    %v630 = vunpack.c.l.b16 %v590
    %v631 = vunpack.c.l.b16 %v591
    %v632 = vunpack.c.l.b16 %v592
    %v633 = vunpack.c.l.b16 %v593
    %v634 = vunpack.c.l.b16 %v594
    %v635 = vunpack.c.l.b16 %v595
    %v636 = vunpack.c.l.b16 %v596
    %v637 = vpack.c.b16 %v622, %v621
    %v638 = vpack.c.b16 %v624, %v623
    %v639 = vpack.c.b16 %v626, %v625
    %v640 = vpack.c.b16 %v628, %v627
    %v641 = vpack.c.b16 %v630, %v629
    %v642 = vpack.c.b16 %v632, %v631
    %v643 = vpack.c.b16 %v634, %v633
    %v644 = vpack.c.b16 %v636, %v635
    %653 = vmatprep.subr.bf16.mxu0 0
    %654 = vmatpush1.bf16.msra.mxu0 %v644
    %655 = vmatprep.subr.bf16.mxu0 0
    %656 = vmatpush1.bf16.msra.mxu0 %v643
    %657 = vmatprep.subr.bf16.mxu0 0
    %658 = vmatpush1.bf16.msra.mxu0 %v642
    %659 = vmatprep.subr.bf16.mxu0 0
    %660 = vmatpush1.bf16.msra.mxu0 %v641
    %661 = vmatprep.subr.bf16.mxu0 0
    %662 = vmatpush1.bf16.msra.mxu0 %v640
    %663 = vmatprep.subr.bf16.mxu0 0
    %664 = vmatpush1.bf16.msra.mxu0 %v639
    %665 = vmatprep.subr.bf16.mxu0 0
    %666 = vmatpush1.bf16.msra.mxu0 %v638
    %667 = vmatprep.subr.bf16.mxu0 0
    %668 = vmatpush1.bf16.msra.mxu0 %v637
    %669 = vmatprep.subr.bf16.mxu0 0
    %670 = vmatpush2.bf16.msra.mxu0 0
    %671 = vmatprep.subr.bf16.mxu0 0
    %672 = vmatpush2.bf16.msra.mxu0 0
    %673 = vmatprep.subr.bf16.mxu0 0
    %674 = vmatpush2.bf16.msra.mxu0 0
    %675 = vmatprep.subr.bf16.mxu0 0
    %676 = vmatpush2.bf16.msra.mxu0 0
    %677 = vmatprep.subr.bf16.mxu0 0
    %678 = vmatpush2.bf16.msra.mxu0 0
    %679 = vmatprep.subr.bf16.mxu0 0
    %680 = vmatpush2.bf16.msra.mxu0 0
    %681 = vmatprep.subr.bf16.mxu0 0
    %682 = vmatpush2.bf16.msra.mxu0 0
    %683 = vmatprep.subr.bf16.mxu0 0
    %684 = vmatpush2.bf16.msra.mxu0 0
    %685 = vmatprep.mubr.bf16.mxu0 0
    %686 = vmatmul.mubr.bf16.gmra.mxu0 %v603
    %v687 = vpop.f32.mrf.mxu0
    %v688 = vadd.f32 0.0, %v687
    %v689 = vpop.f32.mrf.mxu0
    %v690 = vpop.f32.mrf.mxu0
    %v691 = vadd.f32 0.0, %v690
    %v692 = vpop.f32.mrf.mxu0
    %693 = vdwg.mxu0
    %v694 = vadd.f32 %v577, %v688
    %v695 = vadd.f32 %v578, %v691
    %s696 = scalar_lea.vmem %s0, 12
    %v697 = vld [vmem:[%s696] sm:$0xf]
    %v698 = vld [vmem:[%s696 + $0x4] sm:$0x7]
    %v699 = vld [vmem:[%s696 + $0x4] sm:$0xf]
    %v702 = vunpack.c.l.b16 %v697
    %v703 = vunpack.c.l.b16 %v699
    %v704 = vpack.c.b16 %v703, %v702
    %v706 = vshrl.u32 %v704, 16
    %v708 = vshll.u32 %v704, 16
    %v710 = vrot.slane %v708, 1
    %v711 = vor.u32 %v706, %v710
    %713 = vmatprep.subr.bf16.mxu0 0
    %714 = vmatpush1.bf16.msra.mxu0 %v188
    %715 = vmatprep.subr.bf16.mxu0 0
    %716 = vmatpush1.bf16.msra.mxu0 %v187
    %717 = vmatprep.subr.bf16.mxu0 0
    %718 = vmatpush1.bf16.msra.mxu0 %v186
    %719 = vmatprep.subr.bf16.mxu0 0
    %720 = vmatpush1.bf16.msra.mxu0 %v185
    %721 = vmatprep.subr.bf16.mxu0 0
    %722 = vmatpush1.bf16.msra.mxu0 %v184
    %723 = vmatprep.subr.bf16.mxu0 0
    %724 = vmatpush1.bf16.msra.mxu0 %v183
    %725 = vmatprep.subr.bf16.mxu0 0
    %726 = vmatpush1.bf16.msra.mxu0 %v182
    %727 = vmatprep.subr.bf16.mxu0 0
    %728 = vmatpush1.bf16.msra.mxu0 %v181
    %729 = vmatprep.subr.bf16.mxu0 0
    %730 = vmatpush2.bf16.msra.mxu0 0
    %731 = vmatprep.subr.bf16.mxu0 0
    %732 = vmatpush2.bf16.msra.mxu0 0
    %733 = vmatprep.subr.bf16.mxu0 0
    %734 = vmatpush2.bf16.msra.mxu0 0
    %735 = vmatprep.subr.bf16.mxu0 0
    %736 = vmatpush2.bf16.msra.mxu0 0
    %737 = vmatprep.subr.bf16.mxu0 0
    %738 = vmatpush2.bf16.msra.mxu0 0
    %739 = vmatprep.subr.bf16.mxu0 0
    %740 = vmatpush2.bf16.msra.mxu0 0
    %741 = vmatprep.subr.bf16.mxu0 0
    %742 = vmatpush2.bf16.msra.mxu0 0
    %743 = vmatprep.subr.bf16.mxu0 0
    %744 = vmatpush2.bf16.msra.mxu0 0
    %745 = vmatprep.mubr.bf16.mxu0 0
    %746 = vmatmul.mubr.bf16.gmra.mxu0 %v711
    %v747 = vpop.f32.mrf.mxu0
    %v748 = vadd.f32 0.0, %v747
    %v749 = vpop.f32.mrf.mxu0
    %v750 = vpop.f32.mrf.mxu0
    %v751 = vadd.f32 0.0, %v750
    %v752 = vpop.f32.mrf.mxu0
    %753 = vdwg.mxu0
    %v755 = vunpack.c.l.b16 %v698
    %v756 = vpack.c.b16 %v755, %v702
    %758 = vmatprep.subr.bf16.mxu0 0
    %759 = vmatpush1.bf16.msra.mxu0 %v281
    %760 = vmatprep.subr.bf16.mxu0 0
    %761 = vmatpush1.bf16.msra.mxu0 %v280
    %762 = vmatprep.subr.bf16.mxu0 0
    %763 = vmatpush1.bf16.msra.mxu0 %v279
    %764 = vmatprep.subr.bf16.mxu0 0
    %765 = vmatpush1.bf16.msra.mxu0 %v278
    %766 = vmatprep.subr.bf16.mxu0 0
    %767 = vmatpush1.bf16.msra.mxu0 %v277
    %768 = vmatprep.subr.bf16.mxu0 0
    %769 = vmatpush1.bf16.msra.mxu0 %v276
    %770 = vmatprep.subr.bf16.mxu0 0
    %771 = vmatpush1.bf16.msra.mxu0 %v275
    %772 = vmatprep.subr.bf16.mxu0 0
    %773 = vmatpush1.bf16.msra.mxu0 %v274
    %774 = vmatprep.subr.bf16.mxu0 0
    %775 = vmatpush2.bf16.msra.mxu0 0
    %776 = vmatprep.subr.bf16.mxu0 0
    %777 = vmatpush2.bf16.msra.mxu0 0
    %778 = vmatprep.subr.bf16.mxu0 0
    %779 = vmatpush2.bf16.msra.mxu0 0
    %780 = vmatprep.subr.bf16.mxu0 0
    %781 = vmatpush2.bf16.msra.mxu0 0
    %782 = vmatprep.subr.bf16.mxu0 0
    %783 = vmatpush2.bf16.msra.mxu0 0
    %784 = vmatprep.subr.bf16.mxu0 0
    %785 = vmatpush2.bf16.msra.mxu0 0
    %786 = vmatprep.subr.bf16.mxu0 0
    %787 = vmatpush2.bf16.msra.mxu0 0
    %788 = vmatprep.subr.bf16.mxu0 0
    %789 = vmatpush2.bf16.msra.mxu0 0
    %790 = vmatprep.mubr.bf16.mxu0 0
    %791 = vmatmul.mubr.bf16.gmra.mxu0 %v756
    %v792 = vpop.f32.mrf.mxu0
    %v793 = vadd.f32 %v748, %v792
    %v794 = vpop.f32.mrf.mxu0
    %v795 = vpop.f32.mrf.mxu0
    %v796 = vadd.f32 %v751, %v795
    %v797 = vpop.f32.mrf.mxu0
    %798 = vdwg.mxu0
    %v799 = vld [vmem:[%s696] sm:$0xe]
    %v801 = vunpack.c.l.b16 %v799
    %v802 = vpack.c.b16 %v703, %v801
    %v803 = vrot.slane %v802, 1
    %805 = vmatprep.subr.bf16.mxu0 0
    %806 = vmatpush1.bf16.msra.mxu0 %v393
    %807 = vmatprep.subr.bf16.mxu0 0
    %808 = vmatpush1.bf16.msra.mxu0 %v392
    %809 = vmatprep.subr.bf16.mxu0 0
    %810 = vmatpush1.bf16.msra.mxu0 %v391
    %811 = vmatprep.subr.bf16.mxu0 0
    %812 = vmatpush1.bf16.msra.mxu0 %v390
    %813 = vmatprep.subr.bf16.mxu0 0
    %814 = vmatpush1.bf16.msra.mxu0 %v389
    %815 = vmatprep.subr.bf16.mxu0 0
    %816 = vmatpush1.bf16.msra.mxu0 %v388
    %817 = vmatprep.subr.bf16.mxu0 0
    %818 = vmatpush1.bf16.msra.mxu0 %v387
    %819 = vmatprep.subr.bf16.mxu0 0
    %820 = vmatpush1.bf16.msra.mxu0 %v386
    %821 = vmatprep.subr.bf16.mxu0 0
    %822 = vmatpush2.bf16.msra.mxu0 0
    %823 = vmatprep.subr.bf16.mxu0 0
    %824 = vmatpush2.bf16.msra.mxu0 0
    %825 = vmatprep.subr.bf16.mxu0 0
    %826 = vmatpush2.bf16.msra.mxu0 0
    %827 = vmatprep.subr.bf16.mxu0 0
    %828 = vmatpush2.bf16.msra.mxu0 0
    %829 = vmatprep.subr.bf16.mxu0 0
    %830 = vmatpush2.bf16.msra.mxu0 0
    %831 = vmatprep.subr.bf16.mxu0 0
    %832 = vmatpush2.bf16.msra.mxu0 0
    %833 = vmatprep.subr.bf16.mxu0 0
    %834 = vmatpush2.bf16.msra.mxu0 0
    %835 = vmatprep.subr.bf16.mxu0 0
    %836 = vmatpush2.bf16.msra.mxu0 0
    %837 = vmatprep.mubr.bf16.mxu0 0
    %838 = vmatmul.mubr.bf16.gmra.mxu0 %v803
    %v839 = vpop.f32.mrf.mxu0
    %v840 = vadd.f32 0.0, %v839
    %v841 = vpop.f32.mrf.mxu0
    %v842 = vpop.f32.mrf.mxu0
    %v843 = vadd.f32 0.0, %v842
    %v844 = vpop.f32.mrf.mxu0
    %845 = vdwg.mxu0
    %v846 = vadd.f32 %v793, %v840
    %v847 = vadd.f32 %v796, %v843
    %v848 = vld [vmem:[%s696] sm:$0xe]
    %v849 = vld [vmem:[%s696 + $0x4] sm:$0xf]
    %v850 = vld [vmem:[%s696 + $0x8] sm:$0x1]
    %v854 = vunpack.c.l.b16 %v848
    %v855 = vunpack.c.l.b16 %v849
    %v856 = vunpack.c.l.b16 %v850
    %v857 = vpack.c.b16 %v855, %v854
    %v858 = vpack.c.b16 %v856, %v856
    %v860 = vshrl.u32 %v857, 16
    %v862 = vrot.slane %v860, 1
    %v863 = vshll.u32 %v857, 16
    %v865 = vrot.slane %v863, 2
    %v866 = vor.u32 %v862, %v865
    %v868 = vshll.u32 %v858, 16
    %v870 = vrot.slane %v868, 2
    %v871 = vsel %vm473, %v866, %v870
    %873 = vmatprep.subr.bf16.mxu0 0
    %874 = vmatpush1.bf16.msra.mxu0 %v527
    %875 = vmatprep.subr.bf16.mxu0 0
    %876 = vmatpush1.bf16.msra.mxu0 %v526
    %877 = vmatprep.subr.bf16.mxu0 0
    %878 = vmatpush1.bf16.msra.mxu0 %v525
    %879 = vmatprep.subr.bf16.mxu0 0
    %880 = vmatpush1.bf16.msra.mxu0 %v524
    %881 = vmatprep.subr.bf16.mxu0 0
    %882 = vmatpush1.bf16.msra.mxu0 %v523
    %883 = vmatprep.subr.bf16.mxu0 0
    %884 = vmatpush1.bf16.msra.mxu0 %v522
    %885 = vmatprep.subr.bf16.mxu0 0
    %886 = vmatpush1.bf16.msra.mxu0 %v521
    %887 = vmatprep.subr.bf16.mxu0 0
    %888 = vmatpush1.bf16.msra.mxu0 %v520
    %889 = vmatprep.subr.bf16.mxu0 0
    %890 = vmatpush2.bf16.msra.mxu0 0
    %891 = vmatprep.subr.bf16.mxu0 0
    %892 = vmatpush2.bf16.msra.mxu0 0
    %893 = vmatprep.subr.bf16.mxu0 0
    %894 = vmatpush2.bf16.msra.mxu0 0
    %895 = vmatprep.subr.bf16.mxu0 0
    %896 = vmatpush2.bf16.msra.mxu0 0
    %897 = vmatprep.subr.bf16.mxu0 0
    %898 = vmatpush2.bf16.msra.mxu0 0
    %899 = vmatprep.subr.bf16.mxu0 0
    %900 = vmatpush2.bf16.msra.mxu0 0
    %901 = vmatprep.subr.bf16.mxu0 0
    %902 = vmatpush2.bf16.msra.mxu0 0
    %903 = vmatprep.subr.bf16.mxu0 0
    %904 = vmatpush2.bf16.msra.mxu0 0
    %905 = vmatprep.mubr.bf16.mxu0 0
    %906 = vmatmul.mubr.bf16.gmra.mxu0 %v871
    %v907 = vpop.f32.mrf.mxu0
    %v908 = vadd.f32 0.0, %v907
    %v909 = vpop.f32.mrf.mxu0
    %v910 = vpop.f32.mrf.mxu0
    %v911 = vadd.f32 0.0, %v910
    %v912 = vpop.f32.mrf.mxu0
    %913 = vdwg.mxu0
    %v914 = vadd.f32 %v846, %v908
    %v915 = vadd.f32 %v847, %v911
    %v916 = vld [vmem:[%s696] sm:$0xc]
    %v918 = vunpack.c.l.b16 %v916
    %v919 = vpack.c.b16 %v855, %v918
    %v920 = vrot.slane %v919, 2
    %v921 = vrot.slane %v858, 2
    %v922 = vsel %vm600, %v920, %v921
    %924 = vmatprep.subr.bf16.mxu0 0
    %925 = vmatpush1.bf16.msra.mxu0 %v644
    %926 = vmatprep.subr.bf16.mxu0 0
    %927 = vmatpush1.bf16.msra.mxu0 %v643
    %928 = vmatprep.subr.bf16.mxu0 0
    %929 = vmatpush1.bf16.msra.mxu0 %v642
    %930 = vmatprep.subr.bf16.mxu0 0
    %931 = vmatpush1.bf16.msra.mxu0 %v641
    %932 = vmatprep.subr.bf16.mxu0 0
    %933 = vmatpush1.bf16.msra.mxu0 %v640
    %934 = vmatprep.subr.bf16.mxu0 0
    %935 = vmatpush1.bf16.msra.mxu0 %v639
    %936 = vmatprep.subr.bf16.mxu0 0
    %937 = vmatpush1.bf16.msra.mxu0 %v638
    %938 = vmatprep.subr.bf16.mxu0 0
    %939 = vmatpush1.bf16.msra.mxu0 %v637
    %940 = vmatprep.subr.bf16.mxu0 0
    %941 = vmatpush2.bf16.msra.mxu0 0
    %942 = vmatprep.subr.bf16.mxu0 0
    %943 = vmatpush2.bf16.msra.mxu0 0
    %944 = vmatprep.subr.bf16.mxu0 0
    %945 = vmatpush2.bf16.msra.mxu0 0
    %946 = vmatprep.subr.bf16.mxu0 0
    %947 = vmatpush2.bf16.msra.mxu0 0
    %948 = vmatprep.subr.bf16.mxu0 0
    %949 = vmatpush2.bf16.msra.mxu0 0
    %950 = vmatprep.subr.bf16.mxu0 0
    %951 = vmatpush2.bf16.msra.mxu0 0
    %952 = vmatprep.subr.bf16.mxu0 0
    %953 = vmatpush2.bf16.msra.mxu0 0
    %954 = vmatprep.subr.bf16.mxu0 0
    %955 = vmatpush2.bf16.msra.mxu0 0
    %956 = vmatprep.mubr.bf16.mxu0 0
    %957 = vmatmul.mubr.bf16.gmra.mxu0 %v922
    %v958 = vpop.f32.mrf.mxu0
    %v959 = vadd.f32 0.0, %v958
    %v960 = vpop.f32.mrf.mxu0
    %v961 = vpop.f32.mrf.mxu0
    %v962 = vadd.f32 0.0, %v961
    %v963 = vpop.f32.mrf.mxu0
    %964 = vdwg.mxu0
    %v965 = vadd.f32 %v914, %v959
    %v966 = vadd.f32 %v915, %v962
    %vm967 = vcmask 1045504
    %v968 = vsel %vm967, %v695, 0.0
    %v969 = vadd.f32 %v694, %v968
    %v970 = vrot.slane %v969, 4
    %v971 = vadd.f32 %v969, %v970
    %v972 = vrot.slane %v971, 2
    %v973 = vadd.f32 %v971, %v972
    %v974 = vrot.slane %v973, 1
    %v975 = vadd.f32 %v973, %v974
    %v976 = vadd.f32 %v975, 0.0
    %v977 = vsel %vm967, %v966, 0.0
    %v978 = vadd.f32 %v965, %v977
    %v979 = vrot.slane %v978, 4
    %v980 = vadd.f32 %v978, %v979
    %v981 = vrot.slane %v980, 2
    %v982 = vadd.f32 %v980, %v981
    %v983 = vrot.slane %v982, 1
    %v984 = vadd.f32 %v982, %v983
    %v985 = vadd.f32 %v976, %v984
    %v986 = vrcp.pop 28.0
    %v987 = vmul.f32 %v985, %v986
    %v988 = vsub.f32 %v694, %v987
    %v989 = vsub.f32 %v695, %v987
    %v990 = vmul.f32 %v988, %v988
    %v991 = vmul.f32 %v989, %v989
    %v992 = vsel %vm967, %v991, 0.0
    %v993 = vadd.f32 %v990, %v992
    %v994 = vrot.slane %v993, 4
    %v995 = vadd.f32 %v993, %v994
    %v996 = vrot.slane %v995, 2
    %v997 = vadd.f32 %v995, %v996
    %v998 = vrot.slane %v997, 1
    %v999 = vadd.f32 %v997, %v998
    %v1000 = vadd.f32 %v999, 0.0
    %v1001 = vsub.f32 %v965, %v987
    %v1002 = vsub.f32 %v966, %v987
    %v1003 = vmul.f32 %v1001, %v1001
    %v1004 = vmul.f32 %v1002, %v1002
    %v1005 = vsel %vm967, %v1004, 0.0
    %v1006 = vadd.f32 %v1003, %v1005
    %v1007 = vrot.slane %v1006, 4
    %v1008 = vadd.f32 %v1006, %v1007
    %v1009 = vrot.slane %v1008, 2
    %v1010 = vadd.f32 %v1008, %v1009
    %v1011 = vrot.slane %v1010, 1
    %v1012 = vadd.f32 %v1010, %v1011
    %v1013 = vadd.f32 %v1000, %v1012
    %v1014 = vmul.f32 %v1013, %v986
    %v1015 = vadd.f32 %v1014, 1e-05
    %v1016 = vrsqrt.pop %v1015
    %v1017 = vmul.f32 %v988, %v1016
    %v1018 = vmul.f32 %v989, %v1016
    %v1019 = vmax.f32 %v1017, 0.0
    %v1020 = vmax.f32 %v1018, 0.0
    %v1021 = vmul.f32 %v1001, %v1016
    %v1022 = vmul.f32 %v1002, %v1016
    %v1023 = vmax.f32 %v1021, 0.0
    %v1024 = vmax.f32 %v1022, 0.0
    %v1025 = vpack.c.bf16 %v1020, %v1019
    %v1027 = vunpack.c.l.b16 %v1025
    %v1028 = vunpack.c.h.b16 %v1025
    %v1029 = vpack.c.b16 %v1027, %v1027
    %v1030 = vpack.c.b16 %v1028, %v1028
    %vm1031 = vsmask.f32 256
    %vm1032 = vsmask.f32 4368
    %vm1033 = vmor %vm1031, %vm1032
    %v1035 = vshrl.u32 %v1029, 16
    %v1037 = vrot.slane %v1035, 7
    %v1038 = vshll.u32 %v1029, 16
    %v1040 = vor.u32 %v1037, %v1038
    %v1041 = vrot.slane %v1037, 4
    %v1043 = vshrl.u32 %v1030, 16
    %v1045 = vrot.slane %v1043, 7
    %v1046 = vshll.u32 %v1030, 16
    %v1048 = vor.u32 %v1045, %v1046
    %v1049 = vsel %vm1033, %v1041, %v1048
    %vm1052 = vcmask 1043456
    %vm1053 = vsmask.f32 7938
    %vm1054 = vmand %vm1052, %vm1053
    %v1055 = vld [vmem:[#allocation2] sm:$0xf]
    %v1056 = vsel %vm1054, %v1040, %v1055
    %1057 = vst [vmem:[#allocation2] sm:$0xf] %v1056
    %vm1058 = vsmask.f32 3328
    %vm1059 = vmand %vm1052, %vm1058
    %v1060 = vld [vmem:[#allocation2 + $0x4] sm:$0xf]
    %v1061 = vsel %vm1059, %v1049, %v1060
    %1062 = vst [vmem:[#allocation2 + $0x4] sm:$0xf] %v1061
    %v1063 = vpack.c.bf16 %v1024, %v1023
    %v1065 = vunpack.c.l.b16 %v1063
    %v1066 = vunpack.c.h.b16 %v1063
    %v1067 = vpack.c.b16 %v1065, %v1065
    %v1068 = vpack.c.b16 %v1066, %v1066
    %v1070 = vshrl.u32 %v1067, 16
    %v1072 = vrot.slane %v1070, 7
    %v1073 = vshll.u32 %v1067, 16
    %v1075 = vor.u32 %v1072, %v1073
    %v1076 = vrot.slane %v1072, 4
    %v1078 = vshrl.u32 %v1068, 16
    %v1080 = vrot.slane %v1078, 7
    %v1081 = vshll.u32 %v1068, 16
    %v1083 = vor.u32 %v1080, %v1081
    %v1084 = vsel %vm1033, %v1076, %v1083
    %s1087 = scalar_lea.vmem [#allocation2], 8
    %v1088 = vld [vmem:[%s1087] sm:$0xf]
    %v1089 = vsel %vm1054, %v1075, %v1088
    %1090 = vst [vmem:[%s1087] sm:$0xf] %v1089
    %v1091 = vld [vmem:[%s1087 + $0x4] sm:$0xf]
    %v1092 = vsel %vm1059, %v1084, %v1091
    %1093 = vst [vmem:[%s1087 + $0x4] sm:$0xf] %v1092
    %v1094 = vld [vmem:[#allocation2] sm:$0xf]
    %v1095 = vld [vmem:[#allocation2 + $0x4] sm:$0x3]
    %v1096 = vld [vmem:[#allocation7] sm:$0xf]
    %v1097 = vld [vmem:[#allocation7 + $0x4] sm:$0xf]
    %v1098 = vld [vmem:[#allocation7 + $0x8] sm:$0xf]
    %v1099 = vld [vmem:[#allocation7 + $0xc] sm:$0xf]
    %v1100 = vld [vmem:[#allocation7 + $0x10] sm:$0xf]
    %v1101 = vld [vmem:[#allocation7 + $0x14] sm:$0xf]
    %v1102 = vld [vmem:[#allocation7 + $0x18] sm:$0xf]
    %v1103 = vld [vmem:[#allocation7 + $0x1c] sm:$0xf]
    %v1104 = vld [vmem:[#allocation7 + $0x20] sm:$0xf]
    %v1105 = vld [vmem:[#allocation7 + $0x24] sm:$0xf]
    %v1106 = vld [vmem:[#allocation7 + $0x28] sm:$0xf]
    %v1107 = vld [vmem:[#allocation7 + $0x2c] sm:$0xf]
    %v1108 = vld [vmem:[#allocation7 + $0x30] sm:$0xf]
    %v1109 = vld [vmem:[#allocation7 + $0x34] sm:$0xf]
    %v1110 = vld [vmem:[#allocation7 + $0x38] sm:$0xf]
    %v1111 = vld [vmem:[#allocation7 + $0x3c] sm:$0xf]
    %v1112 = vld [vmem:[#allocation2 + $0x4] sm:$0x7]
    %s1113 = scalar_lea.vmem [#allocation7], 64
    %v1114 = vld [vmem:[%s1113] sm:$0xf]
    %v1115 = vld [vmem:[%s1113 + $0x4] sm:$0xf]
    %v1116 = vld [vmem:[%s1113 + $0x8] sm:$0xf]
    %v1117 = vld [vmem:[%s1113 + $0xc] sm:$0xf]
    %v1118 = vld [vmem:[%s1113 + $0x10] sm:$0xf]
    %v1119 = vld [vmem:[%s1113 + $0x14] sm:$0xf]
    %v1120 = vld [vmem:[%s1113 + $0x18] sm:$0xf]
    %v1121 = vld [vmem:[%s1113 + $0x1c] sm:$0xf]
    %v1122 = vld [vmem:[%s1113 + $0x20] sm:$0xf]
    %v1123 = vld [vmem:[%s1113 + $0x24] sm:$0xf]
    %v1124 = vld [vmem:[%s1113 + $0x28] sm:$0xf]
    %v1125 = vld [vmem:[%s1113 + $0x2c] sm:$0xf]
    %v1126 = vld [vmem:[%s1113 + $0x30] sm:$0xf]
    %v1127 = vld [vmem:[%s1113 + $0x34] sm:$0xf]
    %v1128 = vld [vmem:[%s1113 + $0x38] sm:$0xf]
    %v1129 = vld [vmem:[%s1113 + $0x3c] sm:$0xf]
    %v1132 = vunpack.c.l.b16 %v1094
    %v1133 = vunpack.c.l.b16 %v1112
    %v1134 = vpack.c.b16 %v1133, %v1132
    %v1136 = vshrl.u32 %v1134, 16
    %v1138 = vshll.u32 %v1134, 16
    %v1140 = vrot.slane %v1138, 1
    %v1141 = vor.u32 %v1136, %v1140
    %v1159 = vunpack.c.l.b16 %v1114
    %v1160 = vunpack.c.l.b16 %v1115
    %v1161 = vunpack.c.l.b16 %v1116
    %v1162 = vunpack.c.l.b16 %v1117
    %v1163 = vunpack.c.l.b16 %v1118
    %v1164 = vunpack.c.l.b16 %v1119
    %v1165 = vunpack.c.l.b16 %v1120
    %v1166 = vunpack.c.l.b16 %v1121
    %v1167 = vunpack.c.l.b16 %v1122
    %v1168 = vunpack.c.l.b16 %v1123
    %v1169 = vunpack.c.l.b16 %v1124
    %v1170 = vunpack.c.l.b16 %v1125
    %v1171 = vunpack.c.l.b16 %v1126
    %v1172 = vunpack.c.l.b16 %v1127
    %v1173 = vunpack.c.l.b16 %v1128
    %v1174 = vunpack.c.l.b16 %v1129
    %v1175 = vpack.c.b16 %v1160, %v1159
    %v1176 = vpack.c.b16 %v1162, %v1161
    %v1177 = vpack.c.b16 %v1164, %v1163
    %v1178 = vpack.c.b16 %v1166, %v1165
    %v1179 = vpack.c.b16 %v1168, %v1167
    %v1180 = vpack.c.b16 %v1170, %v1169
    %v1181 = vpack.c.b16 %v1172, %v1171
    %v1182 = vpack.c.b16 %v1174, %v1173
    %1191 = vmatprep.subr.bf16.mxu0 0
    %1192 = vmatpush1.bf16.msra.mxu0 %v1182
    %1193 = vmatprep.subr.bf16.mxu0 0
    %1194 = vmatpush1.bf16.msra.mxu0 %v1181
    %1195 = vmatprep.subr.bf16.mxu0 0
    %1196 = vmatpush1.bf16.msra.mxu0 %v1180
    %1197 = vmatprep.subr.bf16.mxu0 0
    %1198 = vmatpush1.bf16.msra.mxu0 %v1179
    %1199 = vmatprep.subr.bf16.mxu0 0
    %1200 = vmatpush1.bf16.msra.mxu0 %v1178
    %1201 = vmatprep.subr.bf16.mxu0 0
    %1202 = vmatpush1.bf16.msra.mxu0 %v1177
    %1203 = vmatprep.subr.bf16.mxu0 0
    %1204 = vmatpush1.bf16.msra.mxu0 %v1176
    %1205 = vmatprep.subr.bf16.mxu0 0
    %1206 = vmatpush1.bf16.msra.mxu0 %v1175
    %1207 = vmatprep.subr.bf16.mxu0 0
    %1208 = vmatpush2.bf16.msra.mxu0 0
    %1209 = vmatprep.subr.bf16.mxu0 0
    %1210 = vmatpush2.bf16.msra.mxu0 0
    %1211 = vmatprep.subr.bf16.mxu0 0
    %1212 = vmatpush2.bf16.msra.mxu0 0
    %1213 = vmatprep.subr.bf16.mxu0 0
    %1214 = vmatpush2.bf16.msra.mxu0 0
    %1215 = vmatprep.subr.bf16.mxu0 0
    %1216 = vmatpush2.bf16.msra.mxu0 0
    %1217 = vmatprep.subr.bf16.mxu0 0
    %1218 = vmatpush2.bf16.msra.mxu0 0
    %1219 = vmatprep.subr.bf16.mxu0 0
    %1220 = vmatpush2.bf16.msra.mxu0 0
    %1221 = vmatprep.subr.bf16.mxu0 0
    %1222 = vmatpush2.bf16.msra.mxu0 0
    %1223 = vmatprep.mubr.bf16.mxu0 0
    %1224 = vmatmul.mubr.bf16.gmra.mxu0 %v1141
    %v1225 = vpop.f32.mrf.mxu0
    %v1226 = vadd.f32 0.0, %v1225
    %v1227 = vpop.f32.mrf.mxu0
    %v1228 = vpop.f32.mrf.mxu0
    %v1229 = vadd.f32 0.0, %v1228
    %v1230 = vpop.f32.mrf.mxu0
    %1231 = vdwg.mxu0
    %v1233 = vunpack.c.l.b16 %v1095
    %v1234 = vpack.c.b16 %v1233, %v1132
    %v1252 = vunpack.c.l.b16 %v1096
    %v1253 = vunpack.c.l.b16 %v1097
    %v1254 = vunpack.c.l.b16 %v1098
    %v1255 = vunpack.c.l.b16 %v1099
    %v1256 = vunpack.c.l.b16 %v1100
    %v1257 = vunpack.c.l.b16 %v1101
    %v1258 = vunpack.c.l.b16 %v1102
    %v1259 = vunpack.c.l.b16 %v1103
    %v1260 = vunpack.c.l.b16 %v1104
    %v1261 = vunpack.c.l.b16 %v1105
    %v1262 = vunpack.c.l.b16 %v1106
    %v1263 = vunpack.c.l.b16 %v1107
    %v1264 = vunpack.c.l.b16 %v1108
    %v1265 = vunpack.c.l.b16 %v1109
    %v1266 = vunpack.c.l.b16 %v1110
    %v1267 = vunpack.c.l.b16 %v1111
    %v1268 = vpack.c.b16 %v1253, %v1252
    %v1269 = vpack.c.b16 %v1255, %v1254
    %v1270 = vpack.c.b16 %v1257, %v1256
    %v1271 = vpack.c.b16 %v1259, %v1258
    %v1272 = vpack.c.b16 %v1261, %v1260
    %v1273 = vpack.c.b16 %v1263, %v1262
    %v1274 = vpack.c.b16 %v1265, %v1264
    %v1275 = vpack.c.b16 %v1267, %v1266
    %1284 = vmatprep.subr.bf16.mxu0 0
    %1285 = vmatpush1.bf16.msra.mxu0 %v1275
    %1286 = vmatprep.subr.bf16.mxu0 0
    %1287 = vmatpush1.bf16.msra.mxu0 %v1274
    %1288 = vmatprep.subr.bf16.mxu0 0
    %1289 = vmatpush1.bf16.msra.mxu0 %v1273
    %1290 = vmatprep.subr.bf16.mxu0 0
    %1291 = vmatpush1.bf16.msra.mxu0 %v1272
    %1292 = vmatprep.subr.bf16.mxu0 0
    %1293 = vmatpush1.bf16.msra.mxu0 %v1271
    %1294 = vmatprep.subr.bf16.mxu0 0
    %1295 = vmatpush1.bf16.msra.mxu0 %v1270
    %1296 = vmatprep.subr.bf16.mxu0 0
    %1297 = vmatpush1.bf16.msra.mxu0 %v1269
    %1298 = vmatprep.subr.bf16.mxu0 0
    %1299 = vmatpush1.bf16.msra.mxu0 %v1268
    %1300 = vmatprep.subr.bf16.mxu0 0
    %1301 = vmatpush2.bf16.msra.mxu0 0
    %1302 = vmatprep.subr.bf16.mxu0 0
    %1303 = vmatpush2.bf16.msra.mxu0 0
    %1304 = vmatprep.subr.bf16.mxu0 0
    %1305 = vmatpush2.bf16.msra.mxu0 0
    %1306 = vmatprep.subr.bf16.mxu0 0
    %1307 = vmatpush2.bf16.msra.mxu0 0
    %1308 = vmatprep.subr.bf16.mxu0 0
    %1309 = vmatpush2.bf16.msra.mxu0 0
    %1310 = vmatprep.subr.bf16.mxu0 0
    %1311 = vmatpush2.bf16.msra.mxu0 0
    %1312 = vmatprep.subr.bf16.mxu0 0
    %1313 = vmatpush2.bf16.msra.mxu0 0
    %1314 = vmatprep.subr.bf16.mxu0 0
    %1315 = vmatpush2.bf16.msra.mxu0 0
    %1316 = vmatprep.mubr.bf16.mxu0 0
    %1317 = vmatmul.mubr.bf16.gmra.mxu0 %v1234
    %v1318 = vpop.f32.mrf.mxu0
    %v1319 = vadd.f32 %v1226, %v1318
    %v1320 = vpop.f32.mrf.mxu0
    %v1321 = vpop.f32.mrf.mxu0
    %v1322 = vadd.f32 %v1229, %v1321
    %v1323 = vpop.f32.mrf.mxu0
    %1324 = vdwg.mxu0
    %v1325 = vld [vmem:[#allocation2] sm:$0xe]
    %s1326 = scalar_lea.vmem [#allocation7], 128
    %v1327 = vld [vmem:[%s1326] sm:$0xf]
    %v1328 = vld [vmem:[%s1326 + $0x4] sm:$0xf]
    %v1329 = vld [vmem:[%s1326 + $0x8] sm:$0xf]
    %v1330 = vld [vmem:[%s1326 + $0xc] sm:$0xf]
    %v1331 = vld [vmem:[%s1326 + $0x10] sm:$0xf]
    %v1332 = vld [vmem:[%s1326 + $0x14] sm:$0xf]
    %v1333 = vld [vmem:[%s1326 + $0x18] sm:$0xf]
    %v1334 = vld [vmem:[%s1326 + $0x1c] sm:$0xf]
    %v1335 = vld [vmem:[%s1326 + $0x20] sm:$0xf]
    %v1336 = vld [vmem:[%s1326 + $0x24] sm:$0xf]
    %v1337 = vld [vmem:[%s1326 + $0x28] sm:$0xf]
    %v1338 = vld [vmem:[%s1326 + $0x2c] sm:$0xf]
    %v1339 = vld [vmem:[%s1326 + $0x30] sm:$0xf]
    %v1340 = vld [vmem:[%s1326 + $0x34] sm:$0xf]
    %v1341 = vld [vmem:[%s1326 + $0x38] sm:$0xf]
    %v1342 = vld [vmem:[%s1326 + $0x3c] sm:$0xf]
    %v1344 = vunpack.c.l.b16 %v1325
    %v1345 = vpack.c.b16 %v1133, %v1344
    %v1346 = vrot.slane %v1345, 1
    %v1364 = vunpack.c.l.b16 %v1327
    %v1365 = vunpack.c.l.b16 %v1328
    %v1366 = vunpack.c.l.b16 %v1329
    %v1367 = vunpack.c.l.b16 %v1330
    %v1368 = vunpack.c.l.b16 %v1331
    %v1369 = vunpack.c.l.b16 %v1332
    %v1370 = vunpack.c.l.b16 %v1333
    %v1371 = vunpack.c.l.b16 %v1334
    %v1372 = vunpack.c.l.b16 %v1335
    %v1373 = vunpack.c.l.b16 %v1336
    %v1374 = vunpack.c.l.b16 %v1337
    %v1375 = vunpack.c.l.b16 %v1338
    %v1376 = vunpack.c.l.b16 %v1339
    %v1377 = vunpack.c.l.b16 %v1340
    %v1378 = vunpack.c.l.b16 %v1341
    %v1379 = vunpack.c.l.b16 %v1342
    %v1380 = vpack.c.b16 %v1365, %v1364
    %v1381 = vpack.c.b16 %v1367, %v1366
    %v1382 = vpack.c.b16 %v1369, %v1368
    %v1383 = vpack.c.b16 %v1371, %v1370
    %v1384 = vpack.c.b16 %v1373, %v1372
    %v1385 = vpack.c.b16 %v1375, %v1374
    %v1386 = vpack.c.b16 %v1377, %v1376
    %v1387 = vpack.c.b16 %v1379, %v1378
    %1396 = vmatprep.subr.bf16.mxu0 0
    %1397 = vmatpush1.bf16.msra.mxu0 %v1387
    %1398 = vmatprep.subr.bf16.mxu0 0
    %1399 = vmatpush1.bf16.msra.mxu0 %v1386
    %1400 = vmatprep.subr.bf16.mxu0 0
    %1401 = vmatpush1.bf16.msra.mxu0 %v1385
    %1402 = vmatprep.subr.bf16.mxu0 0
    %1403 = vmatpush1.bf16.msra.mxu0 %v1384
    %1404 = vmatprep.subr.bf16.mxu0 0
    %1405 = vmatpush1.bf16.msra.mxu0 %v1383
    %1406 = vmatprep.subr.bf16.mxu0 0
    %1407 = vmatpush1.bf16.msra.mxu0 %v1382
    %1408 = vmatprep.subr.bf16.mxu0 0
    %1409 = vmatpush1.bf16.msra.mxu0 %v1381
    %1410 = vmatprep.subr.bf16.mxu0 0
    %1411 = vmatpush1.bf16.msra.mxu0 %v1380
    %1412 = vmatprep.subr.bf16.mxu0 0
    %1413 = vmatpush2.bf16.msra.mxu0 0
    %1414 = vmatprep.subr.bf16.mxu0 0
    %1415 = vmatpush2.bf16.msra.mxu0 0
    %1416 = vmatprep.subr.bf16.mxu0 0
    %1417 = vmatpush2.bf16.msra.mxu0 0
    %1418 = vmatprep.subr.bf16.mxu0 0
    %1419 = vmatpush2.bf16.msra.mxu0 0
    %1420 = vmatprep.subr.bf16.mxu0 0
    %1421 = vmatpush2.bf16.msra.mxu0 0
    %1422 = vmatprep.subr.bf16.mxu0 0
    %1423 = vmatpush2.bf16.msra.mxu0 0
    %1424 = vmatprep.subr.bf16.mxu0 0
    %1425 = vmatpush2.bf16.msra.mxu0 0
    %1426 = vmatprep.subr.bf16.mxu0 0
    %1427 = vmatpush2.bf16.msra.mxu0 0
    %1428 = vmatprep.mubr.bf16.mxu0 0
    %1429 = vmatmul.mubr.bf16.gmra.mxu0 %v1346
    %v1430 = vpop.f32.mrf.mxu0
    %v1431 = vadd.f32 0.0, %v1430
    %v1432 = vpop.f32.mrf.mxu0
    %v1433 = vpop.f32.mrf.mxu0
    %v1434 = vadd.f32 0.0, %v1433
    %v1435 = vpop.f32.mrf.mxu0
    %1436 = vdwg.mxu0
    %v1437 = vadd.f32 %v1319, %v1431
    %v1438 = vadd.f32 %v1322, %v1434
    %v1439 = vld [vmem:[#allocation2 + $0x4] sm:$0xf]
    %s1440 = scalar_lea.vmem [#allocation7], 192
    %v1441 = vld [vmem:[%s1440] sm:$0xf]
    %v1442 = vld [vmem:[%s1440 + $0x4] sm:$0xf]
    %v1443 = vld [vmem:[%s1440 + $0x8] sm:$0xf]
    %v1444 = vld [vmem:[%s1440 + $0xc] sm:$0xf]
    %v1445 = vld [vmem:[%s1440 + $0x10] sm:$0xf]
    %v1446 = vld [vmem:[%s1440 + $0x14] sm:$0xf]
    %v1447 = vld [vmem:[%s1440 + $0x18] sm:$0xf]
    %v1448 = vld [vmem:[%s1440 + $0x1c] sm:$0xf]
    %v1449 = vld [vmem:[%s1440 + $0x20] sm:$0xf]
    %v1450 = vld [vmem:[%s1440 + $0x24] sm:$0xf]
    %v1451 = vld [vmem:[%s1440 + $0x28] sm:$0xf]
    %v1452 = vld [vmem:[%s1440 + $0x2c] sm:$0xf]
    %v1453 = vld [vmem:[%s1440 + $0x30] sm:$0xf]
    %v1454 = vld [vmem:[%s1440 + $0x34] sm:$0xf]
    %v1455 = vld [vmem:[%s1440 + $0x38] sm:$0xf]
    %v1456 = vld [vmem:[%s1440 + $0x3c] sm:$0xf]
    %v1458 = vunpack.c.l.b16 %v1439
    %v1459 = vpack.c.b16 %v1458, %v1344
    %v1461 = vshrl.u32 %v1459, 16
    %v1463 = vrot.slane %v1461, 1
    %v1464 = vshll.u32 %v1459, 16
    %v1466 = vrot.slane %v1464, 2
    %v1467 = vor.u32 %v1463, %v1466
    %v1485 = vunpack.c.l.b16 %v1441
    %v1486 = vunpack.c.l.b16 %v1442
    %v1487 = vunpack.c.l.b16 %v1443
    %v1488 = vunpack.c.l.b16 %v1444
    %v1489 = vunpack.c.l.b16 %v1445
    %v1490 = vunpack.c.l.b16 %v1446
    %v1491 = vunpack.c.l.b16 %v1447
    %v1492 = vunpack.c.l.b16 %v1448
    %v1493 = vunpack.c.l.b16 %v1449
    %v1494 = vunpack.c.l.b16 %v1450
    %v1495 = vunpack.c.l.b16 %v1451
    %v1496 = vunpack.c.l.b16 %v1452
    %v1497 = vunpack.c.l.b16 %v1453
    %v1498 = vunpack.c.l.b16 %v1454
    %v1499 = vunpack.c.l.b16 %v1455
    %v1500 = vunpack.c.l.b16 %v1456
    %v1501 = vpack.c.b16 %v1486, %v1485
    %v1502 = vpack.c.b16 %v1488, %v1487
    %v1503 = vpack.c.b16 %v1490, %v1489
    %v1504 = vpack.c.b16 %v1492, %v1491
    %v1505 = vpack.c.b16 %v1494, %v1493
    %v1506 = vpack.c.b16 %v1496, %v1495
    %v1507 = vpack.c.b16 %v1498, %v1497
    %v1508 = vpack.c.b16 %v1500, %v1499
    %1517 = vmatprep.subr.bf16.mxu0 0
    %1518 = vmatpush1.bf16.msra.mxu0 %v1508
    %1519 = vmatprep.subr.bf16.mxu0 0
    %1520 = vmatpush1.bf16.msra.mxu0 %v1507
    %1521 = vmatprep.subr.bf16.mxu0 0
    %1522 = vmatpush1.bf16.msra.mxu0 %v1506
    %1523 = vmatprep.subr.bf16.mxu0 0
    %1524 = vmatpush1.bf16.msra.mxu0 %v1505
    %1525 = vmatprep.subr.bf16.mxu0 0
    %1526 = vmatpush1.bf16.msra.mxu0 %v1504
    %1527 = vmatprep.subr.bf16.mxu0 0
    %1528 = vmatpush1.bf16.msra.mxu0 %v1503
    %1529 = vmatprep.subr.bf16.mxu0 0
    %1530 = vmatpush1.bf16.msra.mxu0 %v1502
    %1531 = vmatprep.subr.bf16.mxu0 0
    %1532 = vmatpush1.bf16.msra.mxu0 %v1501
    %1533 = vmatprep.subr.bf16.mxu0 0
    %1534 = vmatpush2.bf16.msra.mxu0 0
    %1535 = vmatprep.subr.bf16.mxu0 0
    %1536 = vmatpush2.bf16.msra.mxu0 0
    %1537 = vmatprep.subr.bf16.mxu0 0
    %1538 = vmatpush2.bf16.msra.mxu0 0
    %1539 = vmatprep.subr.bf16.mxu0 0
    %1540 = vmatpush2.bf16.msra.mxu0 0
    %1541 = vmatprep.subr.bf16.mxu0 0
    %1542 = vmatpush2.bf16.msra.mxu0 0
    %1543 = vmatprep.subr.bf16.mxu0 0
    %1544 = vmatpush2.bf16.msra.mxu0 0
    %1545 = vmatprep.subr.bf16.mxu0 0
    %1546 = vmatpush2.bf16.msra.mxu0 0
    %1547 = vmatprep.subr.bf16.mxu0 0
    %1548 = vmatpush2.bf16.msra.mxu0 0
    %1549 = vmatprep.mubr.bf16.mxu0 0
    %1550 = vmatmul.mubr.bf16.gmra.mxu0 %v1467
    %v1551 = vpop.f32.mrf.mxu0
    %v1552 = vadd.f32 0.0, %v1551
    %v1553 = vpop.f32.mrf.mxu0
    %v1554 = vpop.f32.mrf.mxu0
    %v1555 = vadd.f32 0.0, %v1554
    %v1556 = vpop.f32.mrf.mxu0
    %1557 = vdwg.mxu0
    %v1558 = vadd.f32 %v1437, %v1552
    %v1559 = vadd.f32 %v1438, %v1555
    %v1560 = vld [vmem:[#allocation2] sm:$0xc]
    %s1561 = scalar_lea.vmem [#allocation7], 256
    %v1562 = vld [vmem:[%s1561] sm:$0xf]
    %v1563 = vld [vmem:[%s1561 + $0x4] sm:$0xf]
    %v1564 = vld [vmem:[%s1561 + $0x8] sm:$0xf]
    %v1565 = vld [vmem:[%s1561 + $0xc] sm:$0xf]
    %v1566 = vld [vmem:[%s1561 + $0x10] sm:$0xf]
    %v1567 = vld [vmem:[%s1561 + $0x14] sm:$0xf]
    %v1568 = vld [vmem:[%s1561 + $0x18] sm:$0xf]
    %v1569 = vld [vmem:[%s1561 + $0x1c] sm:$0xf]
    %v1570 = vld [vmem:[%s1561 + $0x20] sm:$0xf]
    %v1571 = vld [vmem:[%s1561 + $0x24] sm:$0xf]
    %v1572 = vld [vmem:[%s1561 + $0x28] sm:$0xf]
    %v1573 = vld [vmem:[%s1561 + $0x2c] sm:$0xf]
    %v1574 = vld [vmem:[%s1561 + $0x30] sm:$0xf]
    %v1575 = vld [vmem:[%s1561 + $0x34] sm:$0xf]
    %v1576 = vld [vmem:[%s1561 + $0x38] sm:$0xf]
    %v1577 = vld [vmem:[%s1561 + $0x3c] sm:$0xf]
    %v1579 = vunpack.c.l.b16 %v1560
    %v1580 = vpack.c.b16 %v1458, %v1579
    %v1581 = vrot.slane %v1580, 2
    %v1599 = vunpack.c.l.b16 %v1562
    %v1600 = vunpack.c.l.b16 %v1563
    %v1601 = vunpack.c.l.b16 %v1564
    %v1602 = vunpack.c.l.b16 %v1565
    %v1603 = vunpack.c.l.b16 %v1566
    %v1604 = vunpack.c.l.b16 %v1567
    %v1605 = vunpack.c.l.b16 %v1568
    %v1606 = vunpack.c.l.b16 %v1569
    %v1607 = vunpack.c.l.b16 %v1570
    %v1608 = vunpack.c.l.b16 %v1571
    %v1609 = vunpack.c.l.b16 %v1572
    %v1610 = vunpack.c.l.b16 %v1573
    %v1611 = vunpack.c.l.b16 %v1574
    %v1612 = vunpack.c.l.b16 %v1575
    %v1613 = vunpack.c.l.b16 %v1576
    %v1614 = vunpack.c.l.b16 %v1577
    %v1615 = vpack.c.b16 %v1600, %v1599
    %v1616 = vpack.c.b16 %v1602, %v1601
    %v1617 = vpack.c.b16 %v1604, %v1603
    %v1618 = vpack.c.b16 %v1606, %v1605
    %v1619 = vpack.c.b16 %v1608, %v1607
    %v1620 = vpack.c.b16 %v1610, %v1609
    %v1621 = vpack.c.b16 %v1612, %v1611
    %v1622 = vpack.c.b16 %v1614, %v1613
    %1631 = vmatprep.subr.bf16.mxu0 0
    %1632 = vmatpush1.bf16.msra.mxu0 %v1622
    %1633 = vmatprep.subr.bf16.mxu0 0
    %1634 = vmatpush1.bf16.msra.mxu0 %v1621
    %1635 = vmatprep.subr.bf16.mxu0 0
    %1636 = vmatpush1.bf16.msra.mxu0 %v1620
    %1637 = vmatprep.subr.bf16.mxu0 0
    %1638 = vmatpush1.bf16.msra.mxu0 %v1619
    %1639 = vmatprep.subr.bf16.mxu0 0
    %1640 = vmatpush1.bf16.msra.mxu0 %v1618
    %1641 = vmatprep.subr.bf16.mxu0 0
    %1642 = vmatpush1.bf16.msra.mxu0 %v1617
    %1643 = vmatprep.subr.bf16.mxu0 0
    %1644 = vmatpush1.bf16.msra.mxu0 %v1616
    %1645 = vmatprep.subr.bf16.mxu0 0
    %1646 = vmatpush1.bf16.msra.mxu0 %v1615
    %1647 = vmatprep.subr.bf16.mxu0 0
    %1648 = vmatpush2.bf16.msra.mxu0 0
    %1649 = vmatprep.subr.bf16.mxu0 0
    %1650 = vmatpush2.bf16.msra.mxu0 0
    %1651 = vmatprep.subr.bf16.mxu0 0
    %1652 = vmatpush2.bf16.msra.mxu0 0
    %1653 = vmatprep.subr.bf16.mxu0 0
    %1654 = vmatpush2.bf16.msra.mxu0 0
    %1655 = vmatprep.subr.bf16.mxu0 0
    %1656 = vmatpush2.bf16.msra.mxu0 0
    %1657 = vmatprep.subr.bf16.mxu0 0
    %1658 = vmatpush2.bf16.msra.mxu0 0
    %1659 = vmatprep.subr.bf16.mxu0 0
    %1660 = vmatpush2.bf16.msra.mxu0 0
    %1661 = vmatprep.subr.bf16.mxu0 0
    %1662 = vmatpush2.bf16.msra.mxu0 0
    %1663 = vmatprep.mubr.bf16.mxu0 0
    %1664 = vmatmul.mubr.bf16.gmra.mxu0 %v1581
    %v1665 = vpop.f32.mrf.mxu0
    %v1666 = vadd.f32 0.0, %v1665
    %v1667 = vpop.f32.mrf.mxu0
    %v1668 = vpop.f32.mrf.mxu0
    %v1669 = vadd.f32 0.0, %v1668
    %v1670 = vpop.f32.mrf.mxu0
    %1671 = vdwg.mxu0
    %v1672 = vadd.f32 %v1558, %v1666
    %v1673 = vadd.f32 %v1559, %v1669
    %v1674 = vld [vmem:[%s1087] sm:$0xf]
    %v1675 = vld [vmem:[%s1087 + $0x4] sm:$0x3]
    %v1676 = vld [vmem:[%s1087 + $0x4] sm:$0x7]
    %v1679 = vunpack.c.l.b16 %v1674
    %v1680 = vunpack.c.l.b16 %v1676
    %v1681 = vpack.c.b16 %v1680, %v1679
    %v1683 = vshrl.u32 %v1681, 16
    %v1685 = vshll.u32 %v1681, 16
    %v1687 = vrot.slane %v1685, 1
    %v1688 = vor.u32 %v1683, %v1687
    %1690 = vmatprep.subr.bf16.mxu0 0
    %1691 = vmatpush1.bf16.msra.mxu0 %v1182
    %1692 = vmatprep.subr.bf16.mxu0 0
    %1693 = vmatpush1.bf16.msra.mxu0 %v1181
    %1694 = vmatprep.subr.bf16.mxu0 0
    %1695 = vmatpush1.bf16.msra.mxu0 %v1180
    %1696 = vmatprep.subr.bf16.mxu0 0
    %1697 = vmatpush1.bf16.msra.mxu0 %v1179
    %1698 = vmatprep.subr.bf16.mxu0 0
    %1699 = vmatpush1.bf16.msra.mxu0 %v1178
    %1700 = vmatprep.subr.bf16.mxu0 0
    %1701 = vmatpush1.bf16.msra.mxu0 %v1177
    %1702 = vmatprep.subr.bf16.mxu0 0
    %1703 = vmatpush1.bf16.msra.mxu0 %v1176
    %1704 = vmatprep.subr.bf16.mxu0 0
    %1705 = vmatpush1.bf16.msra.mxu0 %v1175
    %1706 = vmatprep.subr.bf16.mxu0 0
    %1707 = vmatpush2.bf16.msra.mxu0 0
    %1708 = vmatprep.subr.bf16.mxu0 0
    %1709 = vmatpush2.bf16.msra.mxu0 0
    %1710 = vmatprep.subr.bf16.mxu0 0
    %1711 = vmatpush2.bf16.msra.mxu0 0
    %1712 = vmatprep.subr.bf16.mxu0 0
    %1713 = vmatpush2.bf16.msra.mxu0 0
    %1714 = vmatprep.subr.bf16.mxu0 0
    %1715 = vmatpush2.bf16.msra.mxu0 0
    %1716 = vmatprep.subr.bf16.mxu0 0
    %1717 = vmatpush2.bf16.msra.mxu0 0
    %1718 = vmatprep.subr.bf16.mxu0 0
    %1719 = vmatpush2.bf16.msra.mxu0 0
    %1720 = vmatprep.subr.bf16.mxu0 0
    %1721 = vmatpush2.bf16.msra.mxu0 0
    %1722 = vmatprep.mubr.bf16.mxu0 0
    %1723 = vmatmul.mubr.bf16.gmra.mxu0 %v1688
    %v1724 = vpop.f32.mrf.mxu0
    %v1725 = vadd.f32 0.0, %v1724
    %v1726 = vpop.f32.mrf.mxu0
    %v1727 = vpop.f32.mrf.mxu0
    %v1728 = vadd.f32 0.0, %v1727
    %v1729 = vpop.f32.mrf.mxu0
    %1730 = vdwg.mxu0
    %v1732 = vunpack.c.l.b16 %v1675
    %v1733 = vpack.c.b16 %v1732, %v1679
    %1735 = vmatprep.subr.bf16.mxu0 0
    %1736 = vmatpush1.bf16.msra.mxu0 %v1275
    %1737 = vmatprep.subr.bf16.mxu0 0
    %1738 = vmatpush1.bf16.msra.mxu0 %v1274
    %1739 = vmatprep.subr.bf16.mxu0 0
    %1740 = vmatpush1.bf16.msra.mxu0 %v1273
    %1741 = vmatprep.subr.bf16.mxu0 0
    %1742 = vmatpush1.bf16.msra.mxu0 %v1272
    %1743 = vmatprep.subr.bf16.mxu0 0
    %1744 = vmatpush1.bf16.msra.mxu0 %v1271
    %1745 = vmatprep.subr.bf16.mxu0 0
    %1746 = vmatpush1.bf16.msra.mxu0 %v1270
    %1747 = vmatprep.subr.bf16.mxu0 0
    %1748 = vmatpush1.bf16.msra.mxu0 %v1269
    %1749 = vmatprep.subr.bf16.mxu0 0
    %1750 = vmatpush1.bf16.msra.mxu0 %v1268
    %1751 = vmatprep.subr.bf16.mxu0 0
    %1752 = vmatpush2.bf16.msra.mxu0 0
    %1753 = vmatprep.subr.bf16.mxu0 0
    %1754 = vmatpush2.bf16.msra.mxu0 0
    %1755 = vmatprep.subr.bf16.mxu0 0
    %1756 = vmatpush2.bf16.msra.mxu0 0
    %1757 = vmatprep.subr.bf16.mxu0 0
    %1758 = vmatpush2.bf16.msra.mxu0 0
    %1759 = vmatprep.subr.bf16.mxu0 0
    %1760 = vmatpush2.bf16.msra.mxu0 0
    %1761 = vmatprep.subr.bf16.mxu0 0
    %1762 = vmatpush2.bf16.msra.mxu0 0
    %1763 = vmatprep.subr.bf16.mxu0 0
    %1764 = vmatpush2.bf16.msra.mxu0 0
    %1765 = vmatprep.subr.bf16.mxu0 0
    %1766 = vmatpush2.bf16.msra.mxu0 0
    %1767 = vmatprep.mubr.bf16.mxu0 0
    %1768 = vmatmul.mubr.bf16.gmra.mxu0 %v1733
    %v1769 = vpop.f32.mrf.mxu0
    %v1770 = vadd.f32 %v1725, %v1769
    %v1771 = vpop.f32.mrf.mxu0
    %v1772 = vpop.f32.mrf.mxu0
    %v1773 = vadd.f32 %v1728, %v1772
    %v1774 = vpop.f32.mrf.mxu0
    %1775 = vdwg.mxu0
    %v1776 = vld [vmem:[%s1087] sm:$0xe]
    %v1778 = vunpack.c.l.b16 %v1776
    %v1779 = vpack.c.b16 %v1680, %v1778
    %v1780 = vrot.slane %v1779, 1
    %1782 = vmatprep.subr.bf16.mxu0 0
    %1783 = vmatpush1.bf16.msra.mxu0 %v1387
    %1784 = vmatprep.subr.bf16.mxu0 0
    %1785 = vmatpush1.bf16.msra.mxu0 %v1386
    %1786 = vmatprep.subr.bf16.mxu0 0
    %1787 = vmatpush1.bf16.msra.mxu0 %v1385
    %1788 = vmatprep.subr.bf16.mxu0 0
    %1789 = vmatpush1.bf16.msra.mxu0 %v1384
    %1790 = vmatprep.subr.bf16.mxu0 0
    %1791 = vmatpush1.bf16.msra.mxu0 %v1383
    %1792 = vmatprep.subr.bf16.mxu0 0
    %1793 = vmatpush1.bf16.msra.mxu0 %v1382
    %1794 = vmatprep.subr.bf16.mxu0 0
    %1795 = vmatpush1.bf16.msra.mxu0 %v1381
    %1796 = vmatprep.subr.bf16.mxu0 0
    %1797 = vmatpush1.bf16.msra.mxu0 %v1380
    %1798 = vmatprep.subr.bf16.mxu0 0
    %1799 = vmatpush2.bf16.msra.mxu0 0
    %1800 = vmatprep.subr.bf16.mxu0 0
    %1801 = vmatpush2.bf16.msra.mxu0 0
    %1802 = vmatprep.subr.bf16.mxu0 0
    %1803 = vmatpush2.bf16.msra.mxu0 0
    %1804 = vmatprep.subr.bf16.mxu0 0
    %1805 = vmatpush2.bf16.msra.mxu0 0
    %1806 = vmatprep.subr.bf16.mxu0 0
    %1807 = vmatpush2.bf16.msra.mxu0 0
    %1808 = vmatprep.subr.bf16.mxu0 0
    %1809 = vmatpush2.bf16.msra.mxu0 0
    %1810 = vmatprep.subr.bf16.mxu0 0
    %1811 = vmatpush2.bf16.msra.mxu0 0
    %1812 = vmatprep.subr.bf16.mxu0 0
    %1813 = vmatpush2.bf16.msra.mxu0 0
    %1814 = vmatprep.mubr.bf16.mxu0 0
    %1815 = vmatmul.mubr.bf16.gmra.mxu0 %v1780
    %v1816 = vpop.f32.mrf.mxu0
    %v1817 = vadd.f32 0.0, %v1816
    %v1818 = vpop.f32.mrf.mxu0
    %v1819 = vpop.f32.mrf.mxu0
    %v1820 = vadd.f32 0.0, %v1819
    %v1821 = vpop.f32.mrf.mxu0
    %1822 = vdwg.mxu0
    %v1823 = vadd.f32 %v1770, %v1817
    %v1824 = vadd.f32 %v1773, %v1820
    %v1825 = vld [vmem:[%s1087 + $0x4] sm:$0xf]
    %v1827 = vunpack.c.l.b16 %v1825
    %v1828 = vpack.c.b16 %v1827, %v1778
    %v1830 = vshrl.u32 %v1828, 16
    %v1832 = vrot.slane %v1830, 1
    %v1833 = vshll.u32 %v1828, 16
    %v1835 = vrot.slane %v1833, 2
    %v1836 = vor.u32 %v1832, %v1835
    %1838 = vmatprep.subr.bf16.mxu0 0
    %1839 = vmatpush1.bf16.msra.mxu0 %v1508
    %1840 = vmatprep.subr.bf16.mxu0 0
    %1841 = vmatpush1.bf16.msra.mxu0 %v1507
    %1842 = vmatprep.subr.bf16.mxu0 0
    %1843 = vmatpush1.bf16.msra.mxu0 %v1506
    %1844 = vmatprep.subr.bf16.mxu0 0
    %1845 = vmatpush1.bf16.msra.mxu0 %v1505
    %1846 = vmatprep.subr.bf16.mxu0 0
    %1847 = vmatpush1.bf16.msra.mxu0 %v1504
    %1848 = vmatprep.subr.bf16.mxu0 0
    %1849 = vmatpush1.bf16.msra.mxu0 %v1503
    %1850 = vmatprep.subr.bf16.mxu0 0
    %1851 = vmatpush1.bf16.msra.mxu0 %v1502
    %1852 = vmatprep.subr.bf16.mxu0 0
    %1853 = vmatpush1.bf16.msra.mxu0 %v1501
    %1854 = vmatprep.subr.bf16.mxu0 0
    %1855 = vmatpush2.bf16.msra.mxu0 0
    %1856 = vmatprep.subr.bf16.mxu0 0
    %1857 = vmatpush2.bf16.msra.mxu0 0
    %1858 = vmatprep.subr.bf16.mxu0 0
    %1859 = vmatpush2.bf16.msra.mxu0 0
    %1860 = vmatprep.subr.bf16.mxu0 0
    %1861 = vmatpush2.bf16.msra.mxu0 0
    %1862 = vmatprep.subr.bf16.mxu0 0
    %1863 = vmatpush2.bf16.msra.mxu0 0
    %1864 = vmatprep.subr.bf16.mxu0 0
    %1865 = vmatpush2.bf16.msra.mxu0 0
    %1866 = vmatprep.subr.bf16.mxu0 0
    %1867 = vmatpush2.bf16.msra.mxu0 0
    %1868 = vmatprep.subr.bf16.mxu0 0
    %1869 = vmatpush2.bf16.msra.mxu0 0
    %1870 = vmatprep.mubr.bf16.mxu0 0
    %1871 = vmatmul.mubr.bf16.gmra.mxu0 %v1836
    %v1872 = vpop.f32.mrf.mxu0
    %v1873 = vadd.f32 0.0, %v1872
    %v1874 = vpop.f32.mrf.mxu0
    %v1875 = vpop.f32.mrf.mxu0
    %v1876 = vadd.f32 0.0, %v1875
    %v1877 = vpop.f32.mrf.mxu0
    %1878 = vdwg.mxu0
    %v1879 = vadd.f32 %v1823, %v1873
    %v1880 = vadd.f32 %v1824, %v1876
    %v1881 = vld [vmem:[%s1087] sm:$0xc]
    %v1883 = vunpack.c.l.b16 %v1881
    %v1884 = vpack.c.b16 %v1827, %v1883
    %v1885 = vrot.slane %v1884, 2
    %1887 = vmatprep.subr.bf16.mxu0 0
    %1888 = vmatpush1.bf16.msra.mxu0 %v1622
    %1889 = vmatprep.subr.bf16.mxu0 0
    %1890 = vmatpush1.bf16.msra.mxu0 %v1621
    %1891 = vmatprep.subr.bf16.mxu0 0
    %1892 = vmatpush1.bf16.msra.mxu0 %v1620
    %1893 = vmatprep.subr.bf16.mxu0 0
    %1894 = vmatpush1.bf16.msra.mxu0 %v1619
    %1895 = vmatprep.subr.bf16.mxu0 0
    %1896 = vmatpush1.bf16.msra.mxu0 %v1618
    %1897 = vmatprep.subr.bf16.mxu0 0
    %1898 = vmatpush1.bf16.msra.mxu0 %v1617
    %1899 = vmatprep.subr.bf16.mxu0 0
    %1900 = vmatpush1.bf16.msra.mxu0 %v1616
    %1901 = vmatprep.subr.bf16.mxu0 0
    %1902 = vmatpush1.bf16.msra.mxu0 %v1615
    %1903 = vmatprep.subr.bf16.mxu0 0
    %1904 = vmatpush2.bf16.msra.mxu0 0
    %1905 = vmatprep.subr.bf16.mxu0 0
    %1906 = vmatpush2.bf16.msra.mxu0 0
    %1907 = vmatprep.subr.bf16.mxu0 0
    %1908 = vmatpush2.bf16.msra.mxu0 0
    %1909 = vmatprep.subr.bf16.mxu0 0
    %1910 = vmatpush2.bf16.msra.mxu0 0
    %1911 = vmatprep.subr.bf16.mxu0 0
    %1912 = vmatpush2.bf16.msra.mxu0 0
    %1913 = vmatprep.subr.bf16.mxu0 0
    %1914 = vmatpush2.bf16.msra.mxu0 0
    %1915 = vmatprep.subr.bf16.mxu0 0
    %1916 = vmatpush2.bf16.msra.mxu0 0
    %1917 = vmatprep.subr.bf16.mxu0 0
    %1918 = vmatpush2.bf16.msra.mxu0 0
    %1919 = vmatprep.mubr.bf16.mxu0 0
    %1920 = vmatmul.mubr.bf16.gmra.mxu0 %v1885
    %v1921 = vpop.f32.mrf.mxu0
    %v1922 = vadd.f32 0.0, %v1921
    %v1923 = vpop.f32.mrf.mxu0
    %v1924 = vpop.f32.mrf.mxu0
    %v1925 = vadd.f32 0.0, %v1924
    %v1926 = vpop.f32.mrf.mxu0
    %1927 = vdwg.mxu0
    %v1928 = vadd.f32 %v1879, %v1922
    %v1929 = vadd.f32 %v1880, %v1925
    %vm1930 = vcmask 1043456
    %v1931 = vsel %vm1930, %v1673, 0.0
    %v1932 = vadd.f32 %v1672, %v1931
    %v1933 = vrot.slane %v1932, 4
    %v1934 = vadd.f32 %v1932, %v1933
    %v1935 = vrot.slane %v1934, 2
    %v1936 = vadd.f32 %v1934, %v1935
    %v1937 = vrot.slane %v1936, 1
    %v1938 = vadd.f32 %v1936, %v1937
    %v1939 = vadd.f32 %v1938, 0.0
    %v1940 = vsel %vm1930, %v1929, 0.0
    %v1941 = vadd.f32 %v1928, %v1940
    %v1942 = vrot.slane %v1941, 4
    %v1943 = vadd.f32 %v1941, %v1942
    %v1944 = vrot.slane %v1943, 2
    %v1945 = vadd.f32 %v1943, %v1944
    %v1946 = vrot.slane %v1945, 1
    %v1947 = vadd.f32 %v1945, %v1946
    %v1948 = vadd.f32 %v1939, %v1947
    %v1949 = vrcp.pop 24.0
    %v1950 = vmul.f32 %v1948, %v1949
    %v1951 = vsub.f32 %v1672, %v1950
    %v1952 = vsub.f32 %v1673, %v1950
    %v1953 = vmul.f32 %v1951, %v1951
    %v1954 = vmul.f32 %v1952, %v1952
    %v1955 = vsel %vm1930, %v1954, 0.0
    %v1956 = vadd.f32 %v1953, %v1955
    %v1957 = vrot.slane %v1956, 4
    %v1958 = vadd.f32 %v1956, %v1957
    %v1959 = vrot.slane %v1958, 2
    %v1960 = vadd.f32 %v1958, %v1959
    %v1961 = vrot.slane %v1960, 1
    %v1962 = vadd.f32 %v1960, %v1961
    %v1963 = vadd.f32 %v1962, 0.0
    %v1964 = vsub.f32 %v1928, %v1950
    %v1965 = vsub.f32 %v1929, %v1950
    %v1966 = vmul.f32 %v1964, %v1964
    %v1967 = vmul.f32 %v1965, %v1965
    %v1968 = vsel %vm1930, %v1967, 0.0
    %v1969 = vadd.f32 %v1966, %v1968
    %v1970 = vrot.slane %v1969, 4
    %v1971 = vadd.f32 %v1969, %v1970
    %v1972 = vrot.slane %v1971, 2
    %v1973 = vadd.f32 %v1971, %v1972
    %v1974 = vrot.slane %v1973, 1
    %v1975 = vadd.f32 %v1973, %v1974
    %v1976 = vadd.f32 %v1963, %v1975
    %v1977 = vmul.f32 %v1976, %v1949
    %v1978 = vadd.f32 %v1977, 1e-05
    %v1979 = vrsqrt.pop %v1978
    %v1980 = vmul.f32 %v1951, %v1979
    %v1981 = vmul.f32 %v1952, %v1979
    %v1982 = vmax.f32 %v1980, 0.0
    %v1983 = vmax.f32 %v1981, 0.0
    %v1984 = vmul.f32 %v1964, %v1979
    %v1985 = vmul.f32 %v1965, %v1979
    %v1986 = vmax.f32 %v1984, 0.0
    %v1987 = vmax.f32 %v1985, 0.0
    %v1988 = vpack.c.bf16 %v1983, %v1982
    %v1990 = vunpack.c.l.b16 %v1988
    %v1991 = vunpack.c.h.b16 %v1988
    %v1992 = vpack.c.b16 %v1990, %v1990
    %v1993 = vpack.c.b16 %v1991, %v1991
    %vm1994 = vsmask.f32 1280
    %vm1995 = vsmask.f32 5392
    %vm1996 = vmor %vm1994, %vm1995
    %v1998 = vshrl.u32 %v1992, 16
    %v2000 = vrot.slane %v1998, 6
    %v2001 = vshll.u32 %v1992, 16
    %v2003 = vrot.slane %v2001, 7
    %v2004 = vor.u32 %v2000, %v2003
    %v2005 = vrot.slane %v2004, 4
    %v2007 = vshrl.u32 %v1993, 16
    %v2009 = vrot.slane %v2007, 6
    %v2010 = vshll.u32 %v1993, 16
    %v2012 = vrot.slane %v2010, 7
    %v2013 = vor.u32 %v2009, %v2012
    %v2014 = vsel %vm1996, %v2005, %v2013
    %vm2017 = vcmask 1043457
    %vm2018 = vsmask.f32 7942
    %vm2019 = vmand %vm2017, %vm2018
    %v2020 = vld [vmem:[#allocation3] sm:$0xe]
    %v2021 = vsel %vm2019, %v2004, %v2020
    %2022 = vst [vmem:[#allocation3] sm:$0xe] %v2021
    %v2023 = vld [vmem:[#allocation3 + $0x4] sm:$0xf]
    %v2024 = vsel %vm1059, %v2014, %v2023
    %2025 = vst [vmem:[#allocation3 + $0x4] sm:$0xf] %v2024
    %v2026 = vpack.c.bf16 %v1987, %v1986
    %v2028 = vunpack.c.l.b16 %v2026
    %v2029 = vunpack.c.h.b16 %v2026
    %v2030 = vpack.c.b16 %v2028, %v2028
    %v2031 = vpack.c.b16 %v2029, %v2029
    %v2033 = vshrl.u32 %v2030, 16
    %v2035 = vrot.slane %v2033, 6
    %v2036 = vshll.u32 %v2030, 16
    %v2038 = vrot.slane %v2036, 7
    %v2039 = vor.u32 %v2035, %v2038
    %v2040 = vrot.slane %v2039, 4
    %v2042 = vshrl.u32 %v2031, 16
    %v2044 = vrot.slane %v2042, 6
    %v2045 = vshll.u32 %v2031, 16
    %v2047 = vrot.slane %v2045, 7
    %v2048 = vor.u32 %v2044, %v2047
    %v2049 = vsel %vm1996, %v2040, %v2048
    %s2052 = scalar_lea.vmem [#allocation3], 12
    %v2053 = vld [vmem:[%s2052] sm:$0xe]
    %v2054 = vsel %vm2019, %v2039, %v2053
    %2055 = vst [vmem:[%s2052] sm:$0xe] %v2054
    %v2056 = vld [vmem:[%s2052 + $0x4] sm:$0xf]
    %v2057 = vsel %vm1059, %v2049, %v2056
    %2058 = vst [vmem:[%s2052 + $0x4] sm:$0xf] %v2057
    %v2059 = vld [vmem:[#allocation3] sm:$0xf]
    %v2060 = vld [vmem:[#allocation3 + $0x4] sm:$0x7]
    %v2061 = vld [vmem:[#allocation9] sm:$0xf]
    %v2062 = vld [vmem:[#allocation9 + $0x4] sm:$0xf]
    %v2063 = vld [vmem:[#allocation9 + $0x8] sm:$0xf]
    %v2064 = vld [vmem:[#allocation9 + $0xc] sm:$0xf]
    %v2065 = vld [vmem:[#allocation9 + $0x10] sm:$0xf]
    %v2066 = vld [vmem:[#allocation9 + $0x14] sm:$0xf]
    %v2067 = vld [vmem:[#allocation9 + $0x18] sm:$0xf]
    %v2068 = vld [vmem:[#allocation9 + $0x1c] sm:$0xf]
    %v2069 = vld [vmem:[#allocation9 + $0x20] sm:$0xf]
    %v2070 = vld [vmem:[#allocation9 + $0x24] sm:$0xf]
    %v2071 = vld [vmem:[#allocation9 + $0x28] sm:$0xf]
    %v2072 = vld [vmem:[#allocation9 + $0x2c] sm:$0xf]
    %v2073 = vld [vmem:[#allocation9 + $0x30] sm:$0xf]
    %v2074 = vld [vmem:[#allocation9 + $0x34] sm:$0xf]
    %v2075 = vld [vmem:[#allocation9 + $0x38] sm:$0xf]
    %v2076 = vld [vmem:[#allocation9 + $0x3c] sm:$0xf]
    %v2077 = vld [vmem:[#allocation3 + $0x4] sm:$0xf]
    %s2078 = scalar_lea.vmem [#allocation9], 64
    %v2079 = vld [vmem:[%s2078] sm:$0xf]
    %v2080 = vld [vmem:[%s2078 + $0x4] sm:$0xf]
    %v2081 = vld [vmem:[%s2078 + $0x8] sm:$0xf]
    %v2082 = vld [vmem:[%s2078 + $0xc] sm:$0xf]
    %v2083 = vld [vmem:[%s2078 + $0x10] sm:$0xf]
    %v2084 = vld [vmem:[%s2078 + $0x14] sm:$0xf]
    %v2085 = vld [vmem:[%s2078 + $0x18] sm:$0xf]
    %v2086 = vld [vmem:[%s2078 + $0x1c] sm:$0xf]
    %v2087 = vld [vmem:[%s2078 + $0x20] sm:$0xf]
    %v2088 = vld [vmem:[%s2078 + $0x24] sm:$0xf]
    %v2089 = vld [vmem:[%s2078 + $0x28] sm:$0xf]
    %v2090 = vld [vmem:[%s2078 + $0x2c] sm:$0xf]
    %v2091 = vld [vmem:[%s2078 + $0x30] sm:$0xf]
    %v2092 = vld [vmem:[%s2078 + $0x34] sm:$0xf]
    %v2093 = vld [vmem:[%s2078 + $0x38] sm:$0xf]
    %v2094 = vld [vmem:[%s2078 + $0x3c] sm:$0xf]
    %v2097 = vunpack.c.l.b16 %v2059
    %v2098 = vunpack.c.l.b16 %v2077
    %v2099 = vpack.c.b16 %v2098, %v2097
    %v2101 = vshrl.u32 %v2099, 16
    %v2103 = vshll.u32 %v2099, 16
    %v2105 = vrot.slane %v2103, 1
    %v2106 = vor.u32 %v2101, %v2105
    %v2124 = vunpack.c.l.b16 %v2079
    %v2125 = vunpack.c.l.b16 %v2080
    %v2126 = vunpack.c.l.b16 %v2081
    %v2127 = vunpack.c.l.b16 %v2082
    %v2128 = vunpack.c.l.b16 %v2083
    %v2129 = vunpack.c.l.b16 %v2084
    %v2130 = vunpack.c.l.b16 %v2085
    %v2131 = vunpack.c.l.b16 %v2086
    %v2132 = vunpack.c.l.b16 %v2087
    %v2133 = vunpack.c.l.b16 %v2088
    %v2134 = vunpack.c.l.b16 %v2089
    %v2135 = vunpack.c.l.b16 %v2090
    %v2136 = vunpack.c.l.b16 %v2091
    %v2137 = vunpack.c.l.b16 %v2092
    %v2138 = vunpack.c.l.b16 %v2093
    %v2139 = vunpack.c.l.b16 %v2094
    %v2140 = vpack.c.b16 %v2125, %v2124
    %v2141 = vpack.c.b16 %v2127, %v2126
    %v2142 = vpack.c.b16 %v2129, %v2128
    %v2143 = vpack.c.b16 %v2131, %v2130
    %v2144 = vpack.c.b16 %v2133, %v2132
    %v2145 = vpack.c.b16 %v2135, %v2134
    %v2146 = vpack.c.b16 %v2137, %v2136
    %v2147 = vpack.c.b16 %v2139, %v2138
    %2156 = vmatprep.subr.bf16.mxu0 0
    %2157 = vmatpush1.bf16.msra.mxu0 %v2147
    %2158 = vmatprep.subr.bf16.mxu0 0
    %2159 = vmatpush1.bf16.msra.mxu0 %v2146
    %2160 = vmatprep.subr.bf16.mxu0 0
    %2161 = vmatpush1.bf16.msra.mxu0 %v2145
    %2162 = vmatprep.subr.bf16.mxu0 0
    %2163 = vmatpush1.bf16.msra.mxu0 %v2144
    %2164 = vmatprep.subr.bf16.mxu0 0
    %2165 = vmatpush1.bf16.msra.mxu0 %v2143
    %2166 = vmatprep.subr.bf16.mxu0 0
    %2167 = vmatpush1.bf16.msra.mxu0 %v2142
    %2168 = vmatprep.subr.bf16.mxu0 0
    %2169 = vmatpush1.bf16.msra.mxu0 %v2141
    %2170 = vmatprep.subr.bf16.mxu0 0
    %2171 = vmatpush1.bf16.msra.mxu0 %v2140
    %2172 = vmatprep.subr.bf16.mxu0 0
    %2173 = vmatpush2.bf16.msra.mxu0 0
    %2174 = vmatprep.subr.bf16.mxu0 0
    %2175 = vmatpush2.bf16.msra.mxu0 0
    %2176 = vmatprep.subr.bf16.mxu0 0
    %2177 = vmatpush2.bf16.msra.mxu0 0
    %2178 = vmatprep.subr.bf16.mxu0 0
    %2179 = vmatpush2.bf16.msra.mxu0 0
    %2180 = vmatprep.subr.bf16.mxu0 0
    %2181 = vmatpush2.bf16.msra.mxu0 0
    %2182 = vmatprep.subr.bf16.mxu0 0
    %2183 = vmatpush2.bf16.msra.mxu0 0
    %2184 = vmatprep.subr.bf16.mxu0 0
    %2185 = vmatpush2.bf16.msra.mxu0 0
    %2186 = vmatprep.subr.bf16.mxu0 0
    %2187 = vmatpush2.bf16.msra.mxu0 0
    %2188 = vmatprep.mubr.bf16.mxu0 0
    %2189 = vmatmul.mubr.bf16.gmra.mxu0 %v2106
    %v2190 = vpop.f32.mrf.mxu0
    %v2191 = vadd.f32 0.0, %v2190
    %v2192 = vpop.f32.mrf.mxu0
    %v2193 = vpop.f32.mrf.mxu0
    %v2194 = vadd.f32 0.0, %v2193
    %v2195 = vpop.f32.mrf.mxu0
    %2196 = vdwg.mxu0
    %v2198 = vunpack.c.l.b16 %v2060
    %v2199 = vpack.c.b16 %v2198, %v2097
    %v2217 = vunpack.c.l.b16 %v2061
    %v2218 = vunpack.c.l.b16 %v2062
    %v2219 = vunpack.c.l.b16 %v2063
    %v2220 = vunpack.c.l.b16 %v2064
    %v2221 = vunpack.c.l.b16 %v2065
    %v2222 = vunpack.c.l.b16 %v2066
    %v2223 = vunpack.c.l.b16 %v2067
    %v2224 = vunpack.c.l.b16 %v2068
    %v2225 = vunpack.c.l.b16 %v2069
    %v2226 = vunpack.c.l.b16 %v2070
    %v2227 = vunpack.c.l.b16 %v2071
    %v2228 = vunpack.c.l.b16 %v2072
    %v2229 = vunpack.c.l.b16 %v2073
    %v2230 = vunpack.c.l.b16 %v2074
    %v2231 = vunpack.c.l.b16 %v2075
    %v2232 = vunpack.c.l.b16 %v2076
    %v2233 = vpack.c.b16 %v2218, %v2217
    %v2234 = vpack.c.b16 %v2220, %v2219
    %v2235 = vpack.c.b16 %v2222, %v2221
    %v2236 = vpack.c.b16 %v2224, %v2223
    %v2237 = vpack.c.b16 %v2226, %v2225
    %v2238 = vpack.c.b16 %v2228, %v2227
    %v2239 = vpack.c.b16 %v2230, %v2229
    %v2240 = vpack.c.b16 %v2232, %v2231
    %2249 = vmatprep.subr.bf16.mxu0 0
    %2250 = vmatpush1.bf16.msra.mxu0 %v2240
    %2251 = vmatprep.subr.bf16.mxu0 0
    %2252 = vmatpush1.bf16.msra.mxu0 %v2239
    %2253 = vmatprep.subr.bf16.mxu0 0
    %2254 = vmatpush1.bf16.msra.mxu0 %v2238
    %2255 = vmatprep.subr.bf16.mxu0 0
    %2256 = vmatpush1.bf16.msra.mxu0 %v2237
    %2257 = vmatprep.subr.bf16.mxu0 0
    %2258 = vmatpush1.bf16.msra.mxu0 %v2236
    %2259 = vmatprep.subr.bf16.mxu0 0
    %2260 = vmatpush1.bf16.msra.mxu0 %v2235
    %2261 = vmatprep.subr.bf16.mxu0 0
    %2262 = vmatpush1.bf16.msra.mxu0 %v2234
    %2263 = vmatprep.subr.bf16.mxu0 0
    %2264 = vmatpush1.bf16.msra.mxu0 %v2233
    %2265 = vmatprep.subr.bf16.mxu0 0
    %2266 = vmatpush2.bf16.msra.mxu0 0
    %2267 = vmatprep.subr.bf16.mxu0 0
    %2268 = vmatpush2.bf16.msra.mxu0 0
    %2269 = vmatprep.subr.bf16.mxu0 0
    %2270 = vmatpush2.bf16.msra.mxu0 0
    %2271 = vmatprep.subr.bf16.mxu0 0
    %2272 = vmatpush2.bf16.msra.mxu0 0
    %2273 = vmatprep.subr.bf16.mxu0 0
    %2274 = vmatpush2.bf16.msra.mxu0 0
    %2275 = vmatprep.subr.bf16.mxu0 0
    %2276 = vmatpush2.bf16.msra.mxu0 0
    %2277 = vmatprep.subr.bf16.mxu0 0
    %2278 = vmatpush2.bf16.msra.mxu0 0
    %2279 = vmatprep.subr.bf16.mxu0 0
    %2280 = vmatpush2.bf16.msra.mxu0 0
    %2281 = vmatprep.mubr.bf16.mxu0 0
    %2282 = vmatmul.mubr.bf16.gmra.mxu0 %v2199
    %v2283 = vpop.f32.mrf.mxu0
    %v2284 = vadd.f32 %v2191, %v2283
    %v2285 = vpop.f32.mrf.mxu0
    %v2286 = vpop.f32.mrf.mxu0
    %v2287 = vadd.f32 %v2194, %v2286
    %v2288 = vpop.f32.mrf.mxu0
    %2289 = vdwg.mxu0
    %v2290 = vld [vmem:[#allocation3] sm:$0xe]
    %s2291 = scalar_lea.vmem [#allocation9], 128
    %v2292 = vld [vmem:[%s2291] sm:$0xf]
    %v2293 = vld [vmem:[%s2291 + $0x4] sm:$0xf]
    %v2294 = vld [vmem:[%s2291 + $0x8] sm:$0xf]
    %v2295 = vld [vmem:[%s2291 + $0xc] sm:$0xf]
    %v2296 = vld [vmem:[%s2291 + $0x10] sm:$0xf]
    %v2297 = vld [vmem:[%s2291 + $0x14] sm:$0xf]
    %v2298 = vld [vmem:[%s2291 + $0x18] sm:$0xf]
    %v2299 = vld [vmem:[%s2291 + $0x1c] sm:$0xf]
    %v2300 = vld [vmem:[%s2291 + $0x20] sm:$0xf]
    %v2301 = vld [vmem:[%s2291 + $0x24] sm:$0xf]
    %v2302 = vld [vmem:[%s2291 + $0x28] sm:$0xf]
    %v2303 = vld [vmem:[%s2291 + $0x2c] sm:$0xf]
    %v2304 = vld [vmem:[%s2291 + $0x30] sm:$0xf]
    %v2305 = vld [vmem:[%s2291 + $0x34] sm:$0xf]
    %v2306 = vld [vmem:[%s2291 + $0x38] sm:$0xf]
    %v2307 = vld [vmem:[%s2291 + $0x3c] sm:$0xf]
    %v2309 = vunpack.c.l.b16 %v2290
    %v2310 = vpack.c.b16 %v2098, %v2309
    %v2311 = vrot.slane %v2310, 1
    %v2329 = vunpack.c.l.b16 %v2292
    %v2330 = vunpack.c.l.b16 %v2293
    %v2331 = vunpack.c.l.b16 %v2294
    %v2332 = vunpack.c.l.b16 %v2295
    %v2333 = vunpack.c.l.b16 %v2296
    %v2334 = vunpack.c.l.b16 %v2297
    %v2335 = vunpack.c.l.b16 %v2298
    %v2336 = vunpack.c.l.b16 %v2299
    %v2337 = vunpack.c.l.b16 %v2300
    %v2338 = vunpack.c.l.b16 %v2301
    %v2339 = vunpack.c.l.b16 %v2302
    %v2340 = vunpack.c.l.b16 %v2303
    %v2341 = vunpack.c.l.b16 %v2304
    %v2342 = vunpack.c.l.b16 %v2305
    %v2343 = vunpack.c.l.b16 %v2306
    %v2344 = vunpack.c.l.b16 %v2307
    %v2345 = vpack.c.b16 %v2330, %v2329
    %v2346 = vpack.c.b16 %v2332, %v2331
    %v2347 = vpack.c.b16 %v2334, %v2333
    %v2348 = vpack.c.b16 %v2336, %v2335
    %v2349 = vpack.c.b16 %v2338, %v2337
    %v2350 = vpack.c.b16 %v2340, %v2339
    %v2351 = vpack.c.b16 %v2342, %v2341
    %v2352 = vpack.c.b16 %v2344, %v2343
    %2361 = vmatprep.subr.bf16.mxu0 0
    %2362 = vmatpush1.bf16.msra.mxu0 %v2352
    %2363 = vmatprep.subr.bf16.mxu0 0
    %2364 = vmatpush1.bf16.msra.mxu0 %v2351
    %2365 = vmatprep.subr.bf16.mxu0 0
    %2366 = vmatpush1.bf16.msra.mxu0 %v2350
    %2367 = vmatprep.subr.bf16.mxu0 0
    %2368 = vmatpush1.bf16.msra.mxu0 %v2349
    %2369 = vmatprep.subr.bf16.mxu0 0
    %2370 = vmatpush1.bf16.msra.mxu0 %v2348
    %2371 = vmatprep.subr.bf16.mxu0 0
    %2372 = vmatpush1.bf16.msra.mxu0 %v2347
    %2373 = vmatprep.subr.bf16.mxu0 0
    %2374 = vmatpush1.bf16.msra.mxu0 %v2346
    %2375 = vmatprep.subr.bf16.mxu0 0
    %2376 = vmatpush1.bf16.msra.mxu0 %v2345
    %2377 = vmatprep.subr.bf16.mxu0 0
    %2378 = vmatpush2.bf16.msra.mxu0 0
    %2379 = vmatprep.subr.bf16.mxu0 0
    %2380 = vmatpush2.bf16.msra.mxu0 0
    %2381 = vmatprep.subr.bf16.mxu0 0
    %2382 = vmatpush2.bf16.msra.mxu0 0
    %2383 = vmatprep.subr.bf16.mxu0 0
    %2384 = vmatpush2.bf16.msra.mxu0 0
    %2385 = vmatprep.subr.bf16.mxu0 0
    %2386 = vmatpush2.bf16.msra.mxu0 0
    %2387 = vmatprep.subr.bf16.mxu0 0
    %2388 = vmatpush2.bf16.msra.mxu0 0
    %2389 = vmatprep.subr.bf16.mxu0 0
    %2390 = vmatpush2.bf16.msra.mxu0 0
    %2391 = vmatprep.subr.bf16.mxu0 0
    %2392 = vmatpush2.bf16.msra.mxu0 0
    %2393 = vmatprep.mubr.bf16.mxu0 0
    %2394 = vmatmul.mubr.bf16.gmra.mxu0 %v2311
    %v2395 = vpop.f32.mrf.mxu0
    %v2396 = vadd.f32 0.0, %v2395
    %v2397 = vpop.f32.mrf.mxu0
    %v2398 = vpop.f32.mrf.mxu0
    %v2399 = vadd.f32 0.0, %v2398
    %v2400 = vpop.f32.mrf.mxu0
    %2401 = vdwg.mxu0
    %v2402 = vadd.f32 %v2284, %v2396
    %v2403 = vadd.f32 %v2287, %v2399
    %v2404 = vld [vmem:[#allocation3] sm:$0xe]
    %v2405 = vld [vmem:[#allocation3 + $0x4] sm:$0xf]
    %v2406 = vld [vmem:[#allocation3 + $0x8] sm:$0x1]
    %s2407 = scalar_lea.vmem [#allocation9], 192
    %v2408 = vld [vmem:[%s2407] sm:$0xf]
    %v2409 = vld [vmem:[%s2407 + $0x4] sm:$0xf]
    %v2410 = vld [vmem:[%s2407 + $0x8] sm:$0xf]
    %v2411 = vld [vmem:[%s2407 + $0xc] sm:$0xf]
    %v2412 = vld [vmem:[%s2407 + $0x10] sm:$0xf]
    %v2413 = vld [vmem:[%s2407 + $0x14] sm:$0xf]
    %v2414 = vld [vmem:[%s2407 + $0x18] sm:$0xf]
    %v2415 = vld [vmem:[%s2407 + $0x1c] sm:$0xf]
    %v2416 = vld [vmem:[%s2407 + $0x20] sm:$0xf]
    %v2417 = vld [vmem:[%s2407 + $0x24] sm:$0xf]
    %v2418 = vld [vmem:[%s2407 + $0x28] sm:$0xf]
    %v2419 = vld [vmem:[%s2407 + $0x2c] sm:$0xf]
    %v2420 = vld [vmem:[%s2407 + $0x30] sm:$0xf]
    %v2421 = vld [vmem:[%s2407 + $0x34] sm:$0xf]
    %v2422 = vld [vmem:[%s2407 + $0x38] sm:$0xf]
    %v2423 = vld [vmem:[%s2407 + $0x3c] sm:$0xf]
    %v2427 = vunpack.c.l.b16 %v2404
    %v2428 = vunpack.c.l.b16 %v2405
    %v2429 = vunpack.c.l.b16 %v2406
    %v2430 = vpack.c.b16 %v2428, %v2427
    %v2431 = vpack.c.b16 %v2429, %v2429
    %v2433 = vshrl.u32 %v2430, 16
    %v2435 = vrot.slane %v2433, 1
    %v2436 = vshll.u32 %v2430, 16
    %v2438 = vrot.slane %v2436, 2
    %v2439 = vor.u32 %v2435, %v2438
    %v2441 = vshll.u32 %v2431, 16
    %v2443 = vrot.slane %v2441, 2
    %v2444 = vsel %vm473, %v2439, %v2443
    %v2462 = vunpack.c.l.b16 %v2408
    %v2463 = vunpack.c.l.b16 %v2409
    %v2464 = vunpack.c.l.b16 %v2410
    %v2465 = vunpack.c.l.b16 %v2411
    %v2466 = vunpack.c.l.b16 %v2412
    %v2467 = vunpack.c.l.b16 %v2413
    %v2468 = vunpack.c.l.b16 %v2414
    %v2469 = vunpack.c.l.b16 %v2415
    %v2470 = vunpack.c.l.b16 %v2416
    %v2471 = vunpack.c.l.b16 %v2417
    %v2472 = vunpack.c.l.b16 %v2418
    %v2473 = vunpack.c.l.b16 %v2419
    %v2474 = vunpack.c.l.b16 %v2420
    %v2475 = vunpack.c.l.b16 %v2421
    %v2476 = vunpack.c.l.b16 %v2422
    %v2477 = vunpack.c.l.b16 %v2423
    %v2478 = vpack.c.b16 %v2463, %v2462
    %v2479 = vpack.c.b16 %v2465, %v2464
    %v2480 = vpack.c.b16 %v2467, %v2466
    %v2481 = vpack.c.b16 %v2469, %v2468
    %v2482 = vpack.c.b16 %v2471, %v2470
    %v2483 = vpack.c.b16 %v2473, %v2472
    %v2484 = vpack.c.b16 %v2475, %v2474
    %v2485 = vpack.c.b16 %v2477, %v2476
    %2494 = vmatprep.subr.bf16.mxu0 0
    %2495 = vmatpush1.bf16.msra.mxu0 %v2485
    %2496 = vmatprep.subr.bf16.mxu0 0
    %2497 = vmatpush1.bf16.msra.mxu0 %v2484
    %2498 = vmatprep.subr.bf16.mxu0 0
    %2499 = vmatpush1.bf16.msra.mxu0 %v2483
    %2500 = vmatprep.subr.bf16.mxu0 0
    %2501 = vmatpush1.bf16.msra.mxu0 %v2482
    %2502 = vmatprep.subr.bf16.mxu0 0
    %2503 = vmatpush1.bf16.msra.mxu0 %v2481
    %2504 = vmatprep.subr.bf16.mxu0 0
    %2505 = vmatpush1.bf16.msra.mxu0 %v2480
    %2506 = vmatprep.subr.bf16.mxu0 0
    %2507 = vmatpush1.bf16.msra.mxu0 %v2479
    %2508 = vmatprep.subr.bf16.mxu0 0
    %2509 = vmatpush1.bf16.msra.mxu0 %v2478
    %2510 = vmatprep.subr.bf16.mxu0 0
    %2511 = vmatpush2.bf16.msra.mxu0 0
    %2512 = vmatprep.subr.bf16.mxu0 0
    %2513 = vmatpush2.bf16.msra.mxu0 0
    %2514 = vmatprep.subr.bf16.mxu0 0
    %2515 = vmatpush2.bf16.msra.mxu0 0
    %2516 = vmatprep.subr.bf16.mxu0 0
    %2517 = vmatpush2.bf16.msra.mxu0 0
    %2518 = vmatprep.subr.bf16.mxu0 0
    %2519 = vmatpush2.bf16.msra.mxu0 0
    %2520 = vmatprep.subr.bf16.mxu0 0
    %2521 = vmatpush2.bf16.msra.mxu0 0
    %2522 = vmatprep.subr.bf16.mxu0 0
    %2523 = vmatpush2.bf16.msra.mxu0 0
    %2524 = vmatprep.subr.bf16.mxu0 0
    %2525 = vmatpush2.bf16.msra.mxu0 0
    %2526 = vmatprep.mubr.bf16.mxu0 0
    %2527 = vmatmul.mubr.bf16.gmra.mxu0 %v2444
    %v2528 = vpop.f32.mrf.mxu0
    %v2529 = vadd.f32 0.0, %v2528
    %v2530 = vpop.f32.mrf.mxu0
    %v2531 = vpop.f32.mrf.mxu0
    %v2532 = vadd.f32 0.0, %v2531
    %v2533 = vpop.f32.mrf.mxu0
    %2534 = vdwg.mxu0
    %v2535 = vadd.f32 %v2402, %v2529
    %v2536 = vadd.f32 %v2403, %v2532
    %v2537 = vld [vmem:[#allocation3] sm:$0xc]
    %s2538 = scalar_lea.vmem [#allocation9], 256
    %v2539 = vld [vmem:[%s2538] sm:$0xf]
    %v2540 = vld [vmem:[%s2538 + $0x4] sm:$0xf]
    %v2541 = vld [vmem:[%s2538 + $0x8] sm:$0xf]
    %v2542 = vld [vmem:[%s2538 + $0xc] sm:$0xf]
    %v2543 = vld [vmem:[%s2538 + $0x10] sm:$0xf]
    %v2544 = vld [vmem:[%s2538 + $0x14] sm:$0xf]
    %v2545 = vld [vmem:[%s2538 + $0x18] sm:$0xf]
    %v2546 = vld [vmem:[%s2538 + $0x1c] sm:$0xf]
    %v2547 = vld [vmem:[%s2538 + $0x20] sm:$0xf]
    %v2548 = vld [vmem:[%s2538 + $0x24] sm:$0xf]
    %v2549 = vld [vmem:[%s2538 + $0x28] sm:$0xf]
    %v2550 = vld [vmem:[%s2538 + $0x2c] sm:$0xf]
    %v2551 = vld [vmem:[%s2538 + $0x30] sm:$0xf]
    %v2552 = vld [vmem:[%s2538 + $0x34] sm:$0xf]
    %v2553 = vld [vmem:[%s2538 + $0x38] sm:$0xf]
    %v2554 = vld [vmem:[%s2538 + $0x3c] sm:$0xf]
    %v2556 = vunpack.c.l.b16 %v2537
    %v2557 = vpack.c.b16 %v2428, %v2556
    %v2558 = vrot.slane %v2557, 2
    %v2559 = vrot.slane %v2431, 2
    %v2560 = vsel %vm600, %v2558, %v2559
    %v2578 = vunpack.c.l.b16 %v2539
    %v2579 = vunpack.c.l.b16 %v2540
    %v2580 = vunpack.c.l.b16 %v2541
    %v2581 = vunpack.c.l.b16 %v2542
    %v2582 = vunpack.c.l.b16 %v2543
    %v2583 = vunpack.c.l.b16 %v2544
    %v2584 = vunpack.c.l.b16 %v2545
    %v2585 = vunpack.c.l.b16 %v2546
    %v2586 = vunpack.c.l.b16 %v2547
    %v2587 = vunpack.c.l.b16 %v2548
    %v2588 = vunpack.c.l.b16 %v2549
    %v2589 = vunpack.c.l.b16 %v2550
    %v2590 = vunpack.c.l.b16 %v2551
    %v2591 = vunpack.c.l.b16 %v2552
    %v2592 = vunpack.c.l.b16 %v2553
    %v2593 = vunpack.c.l.b16 %v2554
    %v2594 = vpack.c.b16 %v2579, %v2578
    %v2595 = vpack.c.b16 %v2581, %v2580
    %v2596 = vpack.c.b16 %v2583, %v2582
    %v2597 = vpack.c.b16 %v2585, %v2584
    %v2598 = vpack.c.b16 %v2587, %v2586
    %v2599 = vpack.c.b16 %v2589, %v2588
    %v2600 = vpack.c.b16 %v2591, %v2590
    %v2601 = vpack.c.b16 %v2593, %v2592
    %2610 = vmatprep.subr.bf16.mxu0 0
    %2611 = vmatpush1.bf16.msra.mxu0 %v2601
    %2612 = vmatprep.subr.bf16.mxu0 0
    %2613 = vmatpush1.bf16.msra.mxu0 %v2600
    %2614 = vmatprep.subr.bf16.mxu0 0
    %2615 = vmatpush1.bf16.msra.mxu0 %v2599
    %2616 = vmatprep.subr.bf16.mxu0 0
    %2617 = vmatpush1.bf16.msra.mxu0 %v2598
    %2618 = vmatprep.subr.bf16.mxu0 0
    %2619 = vmatpush1.bf16.msra.mxu0 %v2597
    %2620 = vmatprep.subr.bf16.mxu0 0
    %2621 = vmatpush1.bf16.msra.mxu0 %v2596
    %2622 = vmatprep.subr.bf16.mxu0 0
    %2623 = vmatpush1.bf16.msra.mxu0 %v2595
    %2624 = vmatprep.subr.bf16.mxu0 0
    %2625 = vmatpush1.bf16.msra.mxu0 %v2594
    %2626 = vmatprep.subr.bf16.mxu0 0
    %2627 = vmatpush2.bf16.msra.mxu0 0
    %2628 = vmatprep.subr.bf16.mxu0 0
    %2629 = vmatpush2.bf16.msra.mxu0 0
    %2630 = vmatprep.subr.bf16.mxu0 0
    %2631 = vmatpush2.bf16.msra.mxu0 0
    %2632 = vmatprep.subr.bf16.mxu0 0
    %2633 = vmatpush2.bf16.msra.mxu0 0
    %2634 = vmatprep.subr.bf16.mxu0 0
    %2635 = vmatpush2.bf16.msra.mxu0 0
    %2636 = vmatprep.subr.bf16.mxu0 0
    %2637 = vmatpush2.bf16.msra.mxu0 0
    %2638 = vmatprep.subr.bf16.mxu0 0
    %2639 = vmatpush2.bf16.msra.mxu0 0
    %2640 = vmatprep.subr.bf16.mxu0 0
    %2641 = vmatpush2.bf16.msra.mxu0 0
    %2642 = vmatprep.mubr.bf16.mxu0 0
    %2643 = vmatmul.mubr.bf16.gmra.mxu0 %v2560
    %v2644 = vpop.f32.mrf.mxu0
    %v2645 = vadd.f32 0.0, %v2644
    %v2646 = vpop.f32.mrf.mxu0
    %v2647 = vpop.f32.mrf.mxu0
    %v2648 = vadd.f32 0.0, %v2647
    %v2649 = vpop.f32.mrf.mxu0
    %2650 = vdwg.mxu0
    %v2651 = vadd.f32 %v2535, %v2645
    %v2652 = vadd.f32 %v2536, %v2648
    %v2653 = vld [vmem:[%s2052] sm:$0xf]
    %v2654 = vld [vmem:[%s2052 + $0x4] sm:$0x7]
    %v2655 = vld [vmem:[%s2052 + $0x4] sm:$0xf]
    %v2658 = vunpack.c.l.b16 %v2653
    %v2659 = vunpack.c.l.b16 %v2655
    %v2660 = vpack.c.b16 %v2659, %v2658
    %v2662 = vshrl.u32 %v2660, 16
    %v2664 = vshll.u32 %v2660, 16
    %v2666 = vrot.slane %v2664, 1
    %v2667 = vor.u32 %v2662, %v2666
    %2669 = vmatprep.subr.bf16.mxu0 0
    %2670 = vmatpush1.bf16.msra.mxu0 %v2147
    %2671 = vmatprep.subr.bf16.mxu0 0
    %2672 = vmatpush1.bf16.msra.mxu0 %v2146
    %2673 = vmatprep.subr.bf16.mxu0 0
    %2674 = vmatpush1.bf16.msra.mxu0 %v2145
    %2675 = vmatprep.subr.bf16.mxu0 0
    %2676 = vmatpush1.bf16.msra.mxu0 %v2144
    %2677 = vmatprep.subr.bf16.mxu0 0
    %2678 = vmatpush1.bf16.msra.mxu0 %v2143
    %2679 = vmatprep.subr.bf16.mxu0 0
    %2680 = vmatpush1.bf16.msra.mxu0 %v2142
    %2681 = vmatprep.subr.bf16.mxu0 0
    %2682 = vmatpush1.bf16.msra.mxu0 %v2141
    %2683 = vmatprep.subr.bf16.mxu0 0
    %2684 = vmatpush1.bf16.msra.mxu0 %v2140
    %2685 = vmatprep.subr.bf16.mxu0 0
    %2686 = vmatpush2.bf16.msra.mxu0 0
    %2687 = vmatprep.subr.bf16.mxu0 0
    %2688 = vmatpush2.bf16.msra.mxu0 0
    %2689 = vmatprep.subr.bf16.mxu0 0
    %2690 = vmatpush2.bf16.msra.mxu0 0
    %2691 = vmatprep.subr.bf16.mxu0 0
    %2692 = vmatpush2.bf16.msra.mxu0 0
    %2693 = vmatprep.subr.bf16.mxu0 0
    %2694 = vmatpush2.bf16.msra.mxu0 0
    %2695 = vmatprep.subr.bf16.mxu0 0
    %2696 = vmatpush2.bf16.msra.mxu0 0
    %2697 = vmatprep.subr.bf16.mxu0 0
    %2698 = vmatpush2.bf16.msra.mxu0 0
    %2699 = vmatprep.subr.bf16.mxu0 0
    %2700 = vmatpush2.bf16.msra.mxu0 0
    %2701 = vmatprep.mubr.bf16.mxu0 0
    %2702 = vmatmul.mubr.bf16.gmra.mxu0 %v2667
    %v2703 = vpop.f32.mrf.mxu0
    %v2704 = vadd.f32 0.0, %v2703
    %v2705 = vpop.f32.mrf.mxu0
    %v2706 = vpop.f32.mrf.mxu0
    %v2707 = vadd.f32 0.0, %v2706
    %v2708 = vpop.f32.mrf.mxu0
    %2709 = vdwg.mxu0
    %v2711 = vunpack.c.l.b16 %v2654
    %v2712 = vpack.c.b16 %v2711, %v2658
    %2714 = vmatprep.subr.bf16.mxu0 0
    %2715 = vmatpush1.bf16.msra.mxu0 %v2240
    %2716 = vmatprep.subr.bf16.mxu0 0
    %2717 = vmatpush1.bf16.msra.mxu0 %v2239
    %2718 = vmatprep.subr.bf16.mxu0 0
    %2719 = vmatpush1.bf16.msra.mxu0 %v2238
    %2720 = vmatprep.subr.bf16.mxu0 0
    %2721 = vmatpush1.bf16.msra.mxu0 %v2237
    %2722 = vmatprep.subr.bf16.mxu0 0
    %2723 = vmatpush1.bf16.msra.mxu0 %v2236
    %2724 = vmatprep.subr.bf16.mxu0 0
    %2725 = vmatpush1.bf16.msra.mxu0 %v2235
    %2726 = vmatprep.subr.bf16.mxu0 0
    %2727 = vmatpush1.bf16.msra.mxu0 %v2234
    %2728 = vmatprep.subr.bf16.mxu0 0
    %2729 = vmatpush1.bf16.msra.mxu0 %v2233
    %2730 = vmatprep.subr.bf16.mxu0 0
    %2731 = vmatpush2.bf16.msra.mxu0 0
    %2732 = vmatprep.subr.bf16.mxu0 0
    %2733 = vmatpush2.bf16.msra.mxu0 0
    %2734 = vmatprep.subr.bf16.mxu0 0
    %2735 = vmatpush2.bf16.msra.mxu0 0
    %2736 = vmatprep.subr.bf16.mxu0 0
    %2737 = vmatpush2.bf16.msra.mxu0 0
    %2738 = vmatprep.subr.bf16.mxu0 0
    %2739 = vmatpush2.bf16.msra.mxu0 0
    %2740 = vmatprep.subr.bf16.mxu0 0
    %2741 = vmatpush2.bf16.msra.mxu0 0
    %2742 = vmatprep.subr.bf16.mxu0 0
    %2743 = vmatpush2.bf16.msra.mxu0 0
    %2744 = vmatprep.subr.bf16.mxu0 0
    %2745 = vmatpush2.bf16.msra.mxu0 0
    %2746 = vmatprep.mubr.bf16.mxu0 0
    %2747 = vmatmul.mubr.bf16.gmra.mxu0 %v2712
    %v2748 = vpop.f32.mrf.mxu0
    %v2749 = vadd.f32 %v2704, %v2748
    %v2750 = vpop.f32.mrf.mxu0
    %v2751 = vpop.f32.mrf.mxu0
    %v2752 = vadd.f32 %v2707, %v2751
    %v2753 = vpop.f32.mrf.mxu0
    %2754 = vdwg.mxu0
    %v2755 = vld [vmem:[%s2052] sm:$0xe]
    %v2757 = vunpack.c.l.b16 %v2755
    %v2758 = vpack.c.b16 %v2659, %v2757
    %v2759 = vrot.slane %v2758, 1
    %2761 = vmatprep.subr.bf16.mxu0 0
    %2762 = vmatpush1.bf16.msra.mxu0 %v2352
    %2763 = vmatprep.subr.bf16.mxu0 0
    %2764 = vmatpush1.bf16.msra.mxu0 %v2351
    %2765 = vmatprep.subr.bf16.mxu0 0
    %2766 = vmatpush1.bf16.msra.mxu0 %v2350
    %2767 = vmatprep.subr.bf16.mxu0 0
    %2768 = vmatpush1.bf16.msra.mxu0 %v2349
    %2769 = vmatprep.subr.bf16.mxu0 0
    %2770 = vmatpush1.bf16.msra.mxu0 %v2348
    %2771 = vmatprep.subr.bf16.mxu0 0
    %2772 = vmatpush1.bf16.msra.mxu0 %v2347
    %2773 = vmatprep.subr.bf16.mxu0 0
    %2774 = vmatpush1.bf16.msra.mxu0 %v2346
    %2775 = vmatprep.subr.bf16.mxu0 0
    %2776 = vmatpush1.bf16.msra.mxu0 %v2345
    %2777 = vmatprep.subr.bf16.mxu0 0
    %2778 = vmatpush2.bf16.msra.mxu0 0
    %2779 = vmatprep.subr.bf16.mxu0 0
    %2780 = vmatpush2.bf16.msra.mxu0 0
    %2781 = vmatprep.subr.bf16.mxu0 0
    %2782 = vmatpush2.bf16.msra.mxu0 0
    %2783 = vmatprep.subr.bf16.mxu0 0
    %2784 = vmatpush2.bf16.msra.mxu0 0
    %2785 = vmatprep.subr.bf16.mxu0 0
    %2786 = vmatpush2.bf16.msra.mxu0 0
    %2787 = vmatprep.subr.bf16.mxu0 0
    %2788 = vmatpush2.bf16.msra.mxu0 0
    %2789 = vmatprep.subr.bf16.mxu0 0
    %2790 = vmatpush2.bf16.msra.mxu0 0
    %2791 = vmatprep.subr.bf16.mxu0 0
    %2792 = vmatpush2.bf16.msra.mxu0 0
    %2793 = vmatprep.mubr.bf16.mxu0 0
    %2794 = vmatmul.mubr.bf16.gmra.mxu0 %v2759
    %v2795 = vpop.f32.mrf.mxu0
    %v2796 = vadd.f32 0.0, %v2795
    %v2797 = vpop.f32.mrf.mxu0
    %v2798 = vpop.f32.mrf.mxu0
    %v2799 = vadd.f32 0.0, %v2798
    %v2800 = vpop.f32.mrf.mxu0
    %2801 = vdwg.mxu0
    %v2802 = vadd.f32 %v2749, %v2796
    %v2803 = vadd.f32 %v2752, %v2799
    %v2804 = vld [vmem:[%s2052] sm:$0xe]
    %v2805 = vld [vmem:[%s2052 + $0x4] sm:$0xf]
    %v2806 = vld [vmem:[%s2052 + $0x8] sm:$0x1]
    %v2810 = vunpack.c.l.b16 %v2804
    %v2811 = vunpack.c.l.b16 %v2805
    %v2812 = vunpack.c.l.b16 %v2806
    %v2813 = vpack.c.b16 %v2811, %v2810
    %v2814 = vpack.c.b16 %v2812, %v2812
    %v2816 = vshrl.u32 %v2813, 16
    %v2818 = vrot.slane %v2816, 1
    %v2819 = vshll.u32 %v2813, 16
    %v2821 = vrot.slane %v2819, 2
    %v2822 = vor.u32 %v2818, %v2821
    %v2824 = vshll.u32 %v2814, 16
    %v2826 = vrot.slane %v2824, 2
    %v2827 = vsel %vm473, %v2822, %v2826
    %2829 = vmatprep.subr.bf16.mxu0 0
    %2830 = vmatpush1.bf16.msra.mxu0 %v2485
    %2831 = vmatprep.subr.bf16.mxu0 0
    %2832 = vmatpush1.bf16.msra.mxu0 %v2484
    %2833 = vmatprep.subr.bf16.mxu0 0
    %2834 = vmatpush1.bf16.msra.mxu0 %v2483
    %2835 = vmatprep.subr.bf16.mxu0 0
    %2836 = vmatpush1.bf16.msra.mxu0 %v2482
    %2837 = vmatprep.subr.bf16.mxu0 0
    %2838 = vmatpush1.bf16.msra.mxu0 %v2481
    %2839 = vmatprep.subr.bf16.mxu0 0
    %2840 = vmatpush1.bf16.msra.mxu0 %v2480
    %2841 = vmatprep.subr.bf16.mxu0 0
    %2842 = vmatpush1.bf16.msra.mxu0 %v2479
    %2843 = vmatprep.subr.bf16.mxu0 0
    %2844 = vmatpush1.bf16.msra.mxu0 %v2478
    %2845 = vmatprep.subr.bf16.mxu0 0
    %2846 = vmatpush2.bf16.msra.mxu0 0
    %2847 = vmatprep.subr.bf16.mxu0 0
    %2848 = vmatpush2.bf16.msra.mxu0 0
    %2849 = vmatprep.subr.bf16.mxu0 0
    %2850 = vmatpush2.bf16.msra.mxu0 0
    %2851 = vmatprep.subr.bf16.mxu0 0
    %2852 = vmatpush2.bf16.msra.mxu0 0
    %2853 = vmatprep.subr.bf16.mxu0 0
    %2854 = vmatpush2.bf16.msra.mxu0 0
    %2855 = vmatprep.subr.bf16.mxu0 0
    %2856 = vmatpush2.bf16.msra.mxu0 0
    %2857 = vmatprep.subr.bf16.mxu0 0
    %2858 = vmatpush2.bf16.msra.mxu0 0
    %2859 = vmatprep.subr.bf16.mxu0 0
    %2860 = vmatpush2.bf16.msra.mxu0 0
    %2861 = vmatprep.mubr.bf16.mxu0 0
    %2862 = vmatmul.mubr.bf16.gmra.mxu0 %v2827
    %v2863 = vpop.f32.mrf.mxu0
    %v2864 = vadd.f32 0.0, %v2863
    %v2865 = vpop.f32.mrf.mxu0
    %v2866 = vpop.f32.mrf.mxu0
    %v2867 = vadd.f32 0.0, %v2866
    %v2868 = vpop.f32.mrf.mxu0
    %2869 = vdwg.mxu0
    %v2870 = vadd.f32 %v2802, %v2864
    %v2871 = vadd.f32 %v2803, %v2867
    %v2872 = vld [vmem:[%s2052] sm:$0xc]
    %v2874 = vunpack.c.l.b16 %v2872
    %v2875 = vpack.c.b16 %v2811, %v2874
    %v2876 = vrot.slane %v2875, 2
    %v2877 = vrot.slane %v2814, 2
    %v2878 = vsel %vm600, %v2876, %v2877
    %2880 = vmatprep.subr.bf16.mxu0 0
    %2881 = vmatpush1.bf16.msra.mxu0 %v2601
    %2882 = vmatprep.subr.bf16.mxu0 0
    %2883 = vmatpush1.bf16.msra.mxu0 %v2600
    %2884 = vmatprep.subr.bf16.mxu0 0
    %2885 = vmatpush1.bf16.msra.mxu0 %v2599
    %2886 = vmatprep.subr.bf16.mxu0 0
    %2887 = vmatpush1.bf16.msra.mxu0 %v2598
    %2888 = vmatprep.subr.bf16.mxu0 0
    %2889 = vmatpush1.bf16.msra.mxu0 %v2597
    %2890 = vmatprep.subr.bf16.mxu0 0
    %2891 = vmatpush1.bf16.msra.mxu0 %v2596
    %2892 = vmatprep.subr.bf16.mxu0 0
    %2893 = vmatpush1.bf16.msra.mxu0 %v2595
    %2894 = vmatprep.subr.bf16.mxu0 0
    %2895 = vmatpush1.bf16.msra.mxu0 %v2594
    %2896 = vmatprep.subr.bf16.mxu0 0
    %2897 = vmatpush2.bf16.msra.mxu0 0
    %2898 = vmatprep.subr.bf16.mxu0 0
    %2899 = vmatpush2.bf16.msra.mxu0 0
    %2900 = vmatprep.subr.bf16.mxu0 0
    %2901 = vmatpush2.bf16.msra.mxu0 0
    %2902 = vmatprep.subr.bf16.mxu0 0
    %2903 = vmatpush2.bf16.msra.mxu0 0
    %2904 = vmatprep.subr.bf16.mxu0 0
    %2905 = vmatpush2.bf16.msra.mxu0 0
    %2906 = vmatprep.subr.bf16.mxu0 0
    %2907 = vmatpush2.bf16.msra.mxu0 0
    %2908 = vmatprep.subr.bf16.mxu0 0
    %2909 = vmatpush2.bf16.msra.mxu0 0
    %2910 = vmatprep.subr.bf16.mxu0 0
    %2911 = vmatpush2.bf16.msra.mxu0 0
    %2912 = vmatprep.mubr.bf16.mxu0 0
    %2913 = vmatmul.mubr.bf16.gmra.mxu0 %v2878
    %v2914 = vpop.f32.mrf.mxu0
    %v2915 = vadd.f32 0.0, %v2914
    %v2916 = vpop.f32.mrf.mxu0
    %v2917 = vpop.f32.mrf.mxu0
    %v2918 = vadd.f32 0.0, %v2917
    %v2919 = vpop.f32.mrf.mxu0
    %2920 = vdwg.mxu0
    %v2921 = vadd.f32 %v2870, %v2915
    %v2922 = vadd.f32 %v2871, %v2918
    %v2923 = vsel %vm967, %v2652, 0.0
    %v2924 = vadd.f32 %v2651, %v2923
    %v2925 = vrot.slane %v2924, 4
    %v2926 = vadd.f32 %v2924, %v2925
    %v2927 = vrot.slane %v2926, 2
    %v2928 = vadd.f32 %v2926, %v2927
    %v2929 = vrot.slane %v2928, 1
    %v2930 = vadd.f32 %v2928, %v2929
    %v2931 = vadd.f32 %v2930, 0.0
    %v2932 = vsel %vm967, %v2922, 0.0
    %v2933 = vadd.f32 %v2921, %v2932
    %v2934 = vrot.slane %v2933, 4
    %v2935 = vadd.f32 %v2933, %v2934
    %v2936 = vrot.slane %v2935, 2
    %v2937 = vadd.f32 %v2935, %v2936
    %v2938 = vrot.slane %v2937, 1
    %v2939 = vadd.f32 %v2937, %v2938
    %v2940 = vadd.f32 %v2931, %v2939
    %v2941 = vmul.f32 %v2940, %v986
    %v2942 = vsub.f32 %v2651, %v2941
    %v2943 = vsub.f32 %v2652, %v2941
    %v2944 = vmul.f32 %v2942, %v2942
    %v2945 = vmul.f32 %v2943, %v2943
    %v2946 = vsel %vm967, %v2945, 0.0
    %v2947 = vadd.f32 %v2944, %v2946
    %v2948 = vrot.slane %v2947, 4
    %v2949 = vadd.f32 %v2947, %v2948
    %v2950 = vrot.slane %v2949, 2
    %v2951 = vadd.f32 %v2949, %v2950
    %v2952 = vrot.slane %v2951, 1
    %v2953 = vadd.f32 %v2951, %v2952
    %v2954 = vadd.f32 %v2953, 0.0
    %v2955 = vsub.f32 %v2921, %v2941
    %v2956 = vsub.f32 %v2922, %v2941
    %v2957 = vmul.f32 %v2955, %v2955
    %v2958 = vmul.f32 %v2956, %v2956
    %v2959 = vsel %vm967, %v2958, 0.0
    %v2960 = vadd.f32 %v2957, %v2959
    %v2961 = vrot.slane %v2960, 4
    %v2962 = vadd.f32 %v2960, %v2961
    %v2963 = vrot.slane %v2962, 2
    %v2964 = vadd.f32 %v2962, %v2963
    %v2965 = vrot.slane %v2964, 1
    %v2966 = vadd.f32 %v2964, %v2965
    %v2967 = vadd.f32 %v2954, %v2966
    %v2968 = vmul.f32 %v2967, %v986
    %v2969 = vadd.f32 %v2968, 1e-05
    %v2970 = vrsqrt.pop %v2969
    %v2971 = vmul.f32 %v2942, %v2970
    %v2972 = vmul.f32 %v2943, %v2970
    %v2973 = vmax.f32 %v2971, 0.0
    %v2974 = vmax.f32 %v2972, 0.0
    %v2975 = vmul.f32 %v2955, %v2970
    %v2976 = vmul.f32 %v2956, %v2970
    %v2977 = vmax.f32 %v2975, 0.0
    %v2978 = vmax.f32 %v2976, 0.0
    %v2979 = vpack.c.bf16 %v2974, %v2973
    %v2981 = vunpack.c.l.b16 %v2979
    %v2982 = vunpack.c.h.b16 %v2979
    %v2983 = vpack.c.b16 %v2981, %v2981
    %v2984 = vpack.c.b16 %v2982, %v2982
    %v2986 = vshrl.u32 %v2983, 16
    %v2988 = vrot.slane %v2986, 6
    %v2989 = vshll.u32 %v2983, 16
    %v2991 = vrot.slane %v2989, 7
    %v2992 = vor.u32 %v2988, %v2991
    %v2993 = vrot.slane %v2992, 4
    %v2995 = vshrl.u32 %v2984, 16
    %v2997 = vrot.slane %v2995, 6
    %v2998 = vshll.u32 %v2984, 16
    %v3000 = vrot.slane %v2998, 7
    %v3001 = vor.u32 %v2997, %v3000
    %v3002 = vsel %vm1996, %v2993, %v3001
    %v3003 = vrot.slane %v2997, 4
    %v3007 = vld [vmem:[#allocation4] sm:$0xe]
    %v3008 = vsel %vm2019, %v2992, %v3007
    %3009 = vst [vmem:[#allocation4] sm:$0xe] %v3008
    %3010 = vst [vmem:[#allocation4 + $0x4] sm:$0xf] %v3002
    %vm3011 = vcmask 1040384
    %vm3012 = vmand %vm3011, %vm1031
    %v3013 = vld [vmem:[#allocation4 + $0x8] sm:$0x1]
    %v3014 = vsel %vm3012, %v3003, %v3013
    %3015 = vst [vmem:[#allocation4 + $0x8] sm:$0x1] %v3014
    %v3016 = vpack.c.bf16 %v2978, %v2977
    %v3018 = vunpack.c.l.b16 %v3016
    %v3019 = vunpack.c.h.b16 %v3016
    %v3020 = vpack.c.b16 %v3018, %v3018
    %v3021 = vpack.c.b16 %v3019, %v3019
    %v3023 = vshrl.u32 %v3020, 16
    %v3025 = vrot.slane %v3023, 6
    %v3026 = vshll.u32 %v3020, 16
    %v3028 = vrot.slane %v3026, 7
    %v3029 = vor.u32 %v3025, %v3028
    %v3030 = vrot.slane %v3029, 4
    %v3032 = vshrl.u32 %v3021, 16
    %v3034 = vrot.slane %v3032, 6
    %v3035 = vshll.u32 %v3021, 16
    %v3037 = vrot.slane %v3035, 7
    %v3038 = vor.u32 %v3034, %v3037
    %v3039 = vsel %vm1996, %v3030, %v3038
    %v3040 = vrot.slane %v3034, 4
    %s3044 = scalar_lea.vmem [#allocation4], 12
    %v3045 = vld [vmem:[%s3044] sm:$0xe]
    %v3046 = vsel %vm2019, %v3029, %v3045
    %3047 = vst [vmem:[%s3044] sm:$0xe] %v3046
    %3048 = vst [vmem:[%s3044 + $0x4] sm:$0xf] %v3039
    %v3049 = vld [vmem:[%s3044 + $0x8] sm:$0x1]
    %v3050 = vsel %vm3012, %v3040, %v3049
    %3051 = vst [vmem:[%s3044 + $0x8] sm:$0x1] %v3050
    %v3052 = vld [vmem:[#allocation4] sm:$0xf]
    %v3053 = vld [vmem:[#allocation4 + $0x4] sm:$0xf]
    %v3054 = vld [vmem:[#allocation10] sm:$0xf]
    %v3055 = vld [vmem:[#allocation10 + $0x4] sm:$0xf]
    %v3056 = vld [vmem:[#allocation10 + $0x8] sm:$0xf]
    %v3057 = vld [vmem:[#allocation10 + $0xc] sm:$0xf]
    %v3058 = vld [vmem:[#allocation10 + $0x10] sm:$0xf]
    %v3059 = vld [vmem:[#allocation10 + $0x14] sm:$0xf]
    %v3060 = vld [vmem:[#allocation10 + $0x18] sm:$0xf]
    %v3061 = vld [vmem:[#allocation10 + $0x1c] sm:$0xf]
    %v3062 = vld [vmem:[#allocation10 + $0x20] sm:$0xf]
    %v3063 = vld [vmem:[#allocation10 + $0x24] sm:$0xf]
    %v3064 = vld [vmem:[#allocation10 + $0x28] sm:$0xf]
    %v3065 = vld [vmem:[#allocation10 + $0x2c] sm:$0xf]
    %v3066 = vld [vmem:[#allocation10 + $0x30] sm:$0xf]
    %v3067 = vld [vmem:[#allocation10 + $0x34] sm:$0xf]
    %v3068 = vld [vmem:[#allocation10 + $0x38] sm:$0xf]
    %v3069 = vld [vmem:[#allocation10 + $0x3c] sm:$0xf]
    %v3070 = vld [vmem:[#allocation4 + $0x8] sm:$0x1]
    %s3071 = scalar_lea.vmem [#allocation10], 64
    %v3072 = vld [vmem:[%s3071] sm:$0xf]
    %v3073 = vld [vmem:[%s3071 + $0x4] sm:$0xf]
    %v3074 = vld [vmem:[%s3071 + $0x8] sm:$0xf]
    %v3075 = vld [vmem:[%s3071 + $0xc] sm:$0xf]
    %v3076 = vld [vmem:[%s3071 + $0x10] sm:$0xf]
    %v3077 = vld [vmem:[%s3071 + $0x14] sm:$0xf]
    %v3078 = vld [vmem:[%s3071 + $0x18] sm:$0xf]
    %v3079 = vld [vmem:[%s3071 + $0x1c] sm:$0xf]
    %v3080 = vld [vmem:[%s3071 + $0x20] sm:$0xf]
    %v3081 = vld [vmem:[%s3071 + $0x24] sm:$0xf]
    %v3082 = vld [vmem:[%s3071 + $0x28] sm:$0xf]
    %v3083 = vld [vmem:[%s3071 + $0x2c] sm:$0xf]
    %v3084 = vld [vmem:[%s3071 + $0x30] sm:$0xf]
    %v3085 = vld [vmem:[%s3071 + $0x34] sm:$0xf]
    %v3086 = vld [vmem:[%s3071 + $0x38] sm:$0xf]
    %v3087 = vld [vmem:[%s3071 + $0x3c] sm:$0xf]
    %v3091 = vunpack.c.l.b16 %v3052
    %v3092 = vunpack.c.l.b16 %v3053
    %v3093 = vunpack.c.l.b16 %v3070
    %v3094 = vpack.c.b16 %v3092, %v3091
    %v3095 = vpack.c.b16 %v3093, %v3093
    %vm3096 = vsmask.f32 7424
    %v3098 = vshrl.u32 %v3094, 16
    %v3100 = vshll.u32 %v3094, 16
    %v3102 = vrot.slane %v3100, 1
    %v3103 = vor.u32 %v3098, %v3102
    %v3105 = vshll.u32 %v3095, 16
    %v3107 = vrot.slane %v3105, 1
    %v3108 = vsel %vm3096, %v3103, %v3107
    %v3126 = vunpack.c.l.b16 %v3072
    %v3127 = vunpack.c.l.b16 %v3073
    %v3128 = vunpack.c.l.b16 %v3074
    %v3129 = vunpack.c.l.b16 %v3075
    %v3130 = vunpack.c.l.b16 %v3076
    %v3131 = vunpack.c.l.b16 %v3077
    %v3132 = vunpack.c.l.b16 %v3078
    %v3133 = vunpack.c.l.b16 %v3079
    %v3134 = vunpack.c.l.b16 %v3080
    %v3135 = vunpack.c.l.b16 %v3081
    %v3136 = vunpack.c.l.b16 %v3082
    %v3137 = vunpack.c.l.b16 %v3083
    %v3138 = vunpack.c.l.b16 %v3084
    %v3139 = vunpack.c.l.b16 %v3085
    %v3140 = vunpack.c.l.b16 %v3086
    %v3141 = vunpack.c.l.b16 %v3087
    %v3142 = vpack.c.b16 %v3127, %v3126
    %v3143 = vpack.c.b16 %v3129, %v3128
    %v3144 = vpack.c.b16 %v3131, %v3130
    %v3145 = vpack.c.b16 %v3133, %v3132
    %v3146 = vpack.c.b16 %v3135, %v3134
    %v3147 = vpack.c.b16 %v3137, %v3136
    %v3148 = vpack.c.b16 %v3139, %v3138
    %v3149 = vpack.c.b16 %v3141, %v3140
    %3158 = vmatprep.subr.bf16.mxu0 0
    %3159 = vmatpush1.bf16.msra.mxu0 %v3149
    %3160 = vmatprep.subr.bf16.mxu0 0
    %3161 = vmatpush1.bf16.msra.mxu0 %v3148
    %3162 = vmatprep.subr.bf16.mxu0 0
    %3163 = vmatpush1.bf16.msra.mxu0 %v3147
    %3164 = vmatprep.subr.bf16.mxu0 0
    %3165 = vmatpush1.bf16.msra.mxu0 %v3146
    %3166 = vmatprep.subr.bf16.mxu0 0
    %3167 = vmatpush1.bf16.msra.mxu0 %v3145
    %3168 = vmatprep.subr.bf16.mxu0 0
    %3169 = vmatpush1.bf16.msra.mxu0 %v3144
    %3170 = vmatprep.subr.bf16.mxu0 0
    %3171 = vmatpush1.bf16.msra.mxu0 %v3143
    %3172 = vmatprep.subr.bf16.mxu0 0
    %3173 = vmatpush1.bf16.msra.mxu0 %v3142
    %3174 = vmatprep.subr.bf16.mxu0 0
    %3175 = vmatpush2.bf16.msra.mxu0 0
    %3176 = vmatprep.subr.bf16.mxu0 0
    %3177 = vmatpush2.bf16.msra.mxu0 0
    %3178 = vmatprep.subr.bf16.mxu0 0
    %3179 = vmatpush2.bf16.msra.mxu0 0
    %3180 = vmatprep.subr.bf16.mxu0 0
    %3181 = vmatpush2.bf16.msra.mxu0 0
    %3182 = vmatprep.subr.bf16.mxu0 0
    %3183 = vmatpush2.bf16.msra.mxu0 0
    %3184 = vmatprep.subr.bf16.mxu0 0
    %3185 = vmatpush2.bf16.msra.mxu0 0
    %3186 = vmatprep.subr.bf16.mxu0 0
    %3187 = vmatpush2.bf16.msra.mxu0 0
    %3188 = vmatprep.subr.bf16.mxu0 0
    %3189 = vmatpush2.bf16.msra.mxu0 0
    %3190 = vmatprep.mubr.bf16.mxu0 0
    %3191 = vmatmul.mubr.bf16.gmra.mxu0 %v3108
    %v3192 = vpop.f32.mrf.mxu0
    %v3193 = vadd.f32 0.0, %v3192
    %v3194 = vpop.f32.mrf.mxu0
    %v3195 = vpop.f32.mrf.mxu0
    %v3196 = vadd.f32 0.0, %v3195
    %v3197 = vpop.f32.mrf.mxu0
    %3198 = vdwg.mxu0
    %v3216 = vunpack.c.l.b16 %v3054
    %v3217 = vunpack.c.l.b16 %v3055
    %v3218 = vunpack.c.l.b16 %v3056
    %v3219 = vunpack.c.l.b16 %v3057
    %v3220 = vunpack.c.l.b16 %v3058
    %v3221 = vunpack.c.l.b16 %v3059
    %v3222 = vunpack.c.l.b16 %v3060
    %v3223 = vunpack.c.l.b16 %v3061
    %v3224 = vunpack.c.l.b16 %v3062
    %v3225 = vunpack.c.l.b16 %v3063
    %v3226 = vunpack.c.l.b16 %v3064
    %v3227 = vunpack.c.l.b16 %v3065
    %v3228 = vunpack.c.l.b16 %v3066
    %v3229 = vunpack.c.l.b16 %v3067
    %v3230 = vunpack.c.l.b16 %v3068
    %v3231 = vunpack.c.l.b16 %v3069
    %v3232 = vpack.c.b16 %v3217, %v3216
    %v3233 = vpack.c.b16 %v3219, %v3218
    %v3234 = vpack.c.b16 %v3221, %v3220
    %v3235 = vpack.c.b16 %v3223, %v3222
    %v3236 = vpack.c.b16 %v3225, %v3224
    %v3237 = vpack.c.b16 %v3227, %v3226
    %v3238 = vpack.c.b16 %v3229, %v3228
    %v3239 = vpack.c.b16 %v3231, %v3230
    %3248 = vmatprep.subr.bf16.mxu0 0
    %3249 = vmatpush1.bf16.msra.mxu0 %v3239
    %3250 = vmatprep.subr.bf16.mxu0 0
    %3251 = vmatpush1.bf16.msra.mxu0 %v3238
    %3252 = vmatprep.subr.bf16.mxu0 0
    %3253 = vmatpush1.bf16.msra.mxu0 %v3237
    %3254 = vmatprep.subr.bf16.mxu0 0
    %3255 = vmatpush1.bf16.msra.mxu0 %v3236
    %3256 = vmatprep.subr.bf16.mxu0 0
    %3257 = vmatpush1.bf16.msra.mxu0 %v3235
    %3258 = vmatprep.subr.bf16.mxu0 0
    %3259 = vmatpush1.bf16.msra.mxu0 %v3234
    %3260 = vmatprep.subr.bf16.mxu0 0
    %3261 = vmatpush1.bf16.msra.mxu0 %v3233
    %3262 = vmatprep.subr.bf16.mxu0 0
    %3263 = vmatpush1.bf16.msra.mxu0 %v3232
    %3264 = vmatprep.subr.bf16.mxu0 0
    %3265 = vmatpush2.bf16.msra.mxu0 0
    %3266 = vmatprep.subr.bf16.mxu0 0
    %3267 = vmatpush2.bf16.msra.mxu0 0
    %3268 = vmatprep.subr.bf16.mxu0 0
    %3269 = vmatpush2.bf16.msra.mxu0 0
    %3270 = vmatprep.subr.bf16.mxu0 0
    %3271 = vmatpush2.bf16.msra.mxu0 0
    %3272 = vmatprep.subr.bf16.mxu0 0
    %3273 = vmatpush2.bf16.msra.mxu0 0
    %3274 = vmatprep.subr.bf16.mxu0 0
    %3275 = vmatpush2.bf16.msra.mxu0 0
    %3276 = vmatprep.subr.bf16.mxu0 0
    %3277 = vmatpush2.bf16.msra.mxu0 0
    %3278 = vmatprep.subr.bf16.mxu0 0
    %3279 = vmatpush2.bf16.msra.mxu0 0
    %3280 = vmatprep.mubr.bf16.mxu0 0
    %3281 = vmatmul.mubr.bf16.gmra.mxu0 %v3094
    %v3282 = vpop.f32.mrf.mxu0
    %v3283 = vadd.f32 %v3193, %v3282
    %v3284 = vpop.f32.mrf.mxu0
    %v3285 = vpop.f32.mrf.mxu0
    %v3286 = vadd.f32 %v3196, %v3285
    %v3287 = vpop.f32.mrf.mxu0
    %3288 = vdwg.mxu0
    %v3289 = vld [vmem:[#allocation4] sm:$0xe]
    %s3290 = scalar_lea.vmem [#allocation10], 128
    %v3291 = vld [vmem:[%s3290] sm:$0xf]
    %v3292 = vld [vmem:[%s3290 + $0x4] sm:$0xf]
    %v3293 = vld [vmem:[%s3290 + $0x8] sm:$0xf]
    %v3294 = vld [vmem:[%s3290 + $0xc] sm:$0xf]
    %v3295 = vld [vmem:[%s3290 + $0x10] sm:$0xf]
    %v3296 = vld [vmem:[%s3290 + $0x14] sm:$0xf]
    %v3297 = vld [vmem:[%s3290 + $0x18] sm:$0xf]
    %v3298 = vld [vmem:[%s3290 + $0x1c] sm:$0xf]
    %v3299 = vld [vmem:[%s3290 + $0x20] sm:$0xf]
    %v3300 = vld [vmem:[%s3290 + $0x24] sm:$0xf]
    %v3301 = vld [vmem:[%s3290 + $0x28] sm:$0xf]
    %v3302 = vld [vmem:[%s3290 + $0x2c] sm:$0xf]
    %v3303 = vld [vmem:[%s3290 + $0x30] sm:$0xf]
    %v3304 = vld [vmem:[%s3290 + $0x34] sm:$0xf]
    %v3305 = vld [vmem:[%s3290 + $0x38] sm:$0xf]
    %v3306 = vld [vmem:[%s3290 + $0x3c] sm:$0xf]
    %v3308 = vunpack.c.l.b16 %v3289
    %v3309 = vpack.c.b16 %v3092, %v3308
    %vm3310 = vcmask 1046528
    %v3311 = vrot.slane %v3309, 1
    %v3312 = vrot.slane %v3095, 1
    %v3313 = vsel %vm3310, %v3311, %v3312
    %v3331 = vunpack.c.l.b16 %v3291
    %v3332 = vunpack.c.l.b16 %v3292
    %v3333 = vunpack.c.l.b16 %v3293
    %v3334 = vunpack.c.l.b16 %v3294
    %v3335 = vunpack.c.l.b16 %v3295
    %v3336 = vunpack.c.l.b16 %v3296
    %v3337 = vunpack.c.l.b16 %v3297
    %v3338 = vunpack.c.l.b16 %v3298
    %v3339 = vunpack.c.l.b16 %v3299
    %v3340 = vunpack.c.l.b16 %v3300
    %v3341 = vunpack.c.l.b16 %v3301
    %v3342 = vunpack.c.l.b16 %v3302
    %v3343 = vunpack.c.l.b16 %v3303
    %v3344 = vunpack.c.l.b16 %v3304
    %v3345 = vunpack.c.l.b16 %v3305
    %v3346 = vunpack.c.l.b16 %v3306
    %v3347 = vpack.c.b16 %v3332, %v3331
    %v3348 = vpack.c.b16 %v3334, %v3333
    %v3349 = vpack.c.b16 %v3336, %v3335
    %v3350 = vpack.c.b16 %v3338, %v3337
    %v3351 = vpack.c.b16 %v3340, %v3339
    %v3352 = vpack.c.b16 %v3342, %v3341
    %v3353 = vpack.c.b16 %v3344, %v3343
    %v3354 = vpack.c.b16 %v3346, %v3345
    %3363 = vmatprep.subr.bf16.mxu0 0
    %3364 = vmatpush1.bf16.msra.mxu0 %v3354
    %3365 = vmatprep.subr.bf16.mxu0 0
    %3366 = vmatpush1.bf16.msra.mxu0 %v3353
    %3367 = vmatprep.subr.bf16.mxu0 0
    %3368 = vmatpush1.bf16.msra.mxu0 %v3352
    %3369 = vmatprep.subr.bf16.mxu0 0
    %3370 = vmatpush1.bf16.msra.mxu0 %v3351
    %3371 = vmatprep.subr.bf16.mxu0 0
    %3372 = vmatpush1.bf16.msra.mxu0 %v3350
    %3373 = vmatprep.subr.bf16.mxu0 0
    %3374 = vmatpush1.bf16.msra.mxu0 %v3349
    %3375 = vmatprep.subr.bf16.mxu0 0
    %3376 = vmatpush1.bf16.msra.mxu0 %v3348
    %3377 = vmatprep.subr.bf16.mxu0 0
    %3378 = vmatpush1.bf16.msra.mxu0 %v3347
    %3379 = vmatprep.subr.bf16.mxu0 0
    %3380 = vmatpush2.bf16.msra.mxu0 0
    %3381 = vmatprep.subr.bf16.mxu0 0
    %3382 = vmatpush2.bf16.msra.mxu0 0
    %3383 = vmatprep.subr.bf16.mxu0 0
    %3384 = vmatpush2.bf16.msra.mxu0 0
    %3385 = vmatprep.subr.bf16.mxu0 0
    %3386 = vmatpush2.bf16.msra.mxu0 0
    %3387 = vmatprep.subr.bf16.mxu0 0
    %3388 = vmatpush2.bf16.msra.mxu0 0
    %3389 = vmatprep.subr.bf16.mxu0 0
    %3390 = vmatpush2.bf16.msra.mxu0 0
    %3391 = vmatprep.subr.bf16.mxu0 0
    %3392 = vmatpush2.bf16.msra.mxu0 0
    %3393 = vmatprep.subr.bf16.mxu0 0
    %3394 = vmatpush2.bf16.msra.mxu0 0
    %3395 = vmatprep.mubr.bf16.mxu0 0
    %3396 = vmatmul.mubr.bf16.gmra.mxu0 %v3313
    %v3397 = vpop.f32.mrf.mxu0
    %v3398 = vadd.f32 0.0, %v3397
    %v3399 = vpop.f32.mrf.mxu0
    %v3400 = vpop.f32.mrf.mxu0
    %v3401 = vadd.f32 0.0, %v3400
    %v3402 = vpop.f32.mrf.mxu0
    %3403 = vdwg.mxu0
    %v3404 = vadd.f32 %v3283, %v3398
    %v3405 = vadd.f32 %v3286, %v3401
    %v3406 = vld [vmem:[#allocation4 + $0x8] sm:$0x3]
    %s3407 = scalar_lea.vmem [#allocation10], 192
    %v3408 = vld [vmem:[%s3407] sm:$0xf]
    %v3409 = vld [vmem:[%s3407 + $0x4] sm:$0xf]
    %v3410 = vld [vmem:[%s3407 + $0x8] sm:$0xf]
    %v3411 = vld [vmem:[%s3407 + $0xc] sm:$0xf]
    %v3412 = vld [vmem:[%s3407 + $0x10] sm:$0xf]
    %v3413 = vld [vmem:[%s3407 + $0x14] sm:$0xf]
    %v3414 = vld [vmem:[%s3407 + $0x18] sm:$0xf]
    %v3415 = vld [vmem:[%s3407 + $0x1c] sm:$0xf]
    %v3416 = vld [vmem:[%s3407 + $0x20] sm:$0xf]
    %v3417 = vld [vmem:[%s3407 + $0x24] sm:$0xf]
    %v3418 = vld [vmem:[%s3407 + $0x28] sm:$0xf]
    %v3419 = vld [vmem:[%s3407 + $0x2c] sm:$0xf]
    %v3420 = vld [vmem:[%s3407 + $0x30] sm:$0xf]
    %v3421 = vld [vmem:[%s3407 + $0x34] sm:$0xf]
    %v3422 = vld [vmem:[%s3407 + $0x38] sm:$0xf]
    %v3423 = vld [vmem:[%s3407 + $0x3c] sm:$0xf]
    %v3425 = vunpack.c.l.b16 %v3406
    %v3426 = vpack.c.b16 %v3425, %v3425
    %v3428 = vshrl.u32 %v3309, 16
    %v3430 = vrot.slane %v3428, 1
    %v3431 = vshll.u32 %v3309, 16
    %v3433 = vrot.slane %v3431, 2
    %v3434 = vor.u32 %v3430, %v3433
    %v3436 = vshrl.u32 %v3426, 16
    %v3438 = vrot.slane %v3436, 1
    %v3439 = vshll.u32 %v3426, 16
    %v3441 = vrot.slane %v3439, 2
    %v3442 = vor.u32 %v3438, %v3441
    %v3443 = vsel %vm473, %v3434, %v3442
    %v3461 = vunpack.c.l.b16 %v3408
    %v3462 = vunpack.c.l.b16 %v3409
    %v3463 = vunpack.c.l.b16 %v3410
    %v3464 = vunpack.c.l.b16 %v3411
    %v3465 = vunpack.c.l.b16 %v3412
    %v3466 = vunpack.c.l.b16 %v3413
    %v3467 = vunpack.c.l.b16 %v3414
    %v3468 = vunpack.c.l.b16 %v3415
    %v3469 = vunpack.c.l.b16 %v3416
    %v3470 = vunpack.c.l.b16 %v3417
    %v3471 = vunpack.c.l.b16 %v3418
    %v3472 = vunpack.c.l.b16 %v3419
    %v3473 = vunpack.c.l.b16 %v3420
    %v3474 = vunpack.c.l.b16 %v3421
    %v3475 = vunpack.c.l.b16 %v3422
    %v3476 = vunpack.c.l.b16 %v3423
    %v3477 = vpack.c.b16 %v3462, %v3461
    %v3478 = vpack.c.b16 %v3464, %v3463
    %v3479 = vpack.c.b16 %v3466, %v3465
    %v3480 = vpack.c.b16 %v3468, %v3467
    %v3481 = vpack.c.b16 %v3470, %v3469
    %v3482 = vpack.c.b16 %v3472, %v3471
    %v3483 = vpack.c.b16 %v3474, %v3473
    %v3484 = vpack.c.b16 %v3476, %v3475
    %3493 = vmatprep.subr.bf16.mxu0 0
    %3494 = vmatpush1.bf16.msra.mxu0 %v3484
    %3495 = vmatprep.subr.bf16.mxu0 0
    %3496 = vmatpush1.bf16.msra.mxu0 %v3483
    %3497 = vmatprep.subr.bf16.mxu0 0
    %3498 = vmatpush1.bf16.msra.mxu0 %v3482
    %3499 = vmatprep.subr.bf16.mxu0 0
    %3500 = vmatpush1.bf16.msra.mxu0 %v3481
    %3501 = vmatprep.subr.bf16.mxu0 0
    %3502 = vmatpush1.bf16.msra.mxu0 %v3480
    %3503 = vmatprep.subr.bf16.mxu0 0
    %3504 = vmatpush1.bf16.msra.mxu0 %v3479
    %3505 = vmatprep.subr.bf16.mxu0 0
    %3506 = vmatpush1.bf16.msra.mxu0 %v3478
    %3507 = vmatprep.subr.bf16.mxu0 0
    %3508 = vmatpush1.bf16.msra.mxu0 %v3477
    %3509 = vmatprep.subr.bf16.mxu0 0
    %3510 = vmatpush2.bf16.msra.mxu0 0
    %3511 = vmatprep.subr.bf16.mxu0 0
    %3512 = vmatpush2.bf16.msra.mxu0 0
    %3513 = vmatprep.subr.bf16.mxu0 0
    %3514 = vmatpush2.bf16.msra.mxu0 0
    %3515 = vmatprep.subr.bf16.mxu0 0
    %3516 = vmatpush2.bf16.msra.mxu0 0
    %3517 = vmatprep.subr.bf16.mxu0 0
    %3518 = vmatpush2.bf16.msra.mxu0 0
    %3519 = vmatprep.subr.bf16.mxu0 0
    %3520 = vmatpush2.bf16.msra.mxu0 0
    %3521 = vmatprep.subr.bf16.mxu0 0
    %3522 = vmatpush2.bf16.msra.mxu0 0
    %3523 = vmatprep.subr.bf16.mxu0 0
    %3524 = vmatpush2.bf16.msra.mxu0 0
    %3525 = vmatprep.mubr.bf16.mxu0 0
    %3526 = vmatmul.mubr.bf16.gmra.mxu0 %v3443
    %v3527 = vpop.f32.mrf.mxu0
    %v3528 = vadd.f32 0.0, %v3527
    %v3529 = vpop.f32.mrf.mxu0
    %v3530 = vpop.f32.mrf.mxu0
    %v3531 = vadd.f32 0.0, %v3530
    %v3532 = vpop.f32.mrf.mxu0
    %3533 = vdwg.mxu0
    %v3534 = vadd.f32 %v3404, %v3528
    %v3535 = vadd.f32 %v3405, %v3531
    %v3536 = vld [vmem:[#allocation4] sm:$0xc]
    %s3537 = scalar_lea.vmem [#allocation10], 256
    %v3538 = vld [vmem:[%s3537] sm:$0xf]
    %v3539 = vld [vmem:[%s3537 + $0x4] sm:$0xf]
    %v3540 = vld [vmem:[%s3537 + $0x8] sm:$0xf]
    %v3541 = vld [vmem:[%s3537 + $0xc] sm:$0xf]
    %v3542 = vld [vmem:[%s3537 + $0x10] sm:$0xf]
    %v3543 = vld [vmem:[%s3537 + $0x14] sm:$0xf]
    %v3544 = vld [vmem:[%s3537 + $0x18] sm:$0xf]
    %v3545 = vld [vmem:[%s3537 + $0x1c] sm:$0xf]
    %v3546 = vld [vmem:[%s3537 + $0x20] sm:$0xf]
    %v3547 = vld [vmem:[%s3537 + $0x24] sm:$0xf]
    %v3548 = vld [vmem:[%s3537 + $0x28] sm:$0xf]
    %v3549 = vld [vmem:[%s3537 + $0x2c] sm:$0xf]
    %v3550 = vld [vmem:[%s3537 + $0x30] sm:$0xf]
    %v3551 = vld [vmem:[%s3537 + $0x34] sm:$0xf]
    %v3552 = vld [vmem:[%s3537 + $0x38] sm:$0xf]
    %v3553 = vld [vmem:[%s3537 + $0x3c] sm:$0xf]
    %v3555 = vunpack.c.l.b16 %v3536
    %v3556 = vpack.c.b16 %v3092, %v3555
    %v3557 = vrot.slane %v3556, 2
    %v3558 = vrot.slane %v3426, 2
    %v3559 = vsel %vm600, %v3557, %v3558
    %v3577 = vunpack.c.l.b16 %v3538
    %v3578 = vunpack.c.l.b16 %v3539
    %v3579 = vunpack.c.l.b16 %v3540
    %v3580 = vunpack.c.l.b16 %v3541
    %v3581 = vunpack.c.l.b16 %v3542
    %v3582 = vunpack.c.l.b16 %v3543
    %v3583 = vunpack.c.l.b16 %v3544
    %v3584 = vunpack.c.l.b16 %v3545
    %v3585 = vunpack.c.l.b16 %v3546
    %v3586 = vunpack.c.l.b16 %v3547
    %v3587 = vunpack.c.l.b16 %v3548
    %v3588 = vunpack.c.l.b16 %v3549
    %v3589 = vunpack.c.l.b16 %v3550
    %v3590 = vunpack.c.l.b16 %v3551
    %v3591 = vunpack.c.l.b16 %v3552
    %v3592 = vunpack.c.l.b16 %v3553
    %v3593 = vpack.c.b16 %v3578, %v3577
    %v3594 = vpack.c.b16 %v3580, %v3579
    %v3595 = vpack.c.b16 %v3582, %v3581
    %v3596 = vpack.c.b16 %v3584, %v3583
    %v3597 = vpack.c.b16 %v3586, %v3585
    %v3598 = vpack.c.b16 %v3588, %v3587
    %v3599 = vpack.c.b16 %v3590, %v3589
    %v3600 = vpack.c.b16 %v3592, %v3591
    %3609 = vmatprep.subr.bf16.mxu0 0
    %3610 = vmatpush1.bf16.msra.mxu0 %v3600
    %3611 = vmatprep.subr.bf16.mxu0 0
    %3612 = vmatpush1.bf16.msra.mxu0 %v3599
    %3613 = vmatprep.subr.bf16.mxu0 0
    %3614 = vmatpush1.bf16.msra.mxu0 %v3598
    %3615 = vmatprep.subr.bf16.mxu0 0
    %3616 = vmatpush1.bf16.msra.mxu0 %v3597
    %3617 = vmatprep.subr.bf16.mxu0 0
    %3618 = vmatpush1.bf16.msra.mxu0 %v3596
    %3619 = vmatprep.subr.bf16.mxu0 0
    %3620 = vmatpush1.bf16.msra.mxu0 %v3595
    %3621 = vmatprep.subr.bf16.mxu0 0
    %3622 = vmatpush1.bf16.msra.mxu0 %v3594
    %3623 = vmatprep.subr.bf16.mxu0 0
    %3624 = vmatpush1.bf16.msra.mxu0 %v3593
    %3625 = vmatprep.subr.bf16.mxu0 0
    %3626 = vmatpush2.bf16.msra.mxu0 0
    %3627 = vmatprep.subr.bf16.mxu0 0
    %3628 = vmatpush2.bf16.msra.mxu0 0
    %3629 = vmatprep.subr.bf16.mxu0 0
    %3630 = vmatpush2.bf16.msra.mxu0 0
    %3631 = vmatprep.subr.bf16.mxu0 0
    %3632 = vmatpush2.bf16.msra.mxu0 0
    %3633 = vmatprep.subr.bf16.mxu0 0
    %3634 = vmatpush2.bf16.msra.mxu0 0
    %3635 = vmatprep.subr.bf16.mxu0 0
    %3636 = vmatpush2.bf16.msra.mxu0 0
    %3637 = vmatprep.subr.bf16.mxu0 0
    %3638 = vmatpush2.bf16.msra.mxu0 0
    %3639 = vmatprep.subr.bf16.mxu0 0
    %3640 = vmatpush2.bf16.msra.mxu0 0
    %3641 = vmatprep.mubr.bf16.mxu0 0
    %3642 = vmatmul.mubr.bf16.gmra.mxu0 %v3559
    %v3643 = vpop.f32.mrf.mxu0
    %v3644 = vadd.f32 0.0, %v3643
    %v3645 = vpop.f32.mrf.mxu0
    %v3646 = vpop.f32.mrf.mxu0
    %v3647 = vadd.f32 0.0, %v3646
    %v3648 = vpop.f32.mrf.mxu0
    %3649 = vdwg.mxu0
    %v3650 = vadd.f32 %v3534, %v3644
    %v3651 = vadd.f32 %v3535, %v3647
    %v3652 = vld [vmem:[%s3044] sm:$0xf]
    %v3653 = vld [vmem:[%s3044 + $0x4] sm:$0xf]
    %v3654 = vld [vmem:[%s3044 + $0x8] sm:$0x1]
    %v3658 = vunpack.c.l.b16 %v3652
    %v3659 = vunpack.c.l.b16 %v3653
    %v3660 = vunpack.c.l.b16 %v3654
    %v3661 = vpack.c.b16 %v3659, %v3658
    %v3662 = vpack.c.b16 %v3660, %v3660
    %v3664 = vshrl.u32 %v3661, 16
    %v3666 = vshll.u32 %v3661, 16
    %v3668 = vrot.slane %v3666, 1
    %v3669 = vor.u32 %v3664, %v3668
    %v3671 = vshll.u32 %v3662, 16
    %v3673 = vrot.slane %v3671, 1
    %v3674 = vsel %vm3096, %v3669, %v3673
    %3676 = vmatprep.subr.bf16.mxu0 0
    %3677 = vmatpush1.bf16.msra.mxu0 %v3149
    %3678 = vmatprep.subr.bf16.mxu0 0
    %3679 = vmatpush1.bf16.msra.mxu0 %v3148
    %3680 = vmatprep.subr.bf16.mxu0 0
    %3681 = vmatpush1.bf16.msra.mxu0 %v3147
    %3682 = vmatprep.subr.bf16.mxu0 0
    %3683 = vmatpush1.bf16.msra.mxu0 %v3146
    %3684 = vmatprep.subr.bf16.mxu0 0
    %3685 = vmatpush1.bf16.msra.mxu0 %v3145
    %3686 = vmatprep.subr.bf16.mxu0 0
    %3687 = vmatpush1.bf16.msra.mxu0 %v3144
    %3688 = vmatprep.subr.bf16.mxu0 0
    %3689 = vmatpush1.bf16.msra.mxu0 %v3143
    %3690 = vmatprep.subr.bf16.mxu0 0
    %3691 = vmatpush1.bf16.msra.mxu0 %v3142
    %3692 = vmatprep.subr.bf16.mxu0 0
    %3693 = vmatpush2.bf16.msra.mxu0 0
    %3694 = vmatprep.subr.bf16.mxu0 0
    %3695 = vmatpush2.bf16.msra.mxu0 0
    %3696 = vmatprep.subr.bf16.mxu0 0
    %3697 = vmatpush2.bf16.msra.mxu0 0
    %3698 = vmatprep.subr.bf16.mxu0 0
    %3699 = vmatpush2.bf16.msra.mxu0 0
    %3700 = vmatprep.subr.bf16.mxu0 0
    %3701 = vmatpush2.bf16.msra.mxu0 0
    %3702 = vmatprep.subr.bf16.mxu0 0
    %3703 = vmatpush2.bf16.msra.mxu0 0
    %3704 = vmatprep.subr.bf16.mxu0 0
    %3705 = vmatpush2.bf16.msra.mxu0 0
    %3706 = vmatprep.subr.bf16.mxu0 0
    %3707 = vmatpush2.bf16.msra.mxu0 0
    %3708 = vmatprep.mubr.bf16.mxu0 0
    %3709 = vmatmul.mubr.bf16.gmra.mxu0 %v3674
    %v3710 = vpop.f32.mrf.mxu0
    %v3711 = vadd.f32 0.0, %v3710
    %v3712 = vpop.f32.mrf.mxu0
    %v3713 = vpop.f32.mrf.mxu0
    %v3714 = vadd.f32 0.0, %v3713
    %v3715 = vpop.f32.mrf.mxu0
    %3716 = vdwg.mxu0
    %3718 = vmatprep.subr.bf16.mxu0 0
    %3719 = vmatpush1.bf16.msra.mxu0 %v3239
    %3720 = vmatprep.subr.bf16.mxu0 0
    %3721 = vmatpush1.bf16.msra.mxu0 %v3238
    %3722 = vmatprep.subr.bf16.mxu0 0
    %3723 = vmatpush1.bf16.msra.mxu0 %v3237
    %3724 = vmatprep.subr.bf16.mxu0 0
    %3725 = vmatpush1.bf16.msra.mxu0 %v3236
    %3726 = vmatprep.subr.bf16.mxu0 0
    %3727 = vmatpush1.bf16.msra.mxu0 %v3235
    %3728 = vmatprep.subr.bf16.mxu0 0
    %3729 = vmatpush1.bf16.msra.mxu0 %v3234
    %3730 = vmatprep.subr.bf16.mxu0 0
    %3731 = vmatpush1.bf16.msra.mxu0 %v3233
    %3732 = vmatprep.subr.bf16.mxu0 0
    %3733 = vmatpush1.bf16.msra.mxu0 %v3232
    %3734 = vmatprep.subr.bf16.mxu0 0
    %3735 = vmatpush2.bf16.msra.mxu0 0
    %3736 = vmatprep.subr.bf16.mxu0 0
    %3737 = vmatpush2.bf16.msra.mxu0 0
    %3738 = vmatprep.subr.bf16.mxu0 0
    %3739 = vmatpush2.bf16.msra.mxu0 0
    %3740 = vmatprep.subr.bf16.mxu0 0
    %3741 = vmatpush2.bf16.msra.mxu0 0
    %3742 = vmatprep.subr.bf16.mxu0 0
    %3743 = vmatpush2.bf16.msra.mxu0 0
    %3744 = vmatprep.subr.bf16.mxu0 0
    %3745 = vmatpush2.bf16.msra.mxu0 0
    %3746 = vmatprep.subr.bf16.mxu0 0
    %3747 = vmatpush2.bf16.msra.mxu0 0
    %3748 = vmatprep.subr.bf16.mxu0 0
    %3749 = vmatpush2.bf16.msra.mxu0 0
    %3750 = vmatprep.mubr.bf16.mxu0 0
    %3751 = vmatmul.mubr.bf16.gmra.mxu0 %v3661
    %v3752 = vpop.f32.mrf.mxu0
    %v3753 = vadd.f32 %v3711, %v3752
    %v3754 = vpop.f32.mrf.mxu0
    %v3755 = vpop.f32.mrf.mxu0
    %v3756 = vadd.f32 %v3714, %v3755
    %v3757 = vpop.f32.mrf.mxu0
    %3758 = vdwg.mxu0
    %v3759 = vld [vmem:[%s3044] sm:$0xe]
    %v3761 = vunpack.c.l.b16 %v3759
    %v3762 = vpack.c.b16 %v3659, %v3761
    %v3763 = vrot.slane %v3762, 1
    %v3764 = vrot.slane %v3662, 1
    %v3765 = vsel %vm3310, %v3763, %v3764
    %3767 = vmatprep.subr.bf16.mxu0 0
    %3768 = vmatpush1.bf16.msra.mxu0 %v3354
    %3769 = vmatprep.subr.bf16.mxu0 0
    %3770 = vmatpush1.bf16.msra.mxu0 %v3353
    %3771 = vmatprep.subr.bf16.mxu0 0
    %3772 = vmatpush1.bf16.msra.mxu0 %v3352
    %3773 = vmatprep.subr.bf16.mxu0 0
    %3774 = vmatpush1.bf16.msra.mxu0 %v3351
    %3775 = vmatprep.subr.bf16.mxu0 0
    %3776 = vmatpush1.bf16.msra.mxu0 %v3350
    %3777 = vmatprep.subr.bf16.mxu0 0
    %3778 = vmatpush1.bf16.msra.mxu0 %v3349
    %3779 = vmatprep.subr.bf16.mxu0 0
    %3780 = vmatpush1.bf16.msra.mxu0 %v3348
    %3781 = vmatprep.subr.bf16.mxu0 0
    %3782 = vmatpush1.bf16.msra.mxu0 %v3347
    %3783 = vmatprep.subr.bf16.mxu0 0
    %3784 = vmatpush2.bf16.msra.mxu0 0
    %3785 = vmatprep.subr.bf16.mxu0 0
    %3786 = vmatpush2.bf16.msra.mxu0 0
    %3787 = vmatprep.subr.bf16.mxu0 0
    %3788 = vmatpush2.bf16.msra.mxu0 0
    %3789 = vmatprep.subr.bf16.mxu0 0
    %3790 = vmatpush2.bf16.msra.mxu0 0
    %3791 = vmatprep.subr.bf16.mxu0 0
    %3792 = vmatpush2.bf16.msra.mxu0 0
    %3793 = vmatprep.subr.bf16.mxu0 0
    %3794 = vmatpush2.bf16.msra.mxu0 0
    %3795 = vmatprep.subr.bf16.mxu0 0
    %3796 = vmatpush2.bf16.msra.mxu0 0
    %3797 = vmatprep.subr.bf16.mxu0 0
    %3798 = vmatpush2.bf16.msra.mxu0 0
    %3799 = vmatprep.mubr.bf16.mxu0 0
    %3800 = vmatmul.mubr.bf16.gmra.mxu0 %v3765
    %v3801 = vpop.f32.mrf.mxu0
    %v3802 = vadd.f32 0.0, %v3801
    %v3803 = vpop.f32.mrf.mxu0
    %v3804 = vpop.f32.mrf.mxu0
    %v3805 = vadd.f32 0.0, %v3804
    %v3806 = vpop.f32.mrf.mxu0
    %3807 = vdwg.mxu0
    %v3808 = vadd.f32 %v3753, %v3802
    %v3809 = vadd.f32 %v3756, %v3805
    %v3810 = vld [vmem:[%s3044 + $0x8] sm:$0x3]
    %v3812 = vunpack.c.l.b16 %v3810
    %v3813 = vpack.c.b16 %v3812, %v3812
    %v3815 = vshrl.u32 %v3762, 16
    %v3817 = vrot.slane %v3815, 1
    %v3818 = vshll.u32 %v3762, 16
    %v3820 = vrot.slane %v3818, 2
    %v3821 = vor.u32 %v3817, %v3820
    %v3823 = vshrl.u32 %v3813, 16
    %v3825 = vrot.slane %v3823, 1
    %v3826 = vshll.u32 %v3813, 16
    %v3828 = vrot.slane %v3826, 2
    %v3829 = vor.u32 %v3825, %v3828
    %v3830 = vsel %vm473, %v3821, %v3829
    %3832 = vmatprep.subr.bf16.mxu0 0
    %3833 = vmatpush1.bf16.msra.mxu0 %v3484
    %3834 = vmatprep.subr.bf16.mxu0 0
    %3835 = vmatpush1.bf16.msra.mxu0 %v3483
    %3836 = vmatprep.subr.bf16.mxu0 0
    %3837 = vmatpush1.bf16.msra.mxu0 %v3482
    %3838 = vmatprep.subr.bf16.mxu0 0
    %3839 = vmatpush1.bf16.msra.mxu0 %v3481
    %3840 = vmatprep.subr.bf16.mxu0 0
    %3841 = vmatpush1.bf16.msra.mxu0 %v3480
    %3842 = vmatprep.subr.bf16.mxu0 0
    %3843 = vmatpush1.bf16.msra.mxu0 %v3479
    %3844 = vmatprep.subr.bf16.mxu0 0
    %3845 = vmatpush1.bf16.msra.mxu0 %v3478
    %3846 = vmatprep.subr.bf16.mxu0 0
    %3847 = vmatpush1.bf16.msra.mxu0 %v3477
    %3848 = vmatprep.subr.bf16.mxu0 0
    %3849 = vmatpush2.bf16.msra.mxu0 0
    %3850 = vmatprep.subr.bf16.mxu0 0
    %3851 = vmatpush2.bf16.msra.mxu0 0
    %3852 = vmatprep.subr.bf16.mxu0 0
    %3853 = vmatpush2.bf16.msra.mxu0 0
    %3854 = vmatprep.subr.bf16.mxu0 0
    %3855 = vmatpush2.bf16.msra.mxu0 0
    %3856 = vmatprep.subr.bf16.mxu0 0
    %3857 = vmatpush2.bf16.msra.mxu0 0
    %3858 = vmatprep.subr.bf16.mxu0 0
    %3859 = vmatpush2.bf16.msra.mxu0 0
    %3860 = vmatprep.subr.bf16.mxu0 0
    %3861 = vmatpush2.bf16.msra.mxu0 0
    %3862 = vmatprep.subr.bf16.mxu0 0
    %3863 = vmatpush2.bf16.msra.mxu0 0
    %3864 = vmatprep.mubr.bf16.mxu0 0
    %3865 = vmatmul.mubr.bf16.gmra.mxu0 %v3830
    %v3866 = vpop.f32.mrf.mxu0
    %v3867 = vadd.f32 0.0, %v3866
    %v3868 = vpop.f32.mrf.mxu0
    %v3869 = vpop.f32.mrf.mxu0
    %v3870 = vadd.f32 0.0, %v3869
    %v3871 = vpop.f32.mrf.mxu0
    %3872 = vdwg.mxu0
    %v3873 = vadd.f32 %v3808, %v3867
    %v3874 = vadd.f32 %v3809, %v3870
    %v3875 = vld [vmem:[%s3044] sm:$0xc]
    %v3877 = vunpack.c.l.b16 %v3875
    %v3878 = vpack.c.b16 %v3659, %v3877
    %v3879 = vrot.slane %v3878, 2
    %v3880 = vrot.slane %v3813, 2
    %v3881 = vsel %vm600, %v3879, %v3880
    %3883 = vmatprep.subr.bf16.mxu0 0
    %3884 = vmatpush1.bf16.msra.mxu0 %v3600
    %3885 = vmatprep.subr.bf16.mxu0 0
    %3886 = vmatpush1.bf16.msra.mxu0 %v3599
    %3887 = vmatprep.subr.bf16.mxu0 0
    %3888 = vmatpush1.bf16.msra.mxu0 %v3598
    %3889 = vmatprep.subr.bf16.mxu0 0
    %3890 = vmatpush1.bf16.msra.mxu0 %v3597
    %3891 = vmatprep.subr.bf16.mxu0 0
    %3892 = vmatpush1.bf16.msra.mxu0 %v3596
    %3893 = vmatprep.subr.bf16.mxu0 0
    %3894 = vmatpush1.bf16.msra.mxu0 %v3595
    %3895 = vmatprep.subr.bf16.mxu0 0
    %3896 = vmatpush1.bf16.msra.mxu0 %v3594
    %3897 = vmatprep.subr.bf16.mxu0 0
    %3898 = vmatpush1.bf16.msra.mxu0 %v3593
    %3899 = vmatprep.subr.bf16.mxu0 0
    %3900 = vmatpush2.bf16.msra.mxu0 0
    %3901 = vmatprep.subr.bf16.mxu0 0
    %3902 = vmatpush2.bf16.msra.mxu0 0
    %3903 = vmatprep.subr.bf16.mxu0 0
    %3904 = vmatpush2.bf16.msra.mxu0 0
    %3905 = vmatprep.subr.bf16.mxu0 0
    %3906 = vmatpush2.bf16.msra.mxu0 0
    %3907 = vmatprep.subr.bf16.mxu0 0
    %3908 = vmatpush2.bf16.msra.mxu0 0
    %3909 = vmatprep.subr.bf16.mxu0 0
    %3910 = vmatpush2.bf16.msra.mxu0 0
    %3911 = vmatprep.subr.bf16.mxu0 0
    %3912 = vmatpush2.bf16.msra.mxu0 0
    %3913 = vmatprep.subr.bf16.mxu0 0
    %3914 = vmatpush2.bf16.msra.mxu0 0
    %3915 = vmatprep.mubr.bf16.mxu0 0
    %3916 = vmatmul.mubr.bf16.gmra.mxu0 %v3881
    %v3917 = vpop.f32.mrf.mxu0
    %v3918 = vadd.f32 0.0, %v3917
    %v3919 = vpop.f32.mrf.mxu0
    %v3920 = vpop.f32.mrf.mxu0
    %v3921 = vadd.f32 0.0, %v3920
    %v3922 = vpop.f32.mrf.mxu0
    %3923 = vdwg.mxu0
    %v3924 = vadd.f32 %v3873, %v3918
    %v3925 = vadd.f32 %v3874, %v3921
    %v3926 = vadd.f32 %v3650, %v3651
    %v3927 = vrot.slane %v3926, 4
    %v3928 = vadd.f32 %v3926, %v3927
    %v3929 = vrot.slane %v3928, 2
    %v3930 = vadd.f32 %v3928, %v3929
    %v3931 = vrot.slane %v3930, 1
    %v3932 = vadd.f32 %v3930, %v3931
    %v3933 = vadd.f32 %v3932, 0.0
    %v3934 = vadd.f32 %v3924, %v3925
    %v3935 = vrot.slane %v3934, 4
    %v3936 = vadd.f32 %v3934, %v3935
    %v3937 = vrot.slane %v3936, 2
    %v3938 = vadd.f32 %v3936, %v3937
    %v3939 = vrot.slane %v3938, 1
    %v3940 = vadd.f32 %v3938, %v3939
    %v3941 = vadd.f32 %v3933, %v3940
    %v3942 = vrcp.pop 32.0
    %v3943 = vmul.f32 %v3941, %v3942
    %v3944 = vsub.f32 %v3650, %v3943
    %v3945 = vsub.f32 %v3651, %v3943
    %v3946 = vmul.f32 %v3944, %v3944
    %v3947 = vmul.f32 %v3945, %v3945
    %v3948 = vadd.f32 %v3946, %v3947
    %v3949 = vrot.slane %v3948, 4
    %v3950 = vadd.f32 %v3948, %v3949
    %v3951 = vrot.slane %v3950, 2
    %v3952 = vadd.f32 %v3950, %v3951
    %v3953 = vrot.slane %v3952, 1
    %v3954 = vadd.f32 %v3952, %v3953
    %v3955 = vadd.f32 %v3954, 0.0
    %v3956 = vsub.f32 %v3924, %v3943
    %v3957 = vsub.f32 %v3925, %v3943
    %v3958 = vmul.f32 %v3956, %v3956
    %v3959 = vmul.f32 %v3957, %v3957
    %v3960 = vadd.f32 %v3958, %v3959
    %v3961 = vrot.slane %v3960, 4
    %v3962 = vadd.f32 %v3960, %v3961
    %v3963 = vrot.slane %v3962, 2
    %v3964 = vadd.f32 %v3962, %v3963
    %v3965 = vrot.slane %v3964, 1
    %v3966 = vadd.f32 %v3964, %v3965
    %v3967 = vadd.f32 %v3955, %v3966
    %v3968 = vmul.f32 %v3967, %v3942
    %v3969 = vadd.f32 %v3968, 1e-05
    %v3970 = vrsqrt.pop %v3969
    %v3971 = vmul.f32 %v3944, %v3970
    %v3972 = vmul.f32 %v3945, %v3970
    %v3973 = vmax.f32 %v3971, 0.0
    %v3974 = vmax.f32 %v3972, 0.0
    %v3975 = vmul.f32 %v3956, %v3970
    %v3976 = vmul.f32 %v3957, %v3970
    %v3977 = vmax.f32 %v3975, 0.0
    %v3978 = vmax.f32 %v3976, 0.0
    %v3979 = vld [vmem:[%s5] sm:$0xf]
    %v3980 = vld [vmem:[%s5 + $0x4] sm:$0xf]
    %v3981 = vld [vmem:[%s5 + $0x8] sm:$0xf]
    %v3982 = vld [vmem:[%s5 + $0xc] sm:$0xf]
    %v3983 = vld [vmem:[%s5 + $0x10] sm:$0xf]
    %v3984 = vld [vmem:[%s5 + $0x14] sm:$0xf]
    %v3985 = vld [vmem:[%s5 + $0x18] sm:$0xf]
    %v3986 = vld [vmem:[%s5 + $0x1c] sm:$0xf]
    %v3987 = vld [vmem:[%s5 + $0x20] sm:$0xf]
    %v3988 = vld [vmem:[%s5 + $0x24] sm:$0xf]
    %v3989 = vld [vmem:[%s5 + $0x28] sm:$0xf]
    %v3990 = vld [vmem:[%s5 + $0x2c] sm:$0xf]
    %v3991 = vld [vmem:[%s5 + $0x30] sm:$0xf]
    %v3992 = vld [vmem:[%s5 + $0x34] sm:$0xf]
    %v3993 = vld [vmem:[%s5 + $0x38] sm:$0xf]
    %v3994 = vld [vmem:[%s5 + $0x3c] sm:$0xf]
    %v3995 = vld [vmem:[%s6] sm:$0x1]
    %v3996 = vlaneseq
    %v3997 = vand.u32 %v3996, 127
    %v3998 = vpack.c.bf16 %v3974, %v3973
    %v4000 = vlaneseq
    %v4001 = vshrl.u32 %v4000, 7
    %v4002 = vsub.s32 0, %v4001
    %v4003 = vrot.slane %v3995, %v4002
    %v4021 = vunpack.c.l.b16 %v3979
    %v4022 = vunpack.c.l.b16 %v3980
    %v4023 = vunpack.c.l.b16 %v3981
    %v4024 = vunpack.c.l.b16 %v3982
    %v4025 = vunpack.c.l.b16 %v3983
    %v4026 = vunpack.c.l.b16 %v3984
    %v4027 = vunpack.c.l.b16 %v3985
    %v4028 = vunpack.c.l.b16 %v3986
    %v4029 = vunpack.c.l.b16 %v3987
    %v4030 = vunpack.c.l.b16 %v3988
    %v4031 = vunpack.c.l.b16 %v3989
    %v4032 = vunpack.c.l.b16 %v3990
    %v4033 = vunpack.c.l.b16 %v3991
    %v4034 = vunpack.c.l.b16 %v3992
    %v4035 = vunpack.c.l.b16 %v3993
    %v4036 = vunpack.c.l.b16 %v3994
    %v4037 = vpack.c.b16 %v4022, %v4021
    %v4038 = vpack.c.b16 %v4024, %v4023
    %v4039 = vpack.c.b16 %v4026, %v4025
    %v4040 = vpack.c.b16 %v4028, %v4027
    %v4041 = vpack.c.b16 %v4030, %v4029
    %v4042 = vpack.c.b16 %v4032, %v4031
    %v4043 = vpack.c.b16 %v4034, %v4033
    %v4044 = vpack.c.b16 %v4036, %v4035
    %4053 = vmatprep.subr.bf16.mxu0 0
    %4054 = vmatpush1.bf16.msra.mxu0 %v4044
    %4055 = vmatprep.subr.bf16.mxu0 0
    %4056 = vmatpush1.bf16.msra.mxu0 %v4043
    %4057 = vmatprep.subr.bf16.mxu0 0
    %4058 = vmatpush1.bf16.msra.mxu0 %v4042
    %4059 = vmatprep.subr.bf16.mxu0 0
    %4060 = vmatpush1.bf16.msra.mxu0 %v4041
    %4061 = vmatprep.subr.bf16.mxu0 0
    %4062 = vmatpush1.bf16.msra.mxu0 %v4040
    %4063 = vmatprep.subr.bf16.mxu0 0
    %4064 = vmatpush1.bf16.msra.mxu0 %v4039
    %4065 = vmatprep.subr.bf16.mxu0 0
    %4066 = vmatpush1.bf16.msra.mxu0 %v4038
    %4067 = vmatprep.subr.bf16.mxu0 0
    %4068 = vmatpush1.bf16.msra.mxu0 %v4037
    %4069 = vmatprep.subr.bf16.mxu0 0
    %4070 = vmatpush2.bf16.msra.mxu0 0
    %4071 = vmatprep.subr.bf16.mxu0 0
    %4072 = vmatpush2.bf16.msra.mxu0 0
    %4073 = vmatprep.subr.bf16.mxu0 0
    %4074 = vmatpush2.bf16.msra.mxu0 0
    %4075 = vmatprep.subr.bf16.mxu0 0
    %4076 = vmatpush2.bf16.msra.mxu0 0
    %4077 = vmatprep.subr.bf16.mxu0 0
    %4078 = vmatpush2.bf16.msra.mxu0 0
    %4079 = vmatprep.subr.bf16.mxu0 0
    %4080 = vmatpush2.bf16.msra.mxu0 0
    %4081 = vmatprep.subr.bf16.mxu0 0
    %4082 = vmatpush2.bf16.msra.mxu0 0
    %4083 = vmatprep.subr.bf16.mxu0 0
    %4084 = vmatpush2.bf16.msra.mxu0 0
    %4085 = vmatprep.mubr.bf16.mxu0 0
    %4086 = vmatmul.mubr.bf16.gmra.mxu0 %v3998
    %v4087 = vpop.f32.mrf.mxu0
    %v4088 = vadd.f32 %v4003, %v4087
    %v4089 = vpop.f32.mrf.mxu0
    %v4090 = vpop.f32.mrf.mxu0
    %v4091 = vadd.f32 %v4003, %v4090
    %v4092 = vpop.f32.mrf.mxu0
    %4093 = vdwg.mxu0
    %v4094 = vxor.u32 %v4088, 2147483648
    %v4095 = vxor.u32 %v4091, 2147483648
    %v4096 = vmul.f32 %v4094, 1.442695
    %v4097 = vpow.pop %v4096
    %v4098 = vmul.f32 %v4095, 1.442695
    %v4099 = vpow.pop %v4098
    %v4100 = vadd.f32 %v4097, 1.0
    %v4101 = vadd.f32 %v4099, 1.0
    %v4102 = vrcp.pop %v4100
    %v4103 = vmul.f32 1.0, %v4102
    %v4104 = vrcp.pop %v4101
    %v4105 = vmul.f32 1.0, %v4104
    %4106 = vst [vmem:[%s7] sm:$0xff] %v4103
    %4107 = vst [vmem:[%s7 + $0x8] sm:$0xff] %v4105
    %vm4108 = vcmp.lt.s32.totalorder %v3997, 48
    %v4109 = vsel %vm4108, 1, 0
    %vm4110 = vcmp.eq.s32.totalorder %v4109, 1
    %v4111 = vsel %vm4110, %v4103, -1e+30
    %v4112 = vsel %vm4110, %v4105, -1e+30
    %4113 = vmax.xlane.f32.xlu0 %v4111
    %v4114 = vpop.xlane.xlu0 %4113
    %4115 = vmax.xlane.f32.xlu0 %v4112
    %v4116 = vpop.xlane.xlu0 %4115
    %v4117 = vsub.f32 %v4111, %v4114
    %v4118 = vsub.f32 %v4112, %v4116
    %v4119 = vmul.f32 %v4117, 1.442695
    %v4120 = vpow.pop %v4119
    %v4121 = vmul.f32 %v4118, 1.442695
    %v4122 = vpow.pop %v4121
    %4123 = vadd.xlane.f32.xlu0 %v4120
    %v4124 = vpop.xlane.xlu0 %4123
    %4125 = vadd.xlane.f32.xlu0 %v4122
    %v4126 = vpop.xlane.xlu0 %4125
    %v4127 = vrcp.pop %v4124
    %v4128 = vrcp.pop %v4126
    %v4129 = vmul.f32 %v4120, %v4127
    %v4130 = vmul.f32 %v4122, %v4128
    %4131 = vst [vmem:[%s8] sm:$0xff] %v4129
    %4132 = vst [vmem:[%s8 + $0x8] sm:$0xff] %v4130
    %v4133 = vpack.c.bf16 %v3978, %v3977
    %4134 = vmatprep.subr.bf16.mxu0 0
    %4135 = vmatpush1.bf16.msra.mxu0 %v4044
    %4136 = vmatprep.subr.bf16.mxu0 0
    %4137 = vmatpush1.bf16.msra.mxu0 %v4043
    %4138 = vmatprep.subr.bf16.mxu0 0
    %4139 = vmatpush1.bf16.msra.mxu0 %v4042
    %4140 = vmatprep.subr.bf16.mxu0 0
    %4141 = vmatpush1.bf16.msra.mxu0 %v4041
    %4142 = vmatprep.subr.bf16.mxu0 0
    %4143 = vmatpush1.bf16.msra.mxu0 %v4040
    %4144 = vmatprep.subr.bf16.mxu0 0
    %4145 = vmatpush1.bf16.msra.mxu0 %v4039
    %4146 = vmatprep.subr.bf16.mxu0 0
    %4147 = vmatpush1.bf16.msra.mxu0 %v4038
    %4148 = vmatprep.subr.bf16.mxu0 0
    %4149 = vmatpush1.bf16.msra.mxu0 %v4037
    %4150 = vmatprep.subr.bf16.mxu0 0
    %4151 = vmatpush2.bf16.msra.mxu0 0
    %4152 = vmatprep.subr.bf16.mxu0 0
    %4153 = vmatpush2.bf16.msra.mxu0 0
    %4154 = vmatprep.subr.bf16.mxu0 0
    %4155 = vmatpush2.bf16.msra.mxu0 0
    %4156 = vmatprep.subr.bf16.mxu0 0
    %4157 = vmatpush2.bf16.msra.mxu0 0
    %4158 = vmatprep.subr.bf16.mxu0 0
    %4159 = vmatpush2.bf16.msra.mxu0 0
    %4160 = vmatprep.subr.bf16.mxu0 0
    %4161 = vmatpush2.bf16.msra.mxu0 0
    %4162 = vmatprep.subr.bf16.mxu0 0
    %4163 = vmatpush2.bf16.msra.mxu0 0
    %4164 = vmatprep.subr.bf16.mxu0 0
    %4165 = vmatpush2.bf16.msra.mxu0 0
    %4166 = vmatprep.mubr.bf16.mxu0 0
    %4167 = vmatmul.mubr.bf16.gmra.mxu0 %v4133
    %v4168 = vpop.f32.mrf.mxu0
    %v4169 = vadd.f32 %v4003, %v4168
    %v4170 = vpop.f32.mrf.mxu0
    %v4171 = vpop.f32.mrf.mxu0
    %v4172 = vadd.f32 %v4003, %v4171
    %v4173 = vpop.f32.mrf.mxu0
    %4174 = vdwg.mxu0
    %v4175 = vxor.u32 %v4169, 2147483648
    %v4176 = vxor.u32 %v4172, 2147483648
    %v4177 = vmul.f32 %v4175, 1.442695
    %v4178 = vpow.pop %v4177
    %v4179 = vmul.f32 %v4176, 1.442695
    %v4180 = vpow.pop %v4179
    %v4181 = vadd.f32 %v4178, 1.0
    %v4182 = vadd.f32 %v4180, 1.0
    %v4183 = vrcp.pop %v4181
    %v4184 = vmul.f32 1.0, %v4183
    %v4185 = vrcp.pop %v4182
    %v4186 = vmul.f32 1.0, %v4185
    %s4187 = scalar_lea.vmem %s7, 16
    %4188 = vst [vmem:[%s4187] sm:$0xff] %v4184
    %4189 = vst [vmem:[%s4187 + $0x8] sm:$0xff] %v4186
    %v4190 = vsel %vm4110, %v4184, -1e+30
    %v4191 = vsel %vm4110, %v4186, -1e+30
    %4192 = vmax.xlane.f32.xlu0 %v4190
    %v4193 = vpop.xlane.xlu0 %4192
    %4194 = vmax.xlane.f32.xlu0 %v4191
    %v4195 = vpop.xlane.xlu0 %4194
    %v4196 = vsub.f32 %v4190, %v4193
    %v4197 = vsub.f32 %v4191, %v4195
    %v4198 = vmul.f32 %v4196, 1.442695
    %v4199 = vpow.pop %v4198
    %v4200 = vmul.f32 %v4197, 1.442695
    %v4201 = vpow.pop %v4200
    %4202 = vadd.xlane.f32.xlu0 %v4199
    %v4203 = vpop.xlane.xlu0 %4202
    %4204 = vadd.xlane.f32.xlu0 %v4201
    %v4205 = vpop.xlane.xlu0 %4204
    %v4206 = vrcp.pop %v4203
    %v4207 = vrcp.pop %v4205
    %v4208 = vmul.f32 %v4199, %v4206
    %v4209 = vmul.f32 %v4201, %v4207
    %s4210 = scalar_lea.vmem %s8, 16
    %4211 = vst [vmem:[%s4210] sm:$0xff] %v4208
    %4212 = vst [vmem:[%s4210 + $0x8] sm:$0xff] %v4209
    // Predicated region
    $region46: #{cnn_autoencoder_forward.1} parent=1 // pred_check
      _
    $region47: #{cnn_autoencoder_forward.1} parent=1 // pred_check_branch
      %4214 = sbr.rel (0) target = $region49
    $region48: #{cnn_autoencoder_forward.1} parent=1 // pred_region
      _
    $region49: #{cnn_autoencoder_forward.1} parent=1 // pred_fallthru
      _
    // Predicated region
    $region50: #{cnn_autoencoder_forward.1} parent=1 // pred_check
      _
    $region51: #{cnn_autoencoder_forward.1} parent=1 // pred_check_branch
      %4216 = sbr.rel (0) target = $region53
    $region52: #{cnn_autoencoder_forward.1} parent=1 // pred_region
      _
    $region53: #{cnn_autoencoder_forward.1} parent=1 // pred_fallthru
      _
    // Predicated region
    $region54: #{cnn_autoencoder_forward.1} parent=1 // pred_check
      _
    $region55: #{cnn_autoencoder_forward.1} parent=1 // pred_check_branch
      %4218 = sbr.rel (0) target = $region57
    $region56: #{cnn_autoencoder_forward.1} parent=1 // pred_region
      _
    $region57: #{cnn_autoencoder_forward.1} parent=1 // pred_fallthru
      _
    // Predicated region
    $region58: #{cnn_autoencoder_forward.1} parent=1 // pred_check
      _
    $region59: #{cnn_autoencoder_forward.1} parent=1 // pred_check_branch
      %4220 = sbr.rel (0) target = $region61
    $region60: #{cnn_autoencoder_forward.1} parent=1 // pred_region
      _
    $region61: #{cnn_autoencoder_forward.1} parent=1 // pred_fallthru
      _
    %4221 = vsyncpa [#allocation6], 1
    %4222 = vsyncpa [#allocation8], 1
    %4223 = vsyncpa [#allocation11], 1

</llo_original>
